<compile_context>
chip_gen: v6e
topology: v6e:2x2x1
jax: 0.10.0
libtpu: 0.0.40
codegen_flags: <defaults>
</compile_context>

<pallas_src>
import functools

import jax
import jax.numpy as jnp
from jax import lax
from jax.experimental import pallas as pl
from jax.experimental.pallas import tpu as pltpu

CP = 8  # image channels zero-padded to 8 so every matmul operand has >=8 sublanes

# 3x3 tap enumeration (kh, kw) order shared by kernel, weights and masks
_TAPS = tuple((dh, dw) for dh in (-1, 0, 1) for dw in (-1, 0, 1))

# packed small-parameter layout: 32 sublanes, one column per parameter
_PK = {"intro_b": 0, "n1_g": 1, "n1_b": 2, "c1_b": 3, "c2_b": 4, "c3_b": 5,
       "sca_b": 6, "n2_g": 7, "n2_b": 8, "c4_b": 9, "c5_b": 10, "beta": 11,
       "gamma": 12, "end_b": 13, "ftn": 14, "c2_w": 15}     # c2_w: cols 15..23
_PK_COLS = 24


def panet_kernel(W, C,
                 x_ref, masks_ref, bcast_ref, pk_ref,
                 intro_w_ref, c1_w_ref, c3_w_ref, sca_w_ref,
                 c4_w_ref, c5_w_ref, end_w_ref,
                 o_ref):
    f32 = jnp.float32
    N = x_ref.shape[1]            # Bt * H * W lanes
    Bt = bcast_ref.shape[0]       # images folded into this step's lane axis
    inv_P = 1.0 / (N // Bt)

    masks = masks_ref[...]        # (8, N) border masks (tap order minus center)
    pk = pk_ref[...]              # (32, 24) packed small parameters

    def col(name, rows):
        c0 = _PK[name]
        return pk[:rows, c0:c0 + 1]                          # (rows, 1)

    def shifted_tap(x, k):
        # value of x at spatial (h+dh, w+dw); zero outside each image.  Rolls
        # that wrap across image boundaries are killed by the border masks.
        dh, dw = _TAPS[k]
        if dh == 0 and dw == 0:
            return x
        s = dh * W + dw
        v = pltpu.roll(x, shift=(-s) % N, axis=1)
        m = k if k < 4 else k - 1
        return v * masks[m:m + 1, :]

    def conv3x3(x, w_flat, b):
        # dense 3x3 conv, padding=1, as ONE MXU matmul over the im2col-K slab:
        # x (Cin, N), w_flat (Cout, 9*Cin)
        slab = jnp.concatenate([shifted_tap(x, k) for k in range(9)], axis=0)
        return jnp.dot(w_flat, slab, preferred_element_type=f32) + b

    def dwconv3x3(x, w_taps, b):
        # depthwise 3x3 (groups == channels): x (Cd, N), w_taps (Cd, 9), VPU MAC
        acc = w_taps[:, 4:5] * x                              # center tap
        for k in range(9):
            if k == 4:
                continue
            acc = acc + w_taps[:, k:k + 1] * shifted_tap(x, k)
        return acc + b

    def layernorm_c(x, g, b):
        # LayerNorm2d: normalize over channels (sublane axis), eps = 1e-6
        mu = jnp.mean(x, axis=0, keepdims=True)
        xc = x - mu
        var = jnp.mean(xc * xc, axis=0, keepdims=True)
        return xc * lax.rsqrt(var + 1e-6) * g + b

    x_img = x_ref[...]                                        # (CP, N)

    # ---- intro 3x3 conv ---------------------------------------------------
    x = conv3x3(x_img, intro_w_ref[...], col("intro_b", C))   # (C, N)

    # ---- PABlock ------------------------------------------------------------
    inp = x
    t = layernorm_c(x, col("n1_g", C), col("n1_b", C))
    t = jnp.dot(c1_w_ref[...], t, preferred_element_type=f32) + col("c1_b", 2 * C)
    t = dwconv3x3(t, pk[:, _PK["c2_w"]:_PK["c2_w"] + 9], col("c2_b", 2 * C))
    t = t[:C, :] * t[C:, :]                                   # SimpleGate

    # Simplified Channel Attention: per-image global average pool + 1x1 + scale
    if Bt == 1:
        pooled = jnp.mean(t, axis=1, keepdims=True)           # (C, 1)
        sca = jnp.dot(sca_w_ref[...], pooled,
                      preferred_element_type=f32) + col("sca_b", C)
        t = t * sca
    else:
        bcast = bcast_ref[...]                                # (Bt, N) 0/1 segments
        pooled = lax.dot_general(t, bcast, (((1,), (1,)), ((), ())),
                                 preferred_element_type=f32) * inv_P   # (C, Bt)
        sca = jnp.dot(sca_w_ref[...], pooled,
                      preferred_element_type=f32) + col("sca_b", C)    # (C, Bt)
        t = t * jnp.dot(sca, bcast, preferred_element_type=f32)        # segmented bcast

    t = jnp.dot(c3_w_ref[...], t, preferred_element_type=f32) + col("c3_b", C)
    y = inp + t * col("beta", C)

    t = layernorm_c(y, col("n2_g", C), col("n2_b", C))
    t = jnp.dot(c4_w_ref[...], t, preferred_element_type=f32) + col("c4_b", 2 * C)
    t = t[:C, :] * t[C:, :]                                   # SimpleGate

    # CLIP-feature attention: ftn precomputed on host; sublane-reduce dot + rsqrt
    ftn = col("ftn", C)                                       # (C, 1)
    inv_norm = lax.rsqrt(jnp.sum(t * t, axis=0, keepdims=True) + 1e-12)
    attn = jnp.sum(ftn * t, axis=0, keepdims=True) * inv_norm
    t = t * attn
    t = jnp.dot(c5_w_ref[...], t, preferred_element_type=f32) + col("c5_b", C)
    y = y + t * col("gamma", C)

    # ---- ending 3x3 conv + global residual (fused epilogue) ----------------
    o_ref[...] = conv3x3(y, end_w_ref[...], col("end_b", CP)) + x_img


# --------------------------------------------------------------------------- #
# host-side parameter / constant preparation
# --------------------------------------------------------------------------- #
def init_params(key, img_channel=3, width=16):
    C = width
    DW = 2 * C       # dw_channel  (DW_Expand = 2)
    FFN = 2 * C      # ffn_channel (FFN_Expand = 2)
    ks = iter(jax.random.split(key, 24))

    def nrm(shape, scale=0.05):
        return jax.random.normal(next(ks), shape, jnp.float32) * scale

    p = {}
    p["intro_w"] = nrm((C, img_channel, 3, 3));  p["intro_b"] = nrm((C,))
    p["end_w"] = nrm((img_channel, C, 3, 3));    p["end_b"] = nrm((img_channel,))
    p["n1_g"] = jnp.ones((C,), jnp.float32);     p["n1_b"] = jnp.zeros((C,), jnp.float32)
    p["n2_g"] = jnp.ones((C,), jnp.float32);     p["n2_b"] = jnp.zeros((C,), jnp.float32)
    p["c1_w"] = nrm((DW, C));                    p["c1_b"] = nrm((DW,))
    # depthwise 3x3 (groups = DW): torch (DW, 1, 3, 3) -> (DW, 9), (kh, kw) order
    p["c2_w"] = nrm((DW, 1, 3, 3)).reshape(DW, 9); p["c2_b"] = nrm((DW,))
    p["c3_w"] = nrm((C, DW // 2));               p["c3_b"] = nrm((C,))
    p["sca_w"] = nrm((DW // 2, DW // 2));        p["sca_b"] = nrm((DW // 2,))
    p["c4_w"] = nrm((FFN, C));                   p["c4_b"] = nrm((FFN,))
    p["c5_w"] = nrm((C, FFN // 2));              p["c5_b"] = nrm((C,))
    # PyTorch initializes beta/gamma to zeros; 0.1 keeps both branches live.
    p["beta"] = jnp.full((C,), 0.1, jnp.float32)
    p["gamma"] = jnp.full((C,), 0.1, jnp.float32)
    p["aff_w"] = nrm((C, 512));                  p["aff_b"] = nrm((C,))
    # synthetic L2-normalized text feature for the single prompt (CLIP dim 512)
    tf = jax.random.normal(next(ks), (1, 512), jnp.float32)
    p["ft"] = tf / jnp.linalg.norm(tf, axis=-1, keepdims=True)
    return p


def _conv_w_flat(w):
    # torch (Cout, Cin, 3, 3) -> (Cout, 9*Cin), tap blocks in _TAPS ((kh,kw)) order
    cout, cin = w.shape[0], w.shape[1]
    return jnp.transpose(w, (0, 2, 3, 1)).reshape(cout, 9 * cin)


def make_kernel_inputs(params, img_channel=3, width=16):
    C = width
    DW = 2 * C

    wi = jnp.pad(params["intro_w"], ((0, 0), (0, CP - img_channel), (0, 0), (0, 0)))
    intro_w = _conv_w_flat(wi)                                   # (C, 9*CP)
    we = jnp.pad(params["end_w"], ((0, CP - img_channel), (0, 0), (0, 0), (0, 0)))
    end_w = _conv_w_flat(we)                                     # (CP, 9*C)

    # hoisted CLIP branch: ftn = normalize(affine(ft))  -> (C,)
    ftc = params["ft"] @ params["aff_w"].T + params["aff_b"]     # (1, C)
    ftn = (ftc / (jnp.linalg.norm(ftc, axis=-1, keepdims=True) + 1e-12)).reshape(C)

    pk = jnp.zeros((32, _PK_COLS), jnp.float32)

    def put(pk, name, a):
        a = jnp.asarray(a).reshape(-1)
        return pk.at[:a.shape[0], _PK[name]].set(a)

    for name in ("intro_b", "n1_g", "n1_b", "c1_b", "c2_b", "c3_b", "sca_b",
                 "n2_g", "n2_b", "c4_b", "c5_b", "beta", "gamma", "end_b"):
        pk = put(pk, name, params[name])
    pk = put(pk, "ftn", ftn)
    pk = pk.at[:DW, _PK["c2_w"]:_PK["c2_w"] + 9].set(params["c2_w"])

    return dict(intro_w=intro_w, end_w=end_w, pk=pk,
                c1_w=params["c1_w"], c3_w=params["c3_w"], sca_w=params["sca_w"],
                c4_w=params["c4_w"], c5_w=params["c5_w"])


def _make_masks(H, W, Bt):
    # (8, Bt*H*W) border masks for the 8 off-center taps (periodic per image)
    P = H * W
    p = jnp.arange(Bt * P) % P
    row, colp = p // W, p % W
    rows = []
    for dh, dw in _TAPS:
        if dh == 0 and dw == 0:
            continue
        valid = ((row + dh >= 0) & (row + dh < H) &
                 (colp + dw >= 0) & (colp + dw < W))
        rows.append(valid.astype(jnp.float32))
    return jnp.stack(rows, axis=0)


def _make_bcast(P, Bt):
    # (Bt, Bt*P) 0/1 image-segment indicator for segmented pool / broadcast
    seg = jnp.arange(Bt * P) // P
    return (seg[None, :] == jnp.arange(Bt)[:, None]).astype(jnp.float32)


# --------------------------------------------------------------------------- #
# forward pass
# --------------------------------------------------------------------------- #
def panet_forward(inp_nchw, params, width=16, images_per_step=None):
    B, Cimg, H, W = inp_nchw.shape
    P = H * W
    # Default: >=2 grid steps so v7x's 2 TensorCores both get work; on v5e/v6e
    # prefer images_per_step=B (one big step).  padder_size == 1 -> no spatial pad.
    if images_per_step is None:
        images_per_step = max(1, B // 2)
    Bt = max(1, min(images_per_step, B))
    Bpad = pl.cdiv(B, Bt) * Bt
    nsteps = Bpad // Bt
    N = Bt * P

    kin = make_kernel_inputs(params, img_channel=Cimg, width=width)
    masks = _make_masks(H, W, Bt)
    bcast = _make_bcast(P, Bt)

    # lane-dense host layout: (CP, Bpad*P) -- batch folded into the lane axis
    x = jnp.transpose(inp_nchw.reshape(B, Cimg, P), (1, 0, 2))        # (Cimg, B, P)
    x = jnp.pad(x, ((0, CP - Cimg), (0, Bpad - B), (0, 0))).reshape(CP, Bpad * P)

    def full(a):
        nd = a.ndim
        return pl.BlockSpec(a.shape, lambda b, _n=nd: (0,) * _n)

    weights = (masks, bcast, kin["pk"], kin["intro_w"], kin["c1_w"], kin["c3_w"],
               kin["sca_w"], kin["c4_w"], kin["c5_w"], kin["end_w"])

    # NOTE: at 16x16 the whole working set is a few hundred KiB; for large images
    # tile the H*W axis (multiple of 128 lanes) and size it for v7x's 64 MiB VMEM.
    out = pl.pallas_call(
        functools.partial(panet_kernel, W, width),
        out_shape=jax.ShapeDtypeStruct((CP, Bpad * P), jnp.float32),
        grid=(nsteps,),
        in_specs=[pl.BlockSpec((CP, N), lambda b: (0, b))]
                 + [full(a) for a in weights],
        out_specs=pl.BlockSpec((CP, N), lambda b: (0, b)),
        compiler_params=pltpu.CompilerParams(dimension_semantics=("parallel",)),
    )(x, *weights)

    out = out.reshape(CP, Bpad, P)[:Cimg, :B, :]
    return jnp.transpose(out, (1, 0, 2)).reshape(B, Cimg, H, W)


if __name__ == "__main__":
    key = jax.random.PRNGKey(0)
    kp, kx = jax.random.split(key)
    params = init_params(kp, img_channel=3, width=16)
    inp = jax.random.normal(kx, (4, 3, 16, 16), jnp.float32)

    fwd = jax.jit(lambda a: panet_forward(a, params, width=16))
    out = fwd(inp)
    jax.block_until_ready(out)
    assert out.shape == (4, 3, 16, 16)
    assert bool(jnp.all(jnp.isfinite(out)))
    print("KERNEL_OK")
</pallas_src>

<mosaic_0001>
module attributes {stable_mosaic.version = 11 : i64} {
  func.func @panet_kernel(%arg0: i32, %arg1: memref<8x512xf32, #tpu.memory_space<vmem>>, %arg2: memref<8x512xf32, #tpu.memory_space<vmem>>, %arg3: memref<2x512xf32, #tpu.memory_space<vmem>>, %arg4: memref<32x24xf32, #tpu.memory_space<vmem>>, %arg5: memref<16x72xf32, #tpu.memory_space<vmem>>, %arg6: memref<32x16xf32, #tpu.memory_space<vmem>>, %arg7: memref<16x16xf32, #tpu.memory_space<vmem>>, %arg8: memref<16x16xf32, #tpu.memory_space<vmem>>, %arg9: memref<32x16xf32, #tpu.memory_space<vmem>>, %arg10: memref<16x16xf32, #tpu.memory_space<vmem>>, %arg11: memref<8x144xf32, #tpu.memory_space<vmem>>, %arg12: memref<8x512xf32, #tpu.memory_space<vmem>>) attributes {dimension_semantics = [#tpu.dimension_semantics<parallel>], iteration_bounds = array<i64: 2>, scalar_prefetch = 0 : i64, scratch_operands = 0 : i64, tpu.core_type = #tpu.core_type<tc>, window_params = [{transform_indices = @transform_0, window_bounds = array<i64: 8, 512>}, {pipeline_mode = #tpu.pipeline_mode<synchronous>, transform_indices = @transform_1, window_bounds = array<i64: 8, 512>}, {pipeline_mode = #tpu.pipeline_mode<synchronous>, transform_indices = @transform_2, window_bounds = array<i64: 2, 512>}, {pipeline_mode = #tpu.pipeline_mode<synchronous>, transform_indices = @transform_3, window_bounds = array<i64: 32, 24>}, {pipeline_mode = #tpu.pipeline_mode<synchronous>, transform_indices = @transform_4, window_bounds = array<i64: 16, 72>}, {pipeline_mode = #tpu.pipeline_mode<synchronous>, transform_indices = @transform_5, window_bounds = array<i64: 32, 16>}, {pipeline_mode = #tpu.pipeline_mode<synchronous>, transform_indices = @transform_6, window_bounds = array<i64: 16, 16>}, {pipeline_mode = #tpu.pipeline_mode<synchronous>, transform_indices = @transform_7, window_bounds = array<i64: 16, 16>}, {pipeline_mode = #tpu.pipeline_mode<synchronous>, transform_indices = @transform_8, window_bounds = array<i64: 32, 16>}, {pipeline_mode = #tpu.pipeline_mode<synchronous>, transform_indices = @transform_9, window_bounds = array<i64: 16, 16>}, {pipeline_mode = #tpu.pipeline_mode<synchronous>, transform_indices = @transform_10, window_bounds = array<i64: 8, 144>}, {transform_indices = @transform_11, window_bounds = array<i64: 8, 512>}]} {
    %c0 = arith.constant 0 : index
    %c0_0 = arith.constant 0 : index
    %0 = vector.load %arg2[%c0, %c0_0] : memref<8x512xf32, #tpu.memory_space<vmem>>, vector<8x512xf32>
    %c0_1 = arith.constant 0 : index
    %c0_2 = arith.constant 0 : index
    %1 = vector.load %arg4[%c0_1, %c0_2] : memref<32x24xf32, #tpu.memory_space<vmem>>, vector<32x24xf32>
    %c0_3 = arith.constant 0 : index
    %c0_4 = arith.constant 0 : index
    %2 = vector.load %arg1[%c0_3, %c0_4] : memref<8x512xf32, #tpu.memory_space<vmem>>, vector<8x512xf32>
    %c0_5 = arith.constant 0 : index
    %c0_6 = arith.constant 0 : index
    %3 = vector.load %arg5[%c0_5, %c0_6] : memref<16x72xf32, #tpu.memory_space<vmem>>, vector<16x72xf32>
    %4 = vector.extract_strided_slice %1 {offsets = [0, 0], sizes = [16, 1], strides = [1, 1]} : vector<32x24xf32> to vector<16x1xf32>
    %c17_i32 = arith.constant 17 : i32
    %5 = tpu.dynamic_rotate %2 by %c17_i32 dim 1 : vector<8x512xf32>, i32 -> vector<8x512xf32>
    %6 = vector.extract_strided_slice %0 {offsets = [0, 0], sizes = [1, 512], strides = [1, 1]} : vector<8x512xf32> to vector<1x512xf32>
    %7 = vector.broadcast %6 : vector<1x512xf32> to vector<8x512xf32>
    %8 = arith.mulf %5, %7 : vector<8x512xf32>
    %c16_i32 = arith.constant 16 : i32
    %9 = tpu.dynamic_rotate %2 by %c16_i32 dim 1 : vector<8x512xf32>, i32 -> vector<8x512xf32>
    %10 = vector.extract_strided_slice %0 {offsets = [1, 0], sizes = [1, 512], strides = [1, 1]} : vector<8x512xf32> to vector<1x512xf32>
    %11 = vector.broadcast %10 : vector<1x512xf32> to vector<8x512xf32>
    %12 = arith.mulf %9, %11 : vector<8x512xf32>
    %c15_i32 = arith.constant 15 : i32
    %13 = tpu.dynamic_rotate %2 by %c15_i32 dim 1 : vector<8x512xf32>, i32 -> vector<8x512xf32>
    %14 = vector.extract_strided_slice %0 {offsets = [2, 0], sizes = [1, 512], strides = [1, 1]} : vector<8x512xf32> to vector<1x512xf32>
    %15 = vector.broadcast %14 : vector<1x512xf32> to vector<8x512xf32>
    %16 = arith.mulf %13, %15 : vector<8x512xf32>
    %c1_i32 = arith.constant 1 : i32
    %17 = tpu.dynamic_rotate %2 by %c1_i32 dim 1 : vector<8x512xf32>, i32 -> vector<8x512xf32>
    %18 = vector.extract_strided_slice %0 {offsets = [3, 0], sizes = [1, 512], strides = [1, 1]} : vector<8x512xf32> to vector<1x512xf32>
    %19 = vector.broadcast %18 : vector<1x512xf32> to vector<8x512xf32>
    %20 = arith.mulf %17, %19 : vector<8x512xf32>
    %c511_i32 = arith.constant 511 : i32
    %21 = tpu.dynamic_rotate %2 by %c511_i32 dim 1 : vector<8x512xf32>, i32 -> vector<8x512xf32>
    %22 = vector.extract_strided_slice %0 {offsets = [4, 0], sizes = [1, 512], strides = [1, 1]} : vector<8x512xf32> to vector<1x512xf32>
    %23 = vector.broadcast %22 : vector<1x512xf32> to vector<8x512xf32>
    %24 = arith.mulf %21, %23 : vector<8x512xf32>
    %c497_i32 = arith.constant 497 : i32
    %25 = tpu.dynamic_rotate %2 by %c497_i32 dim 1 : vector<8x512xf32>, i32 -> vector<8x512xf32>
    %26 = vector.extract_strided_slice %0 {offsets = [5, 0], sizes = [1, 512], strides = [1, 1]} : vector<8x512xf32> to vector<1x512xf32>
    %27 = vector.broadcast %26 : vector<1x512xf32> to vector<8x512xf32>
    %28 = arith.mulf %25, %27 : vector<8x512xf32>
    %c496_i32 = arith.constant 496 : i32
    %29 = tpu.dynamic_rotate %2 by %c496_i32 dim 1 : vector<8x512xf32>, i32 -> vector<8x512xf32>
    %30 = vector.extract_strided_slice %0 {offsets = [6, 0], sizes = [1, 512], strides = [1, 1]} : vector<8x512xf32> to vector<1x512xf32>
    %31 = vector.broadcast %30 : vector<1x512xf32> to vector<8x512xf32>
    %32 = arith.mulf %29, %31 : vector<8x512xf32>
    %c495_i32 = arith.constant 495 : i32
    %33 = tpu.dynamic_rotate %2 by %c495_i32 dim 1 : vector<8x512xf32>, i32 -> vector<8x512xf32>
    %34 = vector.extract_strided_slice %0 {offsets = [7, 0], sizes = [1, 512], strides = [1, 1]} : vector<8x512xf32> to vector<1x512xf32>
    %35 = vector.broadcast %34 : vector<1x512xf32> to vector<8x512xf32>
    %36 = arith.mulf %33, %35 : vector<8x512xf32>
    %37 = tpu.concatenate %8, %12, %16, %20, %2, %24, %28, %32, %36 in 0 : vector<8x512xf32>, vector<8x512xf32>, vector<8x512xf32>, vector<8x512xf32>, vector<8x512xf32>, vector<8x512xf32>, vector<8x512xf32>, vector<8x512xf32>, vector<8x512xf32> -> vector<72x512xf32>
    %cst = arith.constant dense<0.000000e+00> : vector<16x512xf32>
    %38 = tpu.matmul %3, %37, %cst {dimension_numbers = #tpu.dot_dimension_numbers<[1], [0], [0], [1], [0, 0, 1, 1], [], []>} : vector<16x72xf32>, vector<72x512xf32>, vector<16x512xf32> -> vector<16x512xf32>
    %39 = vector.broadcast %4 : vector<16x1xf32> to vector<16x512xf32>
    %40 = arith.addf %38, %39 : vector<16x512xf32>
    %41 = vector.extract_strided_slice %1 {offsets = [0, 1], sizes = [16, 1], strides = [1, 1]} : vector<32x24xf32> to vector<16x1xf32>
    %42 = vector.extract_strided_slice %1 {offsets = [0, 2], sizes = [16, 1], strides = [1, 1]} : vector<32x24xf32> to vector<16x1xf32>
    %cst_7 = arith.constant dense<0.000000e+00> : vector<512xf32>
    %43 = vector.multi_reduction <add>, %40, %cst_7 [0] : vector<16x512xf32> to vector<512xf32>
    %44 = vector.shape_cast %43 : vector<512xf32> to vector<1x512xf32>
    %cst_8 = arith.constant 1.600000e+01 : f32
    %45 = vector.broadcast %cst_8 : f32 to vector<1x512xf32>
    %46 = arith.divf %44, %45 : vector<1x512xf32>
    %47 = vector.broadcast %46 : vector<1x512xf32> to vector<16x512xf32>
    %48 = arith.subf %40, %47 : vector<16x512xf32>
    %49 = arith.mulf %48, %48 : vector<16x512xf32>
    %cst_9 = arith.constant dense<0.000000e+00> : vector<512xf32>
    %50 = vector.multi_reduction <add>, %49, %cst_9 [0] : vector<16x512xf32> to vector<512xf32>
    %51 = vector.shape_cast %50 : vector<512xf32> to vector<1x512xf32>
    %cst_10 = arith.constant 1.600000e+01 : f32
    %52 = vector.broadcast %cst_10 : f32 to vector<1x512xf32>
    %53 = arith.divf %51, %52 : vector<1x512xf32>
    %cst_11 = arith.constant 9.99999997E-7 : f32
    %54 = vector.broadcast %cst_11 : f32 to vector<1x512xf32>
    %55 = arith.addf %53, %54 : vector<1x512xf32>
    %56 = math.rsqrt %55 : vector<1x512xf32>
    %57 = vector.broadcast %56 : vector<1x512xf32> to vector<16x512xf32>
    %58 = arith.mulf %48, %57 : vector<16x512xf32>
    %59 = vector.broadcast %41 : vector<16x1xf32> to vector<16x512xf32>
    %60 = arith.mulf %58, %59 : vector<16x512xf32>
    %61 = vector.broadcast %42 : vector<16x1xf32> to vector<16x512xf32>
    %62 = arith.addf %60, %61 : vector<16x512xf32>
    %c0_12 = arith.constant 0 : index
    %c0_13 = arith.constant 0 : index
    %63 = vector.load %arg6[%c0_12, %c0_13] : memref<32x16xf32, #tpu.memory_space<vmem>>, vector<32x16xf32>
    %cst_14 = arith.constant dense<0.000000e+00> : vector<32x512xf32>
    %64 = tpu.matmul %63, %62, %cst_14 {dimension_numbers = #tpu.dot_dimension_numbers<[1], [0], [0], [1], [0, 0, 1, 1], [], []>} : vector<32x16xf32>, vector<16x512xf32>, vector<32x512xf32> -> vector<32x512xf32>
    %65 = vector.extract_strided_slice %1 {offsets = [0, 3], sizes = [32, 1], strides = [1, 1]} : vector<32x24xf32> to vector<32x1xf32>
    %66 = vector.broadcast %65 : vector<32x1xf32> to vector<32x512xf32>
    %67 = arith.addf %64, %66 : vector<32x512xf32>
    %68 = vector.extract_strided_slice %1 {offsets = [0, 15], sizes = [32, 9], strides = [1, 1]} : vector<32x24xf32> to vector<32x9xf32>
    %69 = vector.extract_strided_slice %1 {offsets = [0, 4], sizes = [32, 1], strides = [1, 1]} : vector<32x24xf32> to vector<32x1xf32>
    %70 = vector.extract_strided_slice %68 {offsets = [0, 4], sizes = [32, 1], strides = [1, 1]} : vector<32x9xf32> to vector<32x1xf32>
    %71 = vector.broadcast %70 : vector<32x1xf32> to vector<32x512xf32>
    %72 = arith.mulf %71, %67 : vector<32x512xf32>
    %73 = vector.extract_strided_slice %68 {offsets = [0, 0], sizes = [32, 1], strides = [1, 1]} : vector<32x9xf32> to vector<32x1xf32>
    %c17_i32_15 = arith.constant 17 : i32
    %74 = tpu.dynamic_rotate %67 by %c17_i32_15 dim 1 : vector<32x512xf32>, i32 -> vector<32x512xf32>
    %75 = vector.extract_strided_slice %0 {offsets = [0, 0], sizes = [1, 512], strides = [1, 1]} : vector<8x512xf32> to vector<1x512xf32>
    %76 = vector.broadcast %75 : vector<1x512xf32> to vector<32x512xf32>
    %77 = arith.mulf %74, %76 : vector<32x512xf32>
    %78 = vector.broadcast %73 : vector<32x1xf32> to vector<32x512xf32>
    %79 = arith.mulf %78, %77 : vector<32x512xf32>
    %80 = arith.addf %72, %79 : vector<32x512xf32>
    %81 = vector.extract_strided_slice %68 {offsets = [0, 1], sizes = [32, 1], strides = [1, 1]} : vector<32x9xf32> to vector<32x1xf32>
    %c16_i32_16 = arith.constant 16 : i32
    %82 = tpu.dynamic_rotate %67 by %c16_i32_16 dim 1 : vector<32x512xf32>, i32 -> vector<32x512xf32>
    %83 = vector.extract_strided_slice %0 {offsets = [1, 0], sizes = [1, 512], strides = [1, 1]} : vector<8x512xf32> to vector<1x512xf32>
    %84 = vector.broadcast %83 : vector<1x512xf32> to vector<32x512xf32>
    %85 = arith.mulf %82, %84 : vector<32x512xf32>
    %86 = vector.broadcast %81 : vector<32x1xf32> to vector<32x512xf32>
    %87 = arith.mulf %86, %85 : vector<32x512xf32>
    %88 = arith.addf %80, %87 : vector<32x512xf32>
    %89 = vector.extract_strided_slice %68 {offsets = [0, 2], sizes = [32, 1], strides = [1, 1]} : vector<32x9xf32> to vector<32x1xf32>
    %c15_i32_17 = arith.constant 15 : i32
    %90 = tpu.dynamic_rotate %67 by %c15_i32_17 dim 1 : vector<32x512xf32>, i32 -> vector<32x512xf32>
    %91 = vector.extract_strided_slice %0 {offsets = [2, 0], sizes = [1, 512], strides = [1, 1]} : vector<8x512xf32> to vector<1x512xf32>
    %92 = vector.broadcast %91 : vector<1x512xf32> to vector<32x512xf32>
    %93 = arith.mulf %90, %92 : vector<32x512xf32>
    %94 = vector.broadcast %89 : vector<32x1xf32> to vector<32x512xf32>
    %95 = arith.mulf %94, %93 : vector<32x512xf32>
    %96 = arith.addf %88, %95 : vector<32x512xf32>
    %97 = vector.extract_strided_slice %68 {offsets = [0, 3], sizes = [32, 1], strides = [1, 1]} : vector<32x9xf32> to vector<32x1xf32>
    %c1_i32_18 = arith.constant 1 : i32
    %98 = tpu.dynamic_rotate %67 by %c1_i32_18 dim 1 : vector<32x512xf32>, i32 -> vector<32x512xf32>
    %99 = vector.extract_strided_slice %0 {offsets = [3, 0], sizes = [1, 512], strides = [1, 1]} : vector<8x512xf32> to vector<1x512xf32>
    %100 = vector.broadcast %99 : vector<1x512xf32> to vector<32x512xf32>
    %101 = arith.mulf %98, %100 : vector<32x512xf32>
    %102 = vector.broadcast %97 : vector<32x1xf32> to vector<32x512xf32>
    %103 = arith.mulf %102, %101 : vector<32x512xf32>
    %104 = arith.addf %96, %103 : vector<32x512xf32>
    %105 = vector.extract_strided_slice %68 {offsets = [0, 5], sizes = [32, 1], strides = [1, 1]} : vector<32x9xf32> to vector<32x1xf32>
    %c511_i32_19 = arith.constant 511 : i32
    %106 = tpu.dynamic_rotate %67 by %c511_i32_19 dim 1 : vector<32x512xf32>, i32 -> vector<32x512xf32>
    %107 = vector.extract_strided_slice %0 {offsets = [4, 0], sizes = [1, 512], strides = [1, 1]} : vector<8x512xf32> to vector<1x512xf32>
    %108 = vector.broadcast %107 : vector<1x512xf32> to vector<32x512xf32>
    %109 = arith.mulf %106, %108 : vector<32x512xf32>
    %110 = vector.broadcast %105 : vector<32x1xf32> to vector<32x512xf32>
    %111 = arith.mulf %110, %109 : vector<32x512xf32>
    %112 = arith.addf %104, %111 : vector<32x512xf32>
    %113 = vector.extract_strided_slice %68 {offsets = [0, 6], sizes = [32, 1], strides = [1, 1]} : vector<32x9xf32> to vector<32x1xf32>
    %c497_i32_20 = arith.constant 497 : i32
    %114 = tpu.dynamic_rotate %67 by %c497_i32_20 dim 1 : vector<32x512xf32>, i32 -> vector<32x512xf32>
    %115 = vector.extract_strided_slice %0 {offsets = [5, 0], sizes = [1, 512], strides = [1, 1]} : vector<8x512xf32> to vector<1x512xf32>
    %116 = vector.broadcast %115 : vector<1x512xf32> to vector<32x512xf32>
    %117 = arith.mulf %114, %116 : vector<32x512xf32>
    %118 = vector.broadcast %113 : vector<32x1xf32> to vector<32x512xf32>
    %119 = arith.mulf %118, %117 : vector<32x512xf32>
    %120 = arith.addf %112, %119 : vector<32x512xf32>
    %121 = vector.extract_strided_slice %68 {offsets = [0, 7], sizes = [32, 1], strides = [1, 1]} : vector<32x9xf32> to vector<32x1xf32>
    %c496_i32_21 = arith.constant 496 : i32
    %122 = tpu.dynamic_rotate %67 by %c496_i32_21 dim 1 : vector<32x512xf32>, i32 -> vector<32x512xf32>
    %123 = vector.extract_strided_slice %0 {offsets = [6, 0], sizes = [1, 512], strides = [1, 1]} : vector<8x512xf32> to vector<1x512xf32>
    %124 = vector.broadcast %123 : vector<1x512xf32> to vector<32x512xf32>
    %125 = arith.mulf %122, %124 : vector<32x512xf32>
    %126 = vector.broadcast %121 : vector<32x1xf32> to vector<32x512xf32>
    %127 = arith.mulf %126, %125 : vector<32x512xf32>
    %128 = arith.addf %120, %127 : vector<32x512xf32>
    %129 = vector.extract_strided_slice %68 {offsets = [0, 8], sizes = [32, 1], strides = [1, 1]} : vector<32x9xf32> to vector<32x1xf32>
    %c495_i32_22 = arith.constant 495 : i32
    %130 = tpu.dynamic_rotate %67 by %c495_i32_22 dim 1 : vector<32x512xf32>, i32 -> vector<32x512xf32>
    %131 = vector.extract_strided_slice %0 {offsets = [7, 0], sizes = [1, 512], strides = [1, 1]} : vector<8x512xf32> to vector<1x512xf32>
    %132 = vector.broadcast %131 : vector<1x512xf32> to vector<32x512xf32>
    %133 = arith.mulf %130, %132 : vector<32x512xf32>
    %134 = vector.broadcast %129 : vector<32x1xf32> to vector<32x512xf32>
    %135 = arith.mulf %134, %133 : vector<32x512xf32>
    %136 = arith.addf %128, %135 : vector<32x512xf32>
    %137 = vector.broadcast %69 : vector<32x1xf32> to vector<32x512xf32>
    %138 = arith.addf %136, %137 : vector<32x512xf32>
    %139 = vector.extract_strided_slice %138 {offsets = [0, 0], sizes = [16, 512], strides = [1, 1]} : vector<32x512xf32> to vector<16x512xf32>
    %140 = vector.extract_strided_slice %138 {offsets = [16, 0], sizes = [16, 512], strides = [1, 1]} : vector<32x512xf32> to vector<16x512xf32>
    %141 = arith.mulf %139, %140 : vector<16x512xf32>
    %c0_23 = arith.constant 0 : index
    %c0_24 = arith.constant 0 : index
    %142 = vector.load %arg3[%c0_23, %c0_24] : memref<2x512xf32, #tpu.memory_space<vmem>>, vector<2x512xf32>
    %cst_25 = arith.constant dense<0.000000e+00> : vector<16x2xf32>
    %143 = tpu.matmul %141, %142, %cst_25 {dimension_numbers = #tpu.dot_dimension_numbers<[1], [1], [0], [0], [0, 0, 1, 0], [], []>} : vector<16x512xf32>, vector<2x512xf32>, vector<16x2xf32> -> vector<16x2xf32>
    %cst_26 = arith.constant 3.906250e-03 : f32
    %144 = vector.broadcast %cst_26 : f32 to vector<16x2xf32>
    %145 = arith.mulf %143, %144 : vector<16x2xf32>
    %c0_27 = arith.constant 0 : index
    %c0_28 = arith.constant 0 : index
    %146 = vector.load %arg8[%c0_27, %c0_28] : memref<16x16xf32, #tpu.memory_space<vmem>>, vector<16x16xf32>
    %cst_29 = arith.constant dense<0.000000e+00> : vector<16x2xf32>
    %147 = tpu.matmul %146, %145, %cst_29 {dimension_numbers = #tpu.dot_dimension_numbers<[1], [0], [0], [1], [0, 0, 1, 1], [], []>} : vector<16x16xf32>, vector<16x2xf32>, vector<16x2xf32> -> vector<16x2xf32>
    %148 = vector.extract_strided_slice %1 {offsets = [0, 6], sizes = [16, 1], strides = [1, 1]} : vector<32x24xf32> to vector<16x1xf32>
    %149 = vector.broadcast %148 : vector<16x1xf32> to vector<16x2xf32>
    %150 = arith.addf %147, %149 : vector<16x2xf32>
    %cst_30 = arith.constant dense<0.000000e+00> : vector<16x512xf32>
    %151 = tpu.matmul %150, %142, %cst_30 {dimension_numbers = #tpu.dot_dimension_numbers<[1], [0], [0], [1], [0, 0, 1, 1], [], []>} : vector<16x2xf32>, vector<2x512xf32>, vector<16x512xf32> -> vector<16x512xf32>
    %152 = arith.mulf %141, %151 : vector<16x512xf32>
    %c0_31 = arith.constant 0 : index
    %c0_32 = arith.constant 0 : index
    %153 = vector.load %arg7[%c0_31, %c0_32] : memref<16x16xf32, #tpu.memory_space<vmem>>, vector<16x16xf32>
    %cst_33 = arith.constant dense<0.000000e+00> : vector<16x512xf32>
    %154 = tpu.matmul %153, %152, %cst_33 {dimension_numbers = #tpu.dot_dimension_numbers<[1], [0], [0], [1], [0, 0, 1, 1], [], []>} : vector<16x16xf32>, vector<16x512xf32>, vector<16x512xf32> -> vector<16x512xf32>
    %155 = vector.extract_strided_slice %1 {offsets = [0, 5], sizes = [16, 1], strides = [1, 1]} : vector<32x24xf32> to vector<16x1xf32>
    %156 = vector.broadcast %155 : vector<16x1xf32> to vector<16x512xf32>
    %157 = arith.addf %154, %156 : vector<16x512xf32>
    %158 = vector.extract_strided_slice %1 {offsets = [0, 11], sizes = [16, 1], strides = [1, 1]} : vector<32x24xf32> to vector<16x1xf32>
    %159 = vector.broadcast %158 : vector<16x1xf32> to vector<16x512xf32>
    %160 = arith.mulf %157, %159 : vector<16x512xf32>
    %161 = arith.addf %40, %160 : vector<16x512xf32>
    %162 = vector.extract_strided_slice %1 {offsets = [0, 7], sizes = [16, 1], strides = [1, 1]} : vector<32x24xf32> to vector<16x1xf32>
    %163 = vector.extract_strided_slice %1 {offsets = [0, 8], sizes = [16, 1], strides = [1, 1]} : vector<32x24xf32> to vector<16x1xf32>
    %cst_34 = arith.constant dense<0.000000e+00> : vector<512xf32>
    %164 = vector.multi_reduction <add>, %161, %cst_34 [0] : vector<16x512xf32> to vector<512xf32>
    %165 = vector.shape_cast %164 : vector<512xf32> to vector<1x512xf32>
    %cst_35 = arith.constant 1.600000e+01 : f32
    %166 = vector.broadcast %cst_35 : f32 to vector<1x512xf32>
    %167 = arith.divf %165, %166 : vector<1x512xf32>
    %168 = vector.broadcast %167 : vector<1x512xf32> to vector<16x512xf32>
    %169 = arith.subf %161, %168 : vector<16x512xf32>
    %170 = arith.mulf %169, %169 : vector<16x512xf32>
    %cst_36 = arith.constant dense<0.000000e+00> : vector<512xf32>
    %171 = vector.multi_reduction <add>, %170, %cst_36 [0] : vector<16x512xf32> to vector<512xf32>
    %172 = vector.shape_cast %171 : vector<512xf32> to vector<1x512xf32>
    %cst_37 = arith.constant 1.600000e+01 : f32
    %173 = vector.broadcast %cst_37 : f32 to vector<1x512xf32>
    %174 = arith.divf %172, %173 : vector<1x512xf32>
    %cst_38 = arith.constant 9.99999997E-7 : f32
    %175 = vector.broadcast %cst_38 : f32 to vector<1x512xf32>
    %176 = arith.addf %174, %175 : vector<1x512xf32>
    %177 = math.rsqrt %176 : vector<1x512xf32>
    %178 = vector.broadcast %177 : vector<1x512xf32> to vector<16x512xf32>
    %179 = arith.mulf %169, %178 : vector<16x512xf32>
    %180 = vector.broadcast %162 : vector<16x1xf32> to vector<16x512xf32>
    %181 = arith.mulf %179, %180 : vector<16x512xf32>
    %182 = vector.broadcast %163 : vector<16x1xf32> to vector<16x512xf32>
    %183 = arith.addf %181, %182 : vector<16x512xf32>
    %c0_39 = arith.constant 0 : index
    %c0_40 = arith.constant 0 : index
    %184 = vector.load %arg9[%c0_39, %c0_40] : memref<32x16xf32, #tpu.memory_space<vmem>>, vector<32x16xf32>
    %cst_41 = arith.constant dense<0.000000e+00> : vector<32x512xf32>
    %185 = tpu.matmul %184, %183, %cst_41 {dimension_numbers = #tpu.dot_dimension_numbers<[1], [0], [0], [1], [0, 0, 1, 1], [], []>} : vector<32x16xf32>, vector<16x512xf32>, vector<32x512xf32> -> vector<32x512xf32>
    %186 = vector.extract_strided_slice %1 {offsets = [0, 9], sizes = [32, 1], strides = [1, 1]} : vector<32x24xf32> to vector<32x1xf32>
    %187 = vector.broadcast %186 : vector<32x1xf32> to vector<32x512xf32>
    %188 = arith.addf %185, %187 : vector<32x512xf32>
    %189 = vector.extract_strided_slice %188 {offsets = [0, 0], sizes = [16, 512], strides = [1, 1]} : vector<32x512xf32> to vector<16x512xf32>
    %190 = vector.extract_strided_slice %188 {offsets = [16, 0], sizes = [16, 512], strides = [1, 1]} : vector<32x512xf32> to vector<16x512xf32>
    %191 = arith.mulf %189, %190 : vector<16x512xf32>
    %192 = vector.extract_strided_slice %1 {offsets = [0, 14], sizes = [16, 1], strides = [1, 1]} : vector<32x24xf32> to vector<16x1xf32>
    %193 = arith.mulf %191, %191 : vector<16x512xf32>
    %cst_42 = arith.constant dense<0.000000e+00> : vector<512xf32>
    %194 = vector.multi_reduction <add>, %193, %cst_42 [0] : vector<16x512xf32> to vector<512xf32>
    %195 = vector.shape_cast %194 : vector<512xf32> to vector<1x512xf32>
    %cst_43 = arith.constant 9.99999996E-13 : f32
    %196 = vector.broadcast %cst_43 : f32 to vector<1x512xf32>
    %197 = arith.addf %195, %196 : vector<1x512xf32>
    %198 = math.rsqrt %197 : vector<1x512xf32>
    %199 = vector.broadcast %192 : vector<16x1xf32> to vector<16x512xf32>
    %200 = arith.mulf %199, %191 : vector<16x512xf32>
    %cst_44 = arith.constant dense<0.000000e+00> : vector<512xf32>
    %201 = vector.multi_reduction <add>, %200, %cst_44 [0] : vector<16x512xf32> to vector<512xf32>
    %202 = vector.shape_cast %201 : vector<512xf32> to vector<1x512xf32>
    %203 = arith.mulf %202, %198 : vector<1x512xf32>
    %204 = vector.broadcast %203 : vector<1x512xf32> to vector<16x512xf32>
    %205 = arith.mulf %191, %204 : vector<16x512xf32>
    %c0_45 = arith.constant 0 : index
    %c0_46 = arith.constant 0 : index
    %206 = vector.load %arg10[%c0_45, %c0_46] : memref<16x16xf32, #tpu.memory_space<vmem>>, vector<16x16xf32>
    %cst_47 = arith.constant dense<0.000000e+00> : vector<16x512xf32>
    %207 = tpu.matmul %206, %205, %cst_47 {dimension_numbers = #tpu.dot_dimension_numbers<[1], [0], [0], [1], [0, 0, 1, 1], [], []>} : vector<16x16xf32>, vector<16x512xf32>, vector<16x512xf32> -> vector<16x512xf32>
    %208 = vector.extract_strided_slice %1 {offsets = [0, 10], sizes = [16, 1], strides = [1, 1]} : vector<32x24xf32> to vector<16x1xf32>
    %209 = vector.broadcast %208 : vector<16x1xf32> to vector<16x512xf32>
    %210 = arith.addf %207, %209 : vector<16x512xf32>
    %211 = vector.extract_strided_slice %1 {offsets = [0, 12], sizes = [16, 1], strides = [1, 1]} : vector<32x24xf32> to vector<16x1xf32>
    %212 = vector.broadcast %211 : vector<16x1xf32> to vector<16x512xf32>
    %213 = arith.mulf %210, %212 : vector<16x512xf32>
    %214 = arith.addf %161, %213 : vector<16x512xf32>
    %c0_48 = arith.constant 0 : index
    %c0_49 = arith.constant 0 : index
    %215 = vector.load %arg11[%c0_48, %c0_49] : memref<8x144xf32, #tpu.memory_space<vmem>>, vector<8x144xf32>
    %216 = vector.extract_strided_slice %1 {offsets = [0, 13], sizes = [8, 1], strides = [1, 1]} : vector<32x24xf32> to vector<8x1xf32>
    %c17_i32_50 = arith.constant 17 : i32
    %217 = tpu.dynamic_rotate %214 by %c17_i32_50 dim 1 : vector<16x512xf32>, i32 -> vector<16x512xf32>
    %218 = vector.extract_strided_slice %0 {offsets = [0, 0], sizes = [1, 512], strides = [1, 1]} : vector<8x512xf32> to vector<1x512xf32>
    %219 = vector.broadcast %218 : vector<1x512xf32> to vector<16x512xf32>
    %220 = arith.mulf %217, %219 : vector<16x512xf32>
    %c16_i32_51 = arith.constant 16 : i32
    %221 = tpu.dynamic_rotate %214 by %c16_i32_51 dim 1 : vector<16x512xf32>, i32 -> vector<16x512xf32>
    %222 = vector.extract_strided_slice %0 {offsets = [1, 0], sizes = [1, 512], strides = [1, 1]} : vector<8x512xf32> to vector<1x512xf32>
    %223 = vector.broadcast %222 : vector<1x512xf32> to vector<16x512xf32>
    %224 = arith.mulf %221, %223 : vector<16x512xf32>
    %c15_i32_52 = arith.constant 15 : i32
    %225 = tpu.dynamic_rotate %214 by %c15_i32_52 dim 1 : vector<16x512xf32>, i32 -> vector<16x512xf32>
    %226 = vector.extract_strided_slice %0 {offsets = [2, 0], sizes = [1, 512], strides = [1, 1]} : vector<8x512xf32> to vector<1x512xf32>
    %227 = vector.broadcast %226 : vector<1x512xf32> to vector<16x512xf32>
    %228 = arith.mulf %225, %227 : vector<16x512xf32>
    %c1_i32_53 = arith.constant 1 : i32
    %229 = tpu.dynamic_rotate %214 by %c1_i32_53 dim 1 : vector<16x512xf32>, i32 -> vector<16x512xf32>
    %230 = vector.extract_strided_slice %0 {offsets = [3, 0], sizes = [1, 512], strides = [1, 1]} : vector<8x512xf32> to vector<1x512xf32>
    %231 = vector.broadcast %230 : vector<1x512xf32> to vector<16x512xf32>
    %232 = arith.mulf %229, %231 : vector<16x512xf32>
    %c511_i32_54 = arith.constant 511 : i32
    %233 = tpu.dynamic_rotate %214 by %c511_i32_54 dim 1 : vector<16x512xf32>, i32 -> vector<16x512xf32>
    %234 = vector.extract_strided_slice %0 {offsets = [4, 0], sizes = [1, 512], strides = [1, 1]} : vector<8x512xf32> to vector<1x512xf32>
    %235 = vector.broadcast %234 : vector<1x512xf32> to vector<16x512xf32>
    %236 = arith.mulf %233, %235 : vector<16x512xf32>
    %c497_i32_55 = arith.constant 497 : i32
    %237 = tpu.dynamic_rotate %214 by %c497_i32_55 dim 1 : vector<16x512xf32>, i32 -> vector<16x512xf32>
    %238 = vector.extract_strided_slice %0 {offsets = [5, 0], sizes = [1, 512], strides = [1, 1]} : vector<8x512xf32> to vector<1x512xf32>
    %239 = vector.broadcast %238 : vector<1x512xf32> to vector<16x512xf32>
    %240 = arith.mulf %237, %239 : vector<16x512xf32>
    %c496_i32_56 = arith.constant 496 : i32
    %241 = tpu.dynamic_rotate %214 by %c496_i32_56 dim 1 : vector<16x512xf32>, i32 -> vector<16x512xf32>
    %242 = vector.extract_strided_slice %0 {offsets = [6, 0], sizes = [1, 512], strides = [1, 1]} : vector<8x512xf32> to vector<1x512xf32>
    %243 = vector.broadcast %242 : vector<1x512xf32> to vector<16x512xf32>
    %244 = arith.mulf %241, %243 : vector<16x512xf32>
    %c495_i32_57 = arith.constant 495 : i32
    %245 = tpu.dynamic_rotate %214 by %c495_i32_57 dim 1 : vector<16x512xf32>, i32 -> vector<16x512xf32>
    %246 = vector.extract_strided_slice %0 {offsets = [7, 0], sizes = [1, 512], strides = [1, 1]} : vector<8x512xf32> to vector<1x512xf32>
    %247 = vector.broadcast %246 : vector<1x512xf32> to vector<16x512xf32>
    %248 = arith.mulf %245, %247 : vector<16x512xf32>
    %249 = tpu.concatenate %220, %224, %228, %232, %214, %236, %240, %244, %248 in 0 : vector<16x512xf32>, vector<16x512xf32>, vector<16x512xf32>, vector<16x512xf32>, vector<16x512xf32>, vector<16x512xf32>, vector<16x512xf32>, vector<16x512xf32>, vector<16x512xf32> -> vector<144x512xf32>
    %cst_58 = arith.constant dense<0.000000e+00> : vector<8x512xf32>
    %250 = tpu.matmul %215, %249, %cst_58 {dimension_numbers = #tpu.dot_dimension_numbers<[1], [0], [0], [1], [0, 0, 1, 1], [], []>} : vector<8x144xf32>, vector<144x512xf32>, vector<8x512xf32> -> vector<8x512xf32>
    %251 = vector.broadcast %216 : vector<8x1xf32> to vector<8x512xf32>
    %252 = arith.addf %250, %251 : vector<8x512xf32>
    %253 = arith.addf %252, %2 : vector<8x512xf32>
    %c0_59 = arith.constant 0 : index
    %c0_60 = arith.constant 0 : index
    %254 = vector.load %arg12[%c0_59, %c0_60] : memref<8x512xf32, #tpu.memory_space<vmem>>, vector<8x512xf32>
    tpu.vector_store %arg12[%c0_59, %c0_60], %253 {strides = array<i32>} : memref<8x512xf32, #tpu.memory_space<vmem>>, vector<8x512xf32>,
    return
  }
  func.func @transform_0(%arg0: i32) -> (i32, i32) {
    %c0_i32 = arith.constant 0 : i32
    %c0_i32_0 = arith.constant 0 : i32
    return %c0_i32, %arg0 : i32, i32
  }
  func.func @transform_1(%arg0: i32) -> (i32, i32) {
    %c0_i32 = arith.constant 0 : i32
    %c0_i32_0 = arith.constant 0 : i32
    %c0_i32_1 = arith.constant 0 : i32
    return %c0_i32, %c0_i32_0 : i32, i32
  }
  func.func @transform_2(%arg0: i32) -> (i32, i32) {
    %c0_i32 = arith.constant 0 : i32
    %c0_i32_0 = arith.constant 0 : i32
    %c0_i32_1 = arith.constant 0 : i32
    return %c0_i32, %c0_i32_0 : i32, i32
  }
  func.func @transform_3(%arg0: i32) -> (i32, i32) {
    %c0_i32 = arith.constant 0 : i32
    %c0_i32_0 = arith.constant 0 : i32
    %c0_i32_1 = arith.constant 0 : i32
    return %c0_i32, %c0_i32_0 : i32, i32
  }
  func.func @transform_4(%arg0: i32) -> (i32, i32) {
    %c0_i32 = arith.constant 0 : i32
    %c0_i32_0 = arith.constant 0 : i32
    %c0_i32_1 = arith.constant 0 : i32
    return %c0_i32, %c0_i32_0 : i32, i32
  }
  func.func @transform_5(%arg0: i32) -> (i32, i32) {
    %c0_i32 = arith.constant 0 : i32
    %c0_i32_0 = arith.constant 0 : i32
    %c0_i32_1 = arith.constant 0 : i32
    return %c0_i32, %c0_i32_0 : i32, i32
  }
  func.func @transform_6(%arg0: i32) -> (i32, i32) {
    %c0_i32 = arith.constant 0 : i32
    %c0_i32_0 = arith.constant 0 : i32
    %c0_i32_1 = arith.constant 0 : i32
    return %c0_i32, %c0_i32_0 : i32, i32
  }
  func.func @transform_7(%arg0: i32) -> (i32, i32) {
    %c0_i32 = arith.constant 0 : i32
    %c0_i32_0 = arith.constant 0 : i32
    %c0_i32_1 = arith.constant 0 : i32
    return %c0_i32, %c0_i32_0 : i32, i32
  }
  func.func @transform_8(%arg0: i32) -> (i32, i32) {
    %c0_i32 = arith.constant 0 : i32
    %c0_i32_0 = arith.constant 0 : i32
    %c0_i32_1 = arith.constant 0 : i32
    return %c0_i32, %c0_i32_0 : i32, i32
  }
  func.func @transform_9(%arg0: i32) -> (i32, i32) {
    %c0_i32 = arith.constant 0 : i32
    %c0_i32_0 = arith.constant 0 : i32
    %c0_i32_1 = arith.constant 0 : i32
    return %c0_i32, %c0_i32_0 : i32, i32
  }
  func.func @transform_10(%arg0: i32) -> (i32, i32) {
    %c0_i32 = arith.constant 0 : i32
    %c0_i32_0 = arith.constant 0 : i32
    %c0_i32_1 = arith.constant 0 : i32
    return %c0_i32, %c0_i32_0 : i32, i32
  }
  func.func @transform_11(%arg0: i32) -> (i32, i32) {
    %c0_i32 = arith.constant 0 : i32
    %c0_i32_0 = arith.constant 0 : i32
    return %c0_i32, %arg0 : i32, i32
  }
}

</mosaic_0001>

<llo_original>
// kernel: _lambda_.1
$region0: #{_lambda_.1}
  #allocation0 [shape = 'u32[]', space=smem, size = 0x4, offset = 0x4, fixed_abs, tag = 'smem constant byte address 0x4 - core index']
  #allocation1 [shape = 'u32[144,128]{1,0:T(1,128)}', space=vmem, size = 0x12000, scoped, tag = 'internal scratch']
  %s0 = inlined_call_operand.vmem [shape: f32[8,1024], index: 0, kind: input, shape index: {}]
  %s1 = inlined_call_operand.vmem [shape: f32[8,512], index: 1, kind: input, shape index: {}]
  %s2 = inlined_call_operand.vmem [shape: f32[2,512], index: 2, kind: input, shape index: {}]
  %s3 = inlined_call_operand.vmem [shape: f32[32,24], index: 3, kind: input, shape index: {}]
  %s4 = inlined_call_operand.vmem [shape: f32[16,72], index: 4, kind: input, shape index: {}]
  %s5 = inlined_call_operand.vmem [shape: f32[32,16], index: 5, kind: input, shape index: {}]
  %s6 = inlined_call_operand.vmem [shape: f32[16,16], index: 6, kind: input, shape index: {}]
  %s7 = inlined_call_operand.vmem [shape: f32[16,16], index: 7, kind: input, shape index: {}]
  %s8 = inlined_call_operand.vmem [shape: f32[32,16], index: 8, kind: input, shape index: {}]
  %s9 = inlined_call_operand.vmem [shape: f32[16,16], index: 9, kind: input, shape index: {}]
  %s10 = inlined_call_operand.vmem [shape: f32[8,144], index: 10, kind: input, shape index: {}]
  %s11 = inlined_call_operand.vmem [shape: f32[8,1024], index: 11, kind: output, shape index: {}]
  %s12 = sld [smem:[#allocation0]]
  $region77: #{_lambda_.1} parent=0
    _
  %s14 = ssub.s32 1, %s12
  %s15 = scalar_select 0, %s14, %s12
  loop: start=0, step=1, limit=4
  $region2: #{_lambda_.1} parent=0 // loop_pre_header
    _
  $region3: #{_lambda_.1} parent=0 // loop_header
    %s17 = sphi 0, %s21
    %p18 = scmp.ge.s32.totalorder %s17, 4
    %s27 = sphi 0, %s29
    %s30 = sphi 0, %s27
    %s31 = sphi 0, %s30
    %s47 = sphi 0, %s31
    %s51 = sphi 0, %s51
    %s53 = sphi 0, %s51
    %s54 = sphi 0, %s53
    %s68 = sphi 0, %s54
    %s72 = sphi 0, %s72
    %s74 = sphi 0, %s72
    %s75 = sphi 0, %s74
    %s89 = sphi 0, %s75
    %s93 = sphi 0, %s93
    %s95 = sphi 0, %s93
    %s96 = sphi 0, %s95
    %s110 = sphi 0, %s96
    %s114 = sphi 0, %s114
    %s116 = sphi 0, %s114
    %s117 = sphi 0, %s116
    %s131 = sphi 0, %s117
    %s135 = sphi 0, %s135
    %s137 = sphi 0, %s135
    %s138 = sphi 0, %s137
    %s152 = sphi 0, %s138
    %s156 = sphi 0, %s156
    %s158 = sphi 0, %s156
    %s159 = sphi 0, %s158
    %s173 = sphi 0, %s159
    %s177 = sphi 0, %s177
    %s179 = sphi 0, %s177
    %s180 = sphi 0, %s179
    %s194 = sphi 0, %s180
    %s198 = sphi 0, %s198
    %s200 = sphi 0, %s198
    %s201 = sphi 0, %s200
    %s215 = sphi 0, %s201
    %s219 = sphi 0, %s219
    %s221 = sphi 0, %s219
    %s222 = sphi 0, %s221
    %s236 = sphi 0, %s222
    %s240 = sphi 0, %s240
    %s242 = sphi 0, %s240
    %s243 = sphi 0, %s242
    %s257 = sphi 0, %s243
    %s263 = sphi 0, %s265
    %s266 = sphi 0, %s263
    %s267 = sphi 0, %s266
    %s283 = sphi 0, %s267
  $region4: #{_lambda_.1} parent=0 // loop_header_branch
    %20 = sbr.rel (%p18) target = $region8
  $region5: #{_lambda_.1} parent=0 // loop_body
    %s22 = ssub.s32 %s17, 1
    %s23 = ssub.s32 %s17, 2
    %s24 = sadd.s32 %s17, 1
    %s25 = ssub.s32 %s17, %s24
    %p26 = scmp.eq.s32.totalorder %s25, 0
    %s28 = sadd.s32 %s27, 1
    %s29 = scalar_select %p26, %s27, %s28
    %p32 = pneg %p26
    %p33 = scmp.eq.s32.totalorder %s17, 1
    %p34 = por %p32, %p33
    %p35 = scmp.ne.s32.totalorder %s27, %s30
    %p36 = scmp.eq.s32.totalorder %s17, 0
    %p37 = por %p35, %p36
    %p38 = scmp.ne.s32.totalorder %s27, %s30
    %p39 = scmp.eq.s32.totalorder %s22, 1
    %p40 = por %p38, %p39
    %p41 = scmp.ne.s32.totalorder %s30, %s31
    %p42 = scmp.eq.s32.totalorder %s22, 0
    %p43 = por %p41, %p42
    %p44 = scmp.ne.s32.totalorder %s30, %s31
    %p45 = scmp.eq.s32.totalorder %s23, 1
    %p46 = por %p44, %p45
    %p48 = scmp.ne.s32.totalorder %s31, %s47
    %p49 = scmp.eq.s32.totalorder %s23, 0
    %p50 = por %p48, %p49
    %s52 = sadd.s32 %s51, 1
    %p55 = scmp.eq.s32.totalorder %s17, 1
    %p56 = scmp.ne.s32.totalorder %s51, %s53
    %p57 = scmp.eq.s32.totalorder %s17, 0
    %p58 = por %p56, %p57
    %p59 = scmp.ne.s32.totalorder %s51, %s53
    %p60 = scmp.eq.s32.totalorder %s22, 1
    %p61 = por %p59, %p60
    %p62 = scmp.ne.s32.totalorder %s53, %s54
    %p63 = scmp.eq.s32.totalorder %s22, 0
    %p64 = por %p62, %p63
    %p65 = scmp.ne.s32.totalorder %s53, %s54
    %p66 = scmp.eq.s32.totalorder %s23, 1
    %p67 = por %p65, %p66
    %p69 = scmp.ne.s32.totalorder %s54, %s68
    %p70 = scmp.eq.s32.totalorder %s23, 0
    %p71 = por %p69, %p70
    %s73 = sadd.s32 %s72, 1
    %p76 = scmp.eq.s32.totalorder %s17, 1
    %p77 = scmp.ne.s32.totalorder %s72, %s74
    %p78 = scmp.eq.s32.totalorder %s17, 0
    %p79 = por %p77, %p78
    %p80 = scmp.ne.s32.totalorder %s72, %s74
    %p81 = scmp.eq.s32.totalorder %s22, 1
    %p82 = por %p80, %p81
    %p83 = scmp.ne.s32.totalorder %s74, %s75
    %p84 = scmp.eq.s32.totalorder %s22, 0
    %p85 = por %p83, %p84
    %p86 = scmp.ne.s32.totalorder %s74, %s75
    %p87 = scmp.eq.s32.totalorder %s23, 1
    %p88 = por %p86, %p87
    %p90 = scmp.ne.s32.totalorder %s75, %s89
    %p91 = scmp.eq.s32.totalorder %s23, 0
    %p92 = por %p90, %p91
    %s94 = sadd.s32 %s93, 1
    %p97 = scmp.eq.s32.totalorder %s17, 1
    %p98 = scmp.ne.s32.totalorder %s93, %s95
    %p99 = scmp.eq.s32.totalorder %s17, 0
    %p100 = por %p98, %p99
    %p101 = scmp.ne.s32.totalorder %s93, %s95
    %p102 = scmp.eq.s32.totalorder %s22, 1
    %p103 = por %p101, %p102
    %p104 = scmp.ne.s32.totalorder %s95, %s96
    %p105 = scmp.eq.s32.totalorder %s22, 0
    %p106 = por %p104, %p105
    %p107 = scmp.ne.s32.totalorder %s95, %s96
    %p108 = scmp.eq.s32.totalorder %s23, 1
    %p109 = por %p107, %p108
    %p111 = scmp.ne.s32.totalorder %s96, %s110
    %p112 = scmp.eq.s32.totalorder %s23, 0
    %p113 = por %p111, %p112
    %s115 = sadd.s32 %s114, 1
    %p118 = scmp.eq.s32.totalorder %s17, 1
    %p119 = scmp.ne.s32.totalorder %s114, %s116
    %p120 = scmp.eq.s32.totalorder %s17, 0
    %p121 = por %p119, %p120
    %p122 = scmp.ne.s32.totalorder %s114, %s116
    %p123 = scmp.eq.s32.totalorder %s22, 1
    %p124 = por %p122, %p123
    %p125 = scmp.ne.s32.totalorder %s116, %s117
    %p126 = scmp.eq.s32.totalorder %s22, 0
    %p127 = por %p125, %p126
    %p128 = scmp.ne.s32.totalorder %s116, %s117
    %p129 = scmp.eq.s32.totalorder %s23, 1
    %p130 = por %p128, %p129
    %p132 = scmp.ne.s32.totalorder %s117, %s131
    %p133 = scmp.eq.s32.totalorder %s23, 0
    %p134 = por %p132, %p133
    %s136 = sadd.s32 %s135, 1
    %p139 = scmp.eq.s32.totalorder %s17, 1
    %p140 = scmp.ne.s32.totalorder %s135, %s137
    %p141 = scmp.eq.s32.totalorder %s17, 0
    %p142 = por %p140, %p141
    %p143 = scmp.ne.s32.totalorder %s135, %s137
    %p144 = scmp.eq.s32.totalorder %s22, 1
    %p145 = por %p143, %p144
    %p146 = scmp.ne.s32.totalorder %s137, %s138
    %p147 = scmp.eq.s32.totalorder %s22, 0
    %p148 = por %p146, %p147
    %p149 = scmp.ne.s32.totalorder %s137, %s138
    %p150 = scmp.eq.s32.totalorder %s23, 1
    %p151 = por %p149, %p150
    %p153 = scmp.ne.s32.totalorder %s138, %s152
    %p154 = scmp.eq.s32.totalorder %s23, 0
    %p155 = por %p153, %p154
    %s157 = sadd.s32 %s156, 1
    %p160 = scmp.eq.s32.totalorder %s17, 1
    %p161 = scmp.ne.s32.totalorder %s156, %s158
    %p162 = scmp.eq.s32.totalorder %s17, 0
    %p163 = por %p161, %p162
    %p164 = scmp.ne.s32.totalorder %s156, %s158
    %p165 = scmp.eq.s32.totalorder %s22, 1
    %p166 = por %p164, %p165
    %p167 = scmp.ne.s32.totalorder %s158, %s159
    %p168 = scmp.eq.s32.totalorder %s22, 0
    %p169 = por %p167, %p168
    %p170 = scmp.ne.s32.totalorder %s158, %s159
    %p171 = scmp.eq.s32.totalorder %s23, 1
    %p172 = por %p170, %p171
    %p174 = scmp.ne.s32.totalorder %s159, %s173
    %p175 = scmp.eq.s32.totalorder %s23, 0
    %p176 = por %p174, %p175
    %s178 = sadd.s32 %s177, 1
    %p181 = scmp.eq.s32.totalorder %s17, 1
    %p182 = scmp.ne.s32.totalorder %s177, %s179
    %p183 = scmp.eq.s32.totalorder %s17, 0
    %p184 = por %p182, %p183
    %p185 = scmp.ne.s32.totalorder %s177, %s179
    %p186 = scmp.eq.s32.totalorder %s22, 1
    %p187 = por %p185, %p186
    %p188 = scmp.ne.s32.totalorder %s179, %s180
    %p189 = scmp.eq.s32.totalorder %s22, 0
    %p190 = por %p188, %p189
    %p191 = scmp.ne.s32.totalorder %s179, %s180
    %p192 = scmp.eq.s32.totalorder %s23, 1
    %p193 = por %p191, %p192
    %p195 = scmp.ne.s32.totalorder %s180, %s194
    %p196 = scmp.eq.s32.totalorder %s23, 0
    %p197 = por %p195, %p196
    %s199 = sadd.s32 %s198, 1
    %p202 = scmp.eq.s32.totalorder %s17, 1
    %p203 = scmp.ne.s32.totalorder %s198, %s200
    %p204 = scmp.eq.s32.totalorder %s17, 0
    %p205 = por %p203, %p204
    %p206 = scmp.ne.s32.totalorder %s198, %s200
    %p207 = scmp.eq.s32.totalorder %s22, 1
    %p208 = por %p206, %p207
    %p209 = scmp.ne.s32.totalorder %s200, %s201
    %p210 = scmp.eq.s32.totalorder %s22, 0
    %p211 = por %p209, %p210
    %p212 = scmp.ne.s32.totalorder %s200, %s201
    %p213 = scmp.eq.s32.totalorder %s23, 1
    %p214 = por %p212, %p213
    %p216 = scmp.ne.s32.totalorder %s201, %s215
    %p217 = scmp.eq.s32.totalorder %s23, 0
    %p218 = por %p216, %p217
    %s220 = sadd.s32 %s219, 1
    %p223 = scmp.eq.s32.totalorder %s17, 1
    %p224 = scmp.ne.s32.totalorder %s219, %s221
    %p225 = scmp.eq.s32.totalorder %s17, 0
    %p226 = por %p224, %p225
    %p227 = scmp.ne.s32.totalorder %s219, %s221
    %p228 = scmp.eq.s32.totalorder %s22, 1
    %p229 = por %p227, %p228
    %p230 = scmp.ne.s32.totalorder %s221, %s222
    %p231 = scmp.eq.s32.totalorder %s22, 0
    %p232 = por %p230, %p231
    %p233 = scmp.ne.s32.totalorder %s221, %s222
    %p234 = scmp.eq.s32.totalorder %s23, 1
    %p235 = por %p233, %p234
    %p237 = scmp.ne.s32.totalorder %s222, %s236
    %p238 = scmp.eq.s32.totalorder %s23, 0
    %p239 = por %p237, %p238
    %s241 = sadd.s32 %s240, 1
    %p244 = scmp.eq.s32.totalorder %s17, 1
    %p245 = scmp.ne.s32.totalorder %s240, %s242
    %p246 = scmp.eq.s32.totalorder %s17, 0
    %p247 = por %p245, %p246
    %p248 = scmp.ne.s32.totalorder %s240, %s242
    %p249 = scmp.eq.s32.totalorder %s22, 1
    %p250 = por %p248, %p249
    %p251 = scmp.ne.s32.totalorder %s242, %s243
    %p252 = scmp.eq.s32.totalorder %s22, 0
    %p253 = por %p251, %p252
    %p254 = scmp.ne.s32.totalorder %s242, %s243
    %p255 = scmp.eq.s32.totalorder %s23, 1
    %p256 = por %p254, %p255
    %p258 = scmp.ne.s32.totalorder %s243, %s257
    %p259 = scmp.eq.s32.totalorder %s23, 0
    %p260 = por %p258, %p259
    %s261 = ssub.s32 %s17, %s24
    %p262 = scmp.eq.s32.totalorder %s261, 0
    %s264 = sadd.s32 %s263, 1
    %s265 = scalar_select %p262, %s263, %s264
    %p268 = pneg %p262
    %p269 = scmp.eq.s32.totalorder %s17, 1
    %p270 = por %p268, %p269
    %p271 = scmp.ne.s32.totalorder %s263, %s266
    %p272 = scmp.eq.s32.totalorder %s17, 0
    %p273 = por %p271, %p272
    %p274 = scmp.ne.s32.totalorder %s263, %s266
    %p275 = scmp.eq.s32.totalorder %s22, 1
    %p276 = por %p274, %p275
    %p277 = scmp.ne.s32.totalorder %s266, %s267
    %p278 = scmp.eq.s32.totalorder %s22, 0
    %p279 = por %p277, %p278
    %p280 = scmp.ne.s32.totalorder %s266, %s267
    %p281 = scmp.eq.s32.totalorder %s23, 1
    %p282 = por %p280, %p281
    %p284 = scmp.ne.s32.totalorder %s267, %s283
    %p285 = scmp.eq.s32.totalorder %s23, 0
    %p286 = por %p284, %p285
    %p287 = scmp.le.s32.totalorder 1, %s17
    %p288 = scmp.lt.s32.totalorder %s17, 3
    %p289 = pnand %p287, %p288
    %p290 = pneg %p289
    // Predicated region
    $region9: #{_lambda_.1} parent=5 // pred_check
      _
    $region10: #{_lambda_.1} parent=5 // pred_check_branch
      %292 = sbr.rel (%p289) target = $region12
    $region11: #{_lambda_.1} parent=5 // pred_region
      %s293 = ssub.s32 %s17, 1
      // Predicated region
      $region13: #{_lambda_.1} parent=11 // pred_check
        %p294 = pneg %p64
      $region14: #{_lambda_.1} parent=11 // pred_check_branch
        %296 = sbr.rel (%p294) target = $region16
      $region15: #{_lambda_.1} parent=11 // pred_region
        _
      $region16: #{_lambda_.1} parent=11 // pred_fallthru
        _
      // Predicated region
      $region17: #{_lambda_.1} parent=11 // pred_check
        %p297 = pneg %p85
      $region18: #{_lambda_.1} parent=11 // pred_check_branch
        %299 = sbr.rel (%p297) target = $region20
      $region19: #{_lambda_.1} parent=11 // pred_region
        _
      $region20: #{_lambda_.1} parent=11 // pred_fallthru
        _
      // Predicated region
      $region21: #{_lambda_.1} parent=11 // pred_check
        %p300 = pneg %p106
      $region22: #{_lambda_.1} parent=11 // pred_check_branch
        %302 = sbr.rel (%p300) target = $region24
      $region23: #{_lambda_.1} parent=11 // pred_region
        _
      $region24: #{_lambda_.1} parent=11 // pred_fallthru
        _
      // Predicated region
      $region25: #{_lambda_.1} parent=11 // pred_check
        %p303 = pneg %p127
      $region26: #{_lambda_.1} parent=11 // pred_check_branch
        %305 = sbr.rel (%p303) target = $region28
      $region27: #{_lambda_.1} parent=11 // pred_region
        _
      $region28: #{_lambda_.1} parent=11 // pred_fallthru
        _
      // Predicated region
      $region29: #{_lambda_.1} parent=11 // pred_check
        %p306 = pneg %p148
      $region30: #{_lambda_.1} parent=11 // pred_check_branch
        %308 = sbr.rel (%p306) target = $region32
      $region31: #{_lambda_.1} parent=11 // pred_region
        _
      $region32: #{_lambda_.1} parent=11 // pred_fallthru
        _
      // Predicated region
      $region33: #{_lambda_.1} parent=11 // pred_check
        %p309 = pneg %p169
      $region34: #{_lambda_.1} parent=11 // pred_check_branch
        %311 = sbr.rel (%p309) target = $region36
      $region35: #{_lambda_.1} parent=11 // pred_region
        _
      $region36: #{_lambda_.1} parent=11 // pred_fallthru
        _
      // Predicated region
      $region37: #{_lambda_.1} parent=11 // pred_check
        %p312 = pneg %p190
      $region38: #{_lambda_.1} parent=11 // pred_check_branch
        %314 = sbr.rel (%p312) target = $region40
      $region39: #{_lambda_.1} parent=11 // pred_region
        _
      $region40: #{_lambda_.1} parent=11 // pred_fallthru
        _
      // Predicated region
      $region41: #{_lambda_.1} parent=11 // pred_check
        %p315 = pneg %p211
      $region42: #{_lambda_.1} parent=11 // pred_check_branch
        %317 = sbr.rel (%p315) target = $region44
      $region43: #{_lambda_.1} parent=11 // pred_region
        _
      $region44: #{_lambda_.1} parent=11 // pred_fallthru
        _
      // Predicated region
      $region45: #{_lambda_.1} parent=11 // pred_check
        %p318 = pneg %p232
      $region46: #{_lambda_.1} parent=11 // pred_check_branch
        %320 = sbr.rel (%p318) target = $region48
      $region47: #{_lambda_.1} parent=11 // pred_region
        _
      $region48: #{_lambda_.1} parent=11 // pred_fallthru
        _
      // Predicated region
      $region49: #{_lambda_.1} parent=11 // pred_check
        %p321 = pneg %p253
      $region50: #{_lambda_.1} parent=11 // pred_check_branch
        %323 = sbr.rel (%p321) target = $region52
      $region51: #{_lambda_.1} parent=11 // pred_region
        _
      $region52: #{_lambda_.1} parent=11 // pred_fallthru
        _
    $region12: #{_lambda_.1} parent=5 // pred_fallthru
      _
    %p324 = scmp.lt.s32.totalorder %s17, 2
    // Predicated region
    $region53: #{_lambda_.1} parent=5 // pred_check
      %p325 = pneg %p324
    $region54: #{_lambda_.1} parent=5 // pred_check_branch
      %327 = sbr.rel (%p325) target = $region56
    $region55: #{_lambda_.1} parent=5 // pred_region
      // Predicated region
      $region57: #{_lambda_.1} parent=55 // pred_check
        %p328 = pneg %p37
      $region58: #{_lambda_.1} parent=55 // pred_check_branch
        %330 = sbr.rel (%p328) target = $region60
      $region59: #{_lambda_.1} parent=55 // pred_region
        %s331 = smul.u32 4, %s17
        %p332 = scmp.lt.s32.totalorder %s331, 7
        %s333 = scalar_select %p332, %s331, 7
        %s334 = smul.addr %s333, 8
        %s335 = scalar_lea.vmem %s0, %s334
        %s336 = smul.u32 4, %s17
      $region60: #{_lambda_.1} parent=55 // pred_fallthru
        _
    $region56: #{_lambda_.1} parent=5 // pred_fallthru
      _
    %p337 = scmp.le.s32.totalorder 1, %s17
    %p338 = scmp.lt.s32.totalorder %s17, 3
    %p339 = pnand %p337, %p338
    %p340 = pneg %p339
    // Predicated region
    $region61: #{_lambda_.1} parent=5 // pred_check
      _
    $region62: #{_lambda_.1} parent=5 // pred_check_branch
      %342 = sbr.rel (%p339) target = $region64
    $region63: #{_lambda_.1} parent=5 // pred_region
      %s343 = ssub.s32 %s17, 1
      %s344 = smul.u32 4, %s22
      %p345 = scmp.lt.s32.totalorder %s344, 7
      %s346 = scalar_select %p345, %s344, 7
      %s347 = smul.addr %s346, 8
      %s348 = scalar_lea.vmem %s0, %s347
      %p349 = pneg %p43
      %p350 = pneg %p40
      %p351 = pneg %p64
      %p352 = pneg %p61
      %p353 = pneg %p85
      %p354 = pneg %p82
      %p355 = pneg %p106
      %p356 = pneg %p103
      %p357 = pneg %p127
      %p358 = pneg %p124
      %p359 = pneg %p148
      %p360 = pneg %p145
      %p361 = pneg %p169
      %p362 = pneg %p166
      %p363 = pneg %p190
      %p364 = pneg %p187
      %p365 = pneg %p211
      %p366 = pneg %p208
      %p367 = pneg %p232
      %p368 = pneg %p229
      %p369 = pneg %p253
      %p370 = pneg %p250
      %p371 = pneg %p279
      %p372 = pneg %p276
      %s373 = smul.u32 4, %s22
      %p374 = scmp.lt.s32.totalorder %s373, 7
      %s375 = scalar_select %p374, %s373, 7
      %s376 = smul.addr %s375, 8
      %s377 = scalar_lea.vmem %s11, %s376
      %s378 = smul.u32 4, %s22
      %p379 = scmp.lt.s32.totalorder %s378, 7
      %s380 = scalar_select %p379, %s378, 7
      %s381 = smul.addr %s380, 8
      %s382 = scalar_lea.vmem %s0, %s381
      %s383 = smul.u32 4, %s22
      %s384 = smul.u32 4, %s22
      %p385 = scmp.lt.s32.totalorder %s384, 7
      %s386 = scalar_select %p385, %s384, 7
      %s387 = smul.addr %s386, 8
      %s388 = scalar_lea.vmem %s11, %s387
      %s389 = smul.u32 4, %s22
      %v390 = vld [vmem:[%s1] sm:$0xff]
      %v391 = vld [vmem:[%s1 + $0x8] sm:$0xff]
      %v392 = vld [vmem:[%s1 + $0x10] sm:$0xff]
      %v393 = vld [vmem:[%s1 + $0x18] sm:$0xff]
      %v394 = vld [vmem:[%s3] sm:$0xff]
      %v395 = vld [vmem:[%s3 + $0x8] sm:$0xff]
      %v396 = vld [vmem:[%s3 + $0x10] sm:$0xff]
      %v397 = vld [vmem:[%s3 + $0x18] sm:$0xff]
      %v398 = vld [vmem:[%s382] sm:$0xff]
      %v399 = vld [vmem:[%s382 + $0x8] sm:$0xff]
      %v400 = vld [vmem:[%s382 + $0x10] sm:$0xff]
      %v401 = vld [vmem:[%s382 + $0x18] sm:$0xff]
      %v402 = vld [vmem:[%s4] sm:$0xff]
      %v403 = vld [vmem:[%s4 + $0x8] sm:$0xff]
      %404 = vrot.lane.b32.xlu0 %v398, 17
      %v405 = vpop.permute.xlu0 %404
      %406 = vrot.lane.b32.xlu0 %v399, 17
      %v407 = vpop.permute.xlu0 %406
      %408 = vrot.lane.b32.xlu0 %v400, 17
      %v409 = vpop.permute.xlu0 %408
      %410 = vrot.lane.b32.xlu0 %v401, 17
      %v411 = vpop.permute.xlu0 %410
      %v412 = vlaneseq
      %v413 = vand.u32 %v412, 127
      %vm414 = vcmp.lt.s32.totalorder %v413, 17
      %v415 = vsel %vm414, %v409, %v411
      %v416 = vsel %vm414, %v407, %v409
      %v417 = vsel %vm414, %v405, %v407
      %v418 = vsel %vm414, %v411, %v405
      %v419 = vlaneseq
      %v420 = vshrl.u32 %v419, 7
      %v421 = vsub.s32 0, %v420
      %v422 = vrot.slane %v390, %v421
      %v423 = vlaneseq
      %v424 = vshrl.u32 %v423, 7
      %v425 = vsub.s32 0, %v424
      %v426 = vrot.slane %v391, %v425
      %v427 = vlaneseq
      %v428 = vshrl.u32 %v427, 7
      %v429 = vsub.s32 0, %v428
      %v430 = vrot.slane %v392, %v429
      %v431 = vlaneseq
      %v432 = vshrl.u32 %v431, 7
      %v433 = vsub.s32 0, %v432
      %v434 = vrot.slane %v393, %v433
      %v435 = vmul.f32 %v418, %v422
      %v436 = vmul.f32 %v417, %v426
      %v437 = vmul.f32 %v416, %v430
      %v438 = vmul.f32 %v415, %v434
      %439 = vrot.lane.b32.xlu0 %v398, 16
      %v440 = vpop.permute.xlu0 %439
      %441 = vrot.lane.b32.xlu0 %v399, 16
      %v442 = vpop.permute.xlu0 %441
      %443 = vrot.lane.b32.xlu0 %v400, 16
      %v444 = vpop.permute.xlu0 %443
      %445 = vrot.lane.b32.xlu0 %v401, 16
      %v446 = vpop.permute.xlu0 %445
      %vm447 = vcmp.lt.s32.totalorder %v413, 16
      %v448 = vsel %vm447, %v444, %v446
      %v449 = vsel %vm447, %v442, %v444
      %v450 = vsel %vm447, %v440, %v442
      %v451 = vsel %vm447, %v446, %v440
      %v452 = vlaneseq
      %v453 = vshrl.u32 %v452, 7
      %v454 = vsub.s32 1, %v453
      %v455 = vrot.slane %v390, %v454
      %v456 = vlaneseq
      %v457 = vshrl.u32 %v456, 7
      %v458 = vsub.s32 1, %v457
      %v459 = vrot.slane %v391, %v458
      %v460 = vlaneseq
      %v461 = vshrl.u32 %v460, 7
      %v462 = vsub.s32 1, %v461
      %v463 = vrot.slane %v392, %v462
      %v464 = vlaneseq
      %v465 = vshrl.u32 %v464, 7
      %v466 = vsub.s32 1, %v465
      %v467 = vrot.slane %v393, %v466
      %v468 = vmul.f32 %v451, %v455
      %v469 = vmul.f32 %v450, %v459
      %v470 = vmul.f32 %v449, %v463
      %v471 = vmul.f32 %v448, %v467
      %472 = vrot.lane.b32.xlu0 %v398, 15
      %v473 = vpop.permute.xlu0 %472
      %474 = vrot.lane.b32.xlu0 %v399, 15
      %v475 = vpop.permute.xlu0 %474
      %476 = vrot.lane.b32.xlu0 %v400, 15
      %v477 = vpop.permute.xlu0 %476
      %478 = vrot.lane.b32.xlu0 %v401, 15
      %v479 = vpop.permute.xlu0 %478
      %vm480 = vcmp.lt.s32.totalorder %v413, 15
      %v481 = vsel %vm480, %v477, %v479
      %v482 = vsel %vm480, %v475, %v477
      %v483 = vsel %vm480, %v473, %v475
      %v484 = vsel %vm480, %v479, %v473
      %v485 = vlaneseq
      %v486 = vshrl.u32 %v485, 7
      %v487 = vsub.s32 2, %v486
      %v488 = vrot.slane %v390, %v487
      %v489 = vlaneseq
      %v490 = vshrl.u32 %v489, 7
      %v491 = vsub.s32 2, %v490
      %v492 = vrot.slane %v391, %v491
      %v493 = vlaneseq
      %v494 = vshrl.u32 %v493, 7
      %v495 = vsub.s32 2, %v494
      %v496 = vrot.slane %v392, %v495
      %v497 = vlaneseq
      %v498 = vshrl.u32 %v497, 7
      %v499 = vsub.s32 2, %v498
      %v500 = vrot.slane %v393, %v499
      %v501 = vmul.f32 %v484, %v488
      %v502 = vmul.f32 %v483, %v492
      %v503 = vmul.f32 %v482, %v496
      %v504 = vmul.f32 %v481, %v500
      %505 = vrot.lane.b32.xlu0 %v398, 1
      %v506 = vpop.permute.xlu0 %505
      %507 = vrot.lane.b32.xlu0 %v399, 1
      %v508 = vpop.permute.xlu0 %507
      %509 = vrot.lane.b32.xlu0 %v400, 1
      %v510 = vpop.permute.xlu0 %509
      %511 = vrot.lane.b32.xlu0 %v401, 1
      %v512 = vpop.permute.xlu0 %511
      %vm513 = vcmp.lt.s32.totalorder %v413, 1
      %v514 = vsel %vm513, %v510, %v512
      %v515 = vsel %vm513, %v508, %v510
      %v516 = vsel %vm513, %v506, %v508
      %v517 = vsel %vm513, %v512, %v506
      %v518 = vlaneseq
      %v519 = vshrl.u32 %v518, 7
      %v520 = vsub.s32 3, %v519
      %v521 = vrot.slane %v390, %v520
      %v522 = vlaneseq
      %v523 = vshrl.u32 %v522, 7
      %v524 = vsub.s32 3, %v523
      %v525 = vrot.slane %v391, %v524
      %v526 = vlaneseq
      %v527 = vshrl.u32 %v526, 7
      %v528 = vsub.s32 3, %v527
      %v529 = vrot.slane %v392, %v528
      %v530 = vlaneseq
      %v531 = vshrl.u32 %v530, 7
      %v532 = vsub.s32 3, %v531
      %v533 = vrot.slane %v393, %v532
      %v534 = vmul.f32 %v517, %v521
      %v535 = vmul.f32 %v516, %v525
      %v536 = vmul.f32 %v515, %v529
      %v537 = vmul.f32 %v514, %v533
      %538 = vrot.lane.b32.xlu0 %v398, 127
      %v539 = vpop.permute.xlu0 %538
      %540 = vrot.lane.b32.xlu0 %v399, 127
      %v541 = vpop.permute.xlu0 %540
      %542 = vrot.lane.b32.xlu0 %v400, 127
      %v543 = vpop.permute.xlu0 %542
      %544 = vrot.lane.b32.xlu0 %v401, 127
      %v545 = vpop.permute.xlu0 %544
      %vm546 = vcmp.lt.s32.totalorder %v413, 127
      %v547 = vsel %vm546, %v543, %v545
      %v548 = vsel %vm546, %v541, %v543
      %v549 = vsel %vm546, %v539, %v541
      %v550 = vsel %vm546, %v545, %v539
      %v551 = vlaneseq
      %v552 = vshrl.u32 %v551, 7
      %v553 = vsub.s32 4, %v552
      %v554 = vrot.slane %v390, %v553
      %v555 = vlaneseq
      %v556 = vshrl.u32 %v555, 7
      %v557 = vsub.s32 4, %v556
      %v558 = vrot.slane %v391, %v557
      %v559 = vlaneseq
      %v560 = vshrl.u32 %v559, 7
      %v561 = vsub.s32 4, %v560
      %v562 = vrot.slane %v392, %v561
      %v563 = vlaneseq
      %v564 = vshrl.u32 %v563, 7
      %v565 = vsub.s32 4, %v564
      %v566 = vrot.slane %v393, %v565
      %v567 = vmul.f32 %v549, %v554
      %v568 = vmul.f32 %v548, %v558
      %v569 = vmul.f32 %v547, %v562
      %v570 = vmul.f32 %v550, %v566
      %571 = vrot.lane.b32.xlu0 %v398, 113
      %v572 = vpop.permute.xlu0 %571
      %573 = vrot.lane.b32.xlu0 %v399, 113
      %v574 = vpop.permute.xlu0 %573
      %575 = vrot.lane.b32.xlu0 %v400, 113
      %v576 = vpop.permute.xlu0 %575
      %577 = vrot.lane.b32.xlu0 %v401, 113
      %v578 = vpop.permute.xlu0 %577
      %vm579 = vcmp.lt.s32.totalorder %v413, 113
      %v580 = vsel %vm579, %v576, %v578
      %v581 = vsel %vm579, %v574, %v576
      %v582 = vsel %vm579, %v572, %v574
      %v583 = vsel %vm579, %v578, %v572
      %v584 = vlaneseq
      %v585 = vshrl.u32 %v584, 7
      %v586 = vsub.s32 5, %v585
      %v587 = vrot.slane %v390, %v586
      %v588 = vlaneseq
      %v589 = vshrl.u32 %v588, 7
      %v590 = vsub.s32 5, %v589
      %v591 = vrot.slane %v391, %v590
      %v592 = vlaneseq
      %v593 = vshrl.u32 %v592, 7
      %v594 = vsub.s32 5, %v593
      %v595 = vrot.slane %v392, %v594
      %v596 = vlaneseq
      %v597 = vshrl.u32 %v596, 7
      %v598 = vsub.s32 5, %v597
      %v599 = vrot.slane %v393, %v598
      %v600 = vmul.f32 %v582, %v587
      %v601 = vmul.f32 %v581, %v591
      %v602 = vmul.f32 %v580, %v595
      %v603 = vmul.f32 %v583, %v599
      %604 = vrot.lane.b32.xlu0 %v398, 112
      %v605 = vpop.permute.xlu0 %604
      %606 = vrot.lane.b32.xlu0 %v399, 112
      %v607 = vpop.permute.xlu0 %606
      %608 = vrot.lane.b32.xlu0 %v400, 112
      %v609 = vpop.permute.xlu0 %608
      %610 = vrot.lane.b32.xlu0 %v401, 112
      %v611 = vpop.permute.xlu0 %610
      %vm612 = vcmp.lt.s32.totalorder %v413, 112
      %v613 = vsel %vm612, %v609, %v611
      %v614 = vsel %vm612, %v607, %v609
      %v615 = vsel %vm612, %v605, %v607
      %v616 = vsel %vm612, %v611, %v605
      %v617 = vlaneseq
      %v618 = vshrl.u32 %v617, 7
      %v619 = vsub.s32 6, %v618
      %v620 = vrot.slane %v390, %v619
      %v621 = vlaneseq
      %v622 = vshrl.u32 %v621, 7
      %v623 = vsub.s32 6, %v622
      %v624 = vrot.slane %v391, %v623
      %v625 = vlaneseq
      %v626 = vshrl.u32 %v625, 7
      %v627 = vsub.s32 6, %v626
      %v628 = vrot.slane %v392, %v627
      %v629 = vlaneseq
      %v630 = vshrl.u32 %v629, 7
      %v631 = vsub.s32 6, %v630
      %v632 = vrot.slane %v393, %v631
      %v633 = vmul.f32 %v615, %v620
      %v634 = vmul.f32 %v614, %v624
      %v635 = vmul.f32 %v613, %v628
      %v636 = vmul.f32 %v616, %v632
      %637 = vrot.lane.b32.xlu0 %v398, 111
      %v638 = vpop.permute.xlu0 %637
      %639 = vrot.lane.b32.xlu0 %v399, 111
      %v640 = vpop.permute.xlu0 %639
      %641 = vrot.lane.b32.xlu0 %v400, 111
      %v642 = vpop.permute.xlu0 %641
      %643 = vrot.lane.b32.xlu0 %v401, 111
      %v644 = vpop.permute.xlu0 %643
      %vm645 = vcmp.lt.s32.totalorder %v413, 111
      %v646 = vsel %vm645, %v642, %v644
      %v647 = vsel %vm645, %v640, %v642
      %v648 = vsel %vm645, %v638, %v640
      %v649 = vsel %vm645, %v644, %v638
      %v650 = vlaneseq
      %v651 = vshrl.u32 %v650, 7
      %v652 = vsub.s32 7, %v651
      %v653 = vrot.slane %v390, %v652
      %v654 = vlaneseq
      %v655 = vshrl.u32 %v654, 7
      %v656 = vsub.s32 7, %v655
      %v657 = vrot.slane %v391, %v656
      %v658 = vlaneseq
      %v659 = vshrl.u32 %v658, 7
      %v660 = vsub.s32 7, %v659
      %v661 = vrot.slane %v392, %v660
      %v662 = vlaneseq
      %v663 = vshrl.u32 %v662, 7
      %v664 = vsub.s32 7, %v663
      %v665 = vrot.slane %v393, %v664
      %v666 = vmul.f32 %v648, %v653
      %v667 = vmul.f32 %v647, %v657
      %v668 = vmul.f32 %v646, %v661
      %v669 = vmul.f32 %v649, %v665
      %671 = vset.pattern.permute.xlu0 0
      %672 = vperm.xlu0 %671, %v394
      %v673 = vpop.permute.xlu0 %672
      %676 = vset.pattern.permute.xlu0 0
      %677 = vperm.xlu0 %676, %v395
      %v678 = vpop.permute.xlu0 %677
      %vm680 = vcmask 588800
      %v682 = vsel %vm680, %v402, 0
      %v685 = vsel %vm680, %v403, 0
      %687 = vmatprep.subr.mxu0 0.0
      %688 = vmatpush1.msra.mxu0 0.0
      %689 = vmatprep.subr.mxu0 0.0
      %690 = vmatpush1.msra.mxu0 0.0
      %691 = vmatprep.subr.mxu0 0.0
      %692 = vmatpush1.msra.mxu0 0.0
      %693 = vmatprep.subr.mxu0 0.0
      %694 = vmatpush1.msra.mxu0 0.0
      %695 = vmatprep.subr.mxu0 0.0
      %696 = vmatpush1.msra.mxu0 0.0
      %697 = vmatprep.subr.mxu0 0.0
      %698 = vmatpush1.msra.mxu0 0.0
      %699 = vmatprep.subr.mxu0 0.0
      %700 = vmatpush1.msra.mxu0 0.0
      %701 = vmatprep.subr.mxu0 %v667
      %702 = vmatpush1.msra.mxu0 %v666
      %703 = vmatprep.subr.mxu0 %v634
      %704 = vmatpush1.msra.mxu0 %v633
      %705 = vmatprep.subr.mxu0 %v601
      %706 = vmatpush1.msra.mxu0 %v600
      %707 = vmatprep.subr.mxu0 %v568
      %708 = vmatpush1.msra.mxu0 %v567
      %709 = vmatprep.subr.mxu0 %v399
      %710 = vmatpush1.msra.mxu0 %v398
      %711 = vmatprep.subr.mxu0 %v535
      %712 = vmatpush1.msra.mxu0 %v534
      %713 = vmatprep.subr.mxu0 %v502
      %714 = vmatpush1.msra.mxu0 %v501
      %715 = vmatprep.subr.mxu0 %v469
      %716 = vmatpush1.msra.mxu0 %v468
      %717 = vmatprep.subr.mxu0 %v436
      %718 = vmatpush1.msra.mxu0 %v435
      %719 = vmatprep.subr.mxu0 0.0
      %720 = vmatpush2.msra.mxu0 0.0
      %721 = vmatprep.subr.mxu0 0.0
      %722 = vmatpush2.msra.mxu0 0.0
      %723 = vmatprep.subr.mxu0 0.0
      %724 = vmatpush2.msra.mxu0 0.0
      %725 = vmatprep.subr.mxu0 0.0
      %726 = vmatpush2.msra.mxu0 0.0
      %727 = vmatprep.subr.mxu0 0.0
      %728 = vmatpush2.msra.mxu0 0.0
      %729 = vmatprep.subr.mxu0 0.0
      %730 = vmatpush2.msra.mxu0 0.0
      %731 = vmatprep.subr.mxu0 0.0
      %732 = vmatpush2.msra.mxu0 0.0
      %733 = vmatprep.subr.mxu0 0.0
      %734 = vmatpush2.msra.mxu0 0.0
      %735 = vmatprep.subr.mxu0 0.0
      %736 = vmatpush2.msra.mxu0 0.0
      %737 = vmatprep.subr.mxu0 0.0
      %738 = vmatpush2.msra.mxu0 0.0
      %739 = vmatprep.subr.mxu0 0.0
      %740 = vmatpush2.msra.mxu0 0.0
      %741 = vmatprep.subr.mxu0 0.0
      %742 = vmatpush2.msra.mxu0 0.0
      %743 = vmatprep.subr.mxu0 0.0
      %744 = vmatpush2.msra.mxu0 0.0
      %745 = vmatprep.subr.mxu0 0.0
      %746 = vmatpush2.msra.mxu0 0.0
      %747 = vmatprep.subr.mxu0 0.0
      %748 = vmatpush2.msra.mxu0 0.0
      %749 = vmatprep.subr.mxu0 0.0
      %750 = vmatpush2.msra.mxu0 0.0
      %751 = vmatprep.mubr.f32.mxu0 0.0
      %752 = vmatmul.mubr.f32.gmra.mxu0 %v682
      %v753 = vpop.f32.mrf.mxu0
      %v754 = vadd.f32 %v673, %v753
      %v755 = vpop.f32.mrf.mxu0
      %v756 = vadd.f32 %v673, %v755
      %757 = vmatprep.mubr.f32.mxu0 0.0
      %758 = vmatmul.mubr.f32.gmra.mxu0 %v685
      %v759 = vpop.f32.mrf.mxu0
      %v760 = vadd.f32 %v678, %v759
      %v761 = vpop.f32.mrf.mxu0
      %v762 = vadd.f32 %v678, %v761
      %763 = vdwg.mxu0
      %764 = vmatprep.subr.mxu0 0.0
      %765 = vmatpush1.msra.mxu0 0.0
      %766 = vmatprep.subr.mxu0 0.0
      %767 = vmatpush1.msra.mxu0 0.0
      %768 = vmatprep.subr.mxu0 0.0
      %769 = vmatpush1.msra.mxu0 0.0
      %770 = vmatprep.subr.mxu0 0.0
      %771 = vmatpush1.msra.mxu0 0.0
      %772 = vmatprep.subr.mxu0 0.0
      %773 = vmatpush1.msra.mxu0 0.0
      %774 = vmatprep.subr.mxu0 0.0
      %775 = vmatpush1.msra.mxu0 0.0
      %776 = vmatprep.subr.mxu0 0.0
      %777 = vmatpush1.msra.mxu0 0.0
      %778 = vmatprep.subr.mxu0 %v669
      %779 = vmatpush1.msra.mxu0 %v668
      %780 = vmatprep.subr.mxu0 %v636
      %781 = vmatpush1.msra.mxu0 %v635
      %782 = vmatprep.subr.mxu0 %v603
      %783 = vmatpush1.msra.mxu0 %v602
      %784 = vmatprep.subr.mxu0 %v570
      %785 = vmatpush1.msra.mxu0 %v569
      %786 = vmatprep.subr.mxu0 %v401
      %787 = vmatpush1.msra.mxu0 %v400
      %788 = vmatprep.subr.mxu0 %v537
      %789 = vmatpush1.msra.mxu0 %v536
      %790 = vmatprep.subr.mxu0 %v504
      %791 = vmatpush1.msra.mxu0 %v503
      %792 = vmatprep.subr.mxu0 %v471
      %793 = vmatpush1.msra.mxu0 %v470
      %794 = vmatprep.subr.mxu0 %v438
      %795 = vmatpush1.msra.mxu0 %v437
      %796 = vmatprep.subr.mxu0 0.0
      %797 = vmatpush2.msra.mxu0 0.0
      %798 = vmatprep.subr.mxu0 0.0
      %799 = vmatpush2.msra.mxu0 0.0
      %800 = vmatprep.subr.mxu0 0.0
      %801 = vmatpush2.msra.mxu0 0.0
      %802 = vmatprep.subr.mxu0 0.0
      %803 = vmatpush2.msra.mxu0 0.0
      %804 = vmatprep.subr.mxu0 0.0
      %805 = vmatpush2.msra.mxu0 0.0
      %806 = vmatprep.subr.mxu0 0.0
      %807 = vmatpush2.msra.mxu0 0.0
      %808 = vmatprep.subr.mxu0 0.0
      %809 = vmatpush2.msra.mxu0 0.0
      %810 = vmatprep.subr.mxu0 0.0
      %811 = vmatpush2.msra.mxu0 0.0
      %812 = vmatprep.subr.mxu0 0.0
      %813 = vmatpush2.msra.mxu0 0.0
      %814 = vmatprep.subr.mxu0 0.0
      %815 = vmatpush2.msra.mxu0 0.0
      %816 = vmatprep.subr.mxu0 0.0
      %817 = vmatpush2.msra.mxu0 0.0
      %818 = vmatprep.subr.mxu0 0.0
      %819 = vmatpush2.msra.mxu0 0.0
      %820 = vmatprep.subr.mxu0 0.0
      %821 = vmatpush2.msra.mxu0 0.0
      %822 = vmatprep.subr.mxu0 0.0
      %823 = vmatpush2.msra.mxu0 0.0
      %824 = vmatprep.subr.mxu0 0.0
      %825 = vmatpush2.msra.mxu0 0.0
      %826 = vmatprep.subr.mxu0 0.0
      %827 = vmatpush2.msra.mxu0 0.0
      %828 = vmatprep.mubr.f32.mxu0 0.0
      %829 = vmatmul.mubr.f32.gmra.mxu0 %v682
      %v830 = vpop.f32.mrf.mxu0
      %v831 = vadd.f32 %v673, %v830
      %v832 = vpop.f32.mrf.mxu0
      %v833 = vadd.f32 %v673, %v832
      %834 = vmatprep.mubr.f32.mxu0 0.0
      %835 = vmatmul.mubr.f32.gmra.mxu0 %v685
      %v836 = vpop.f32.mrf.mxu0
      %v837 = vadd.f32 %v678, %v836
      %v838 = vpop.f32.mrf.mxu0
      %v839 = vadd.f32 %v678, %v838
      %840 = vdwg.mxu0
      %v841 = vadd.f32 %v754, %v760
      %v842 = vrot.slane %v841, 4
      %v843 = vadd.f32 %v841, %v842
      %v844 = vrot.slane %v843, 2
      %v845 = vadd.f32 %v843, %v844
      %v846 = vrot.slane %v845, 1
      %v847 = vadd.f32 %v845, %v846
      %v848 = vadd.f32 %v756, %v762
      %v849 = vrot.slane %v848, 4
      %v850 = vadd.f32 %v848, %v849
      %v851 = vrot.slane %v850, 2
      %v852 = vadd.f32 %v850, %v851
      %v853 = vrot.slane %v852, 1
      %v854 = vadd.f32 %v852, %v853
      %v855 = vadd.f32 %v831, %v837
      %v856 = vrot.slane %v855, 4
      %v857 = vadd.f32 %v855, %v856
      %v858 = vrot.slane %v857, 2
      %v859 = vadd.f32 %v857, %v858
      %v860 = vrot.slane %v859, 1
      %v861 = vadd.f32 %v859, %v860
      %v862 = vadd.f32 %v833, %v839
      %v863 = vrot.slane %v862, 4
      %v864 = vadd.f32 %v862, %v863
      %v865 = vrot.slane %v864, 2
      %v866 = vadd.f32 %v864, %v865
      %v867 = vrot.slane %v866, 1
      %v868 = vadd.f32 %v866, %v867
      %v869 = vrcp.pop 16.0
      %v870 = vmul.f32 %v847, %v869
      %v871 = vmul.f32 %v854, %v869
      %v872 = vmul.f32 %v861, %v869
      %v873 = vmul.f32 %v868, %v869
      %v874 = vsub.f32 %v754, %v870
      %v875 = vsub.f32 %v756, %v871
      %v876 = vsub.f32 %v831, %v872
      %v877 = vsub.f32 %v833, %v873
      %v878 = vsub.f32 %v760, %v870
      %v879 = vsub.f32 %v762, %v871
      %v880 = vsub.f32 %v837, %v872
      %v881 = vsub.f32 %v839, %v873
      %v882 = vmul.f32 %v874, %v874
      %v883 = vmul.f32 %v875, %v875
      %v884 = vmul.f32 %v876, %v876
      %v885 = vmul.f32 %v877, %v877
      %v886 = vmul.f32 %v878, %v878
      %v887 = vmul.f32 %v879, %v879
      %v888 = vmul.f32 %v880, %v880
      %v889 = vmul.f32 %v881, %v881
      %v890 = vadd.f32 %v882, %v886
      %v891 = vrot.slane %v890, 4
      %v892 = vadd.f32 %v890, %v891
      %v893 = vrot.slane %v892, 2
      %v894 = vadd.f32 %v892, %v893
      %v895 = vrot.slane %v894, 1
      %v896 = vadd.f32 %v894, %v895
      %v897 = vadd.f32 %v883, %v887
      %v898 = vrot.slane %v897, 4
      %v899 = vadd.f32 %v897, %v898
      %v900 = vrot.slane %v899, 2
      %v901 = vadd.f32 %v899, %v900
      %v902 = vrot.slane %v901, 1
      %v903 = vadd.f32 %v901, %v902
      %v904 = vadd.f32 %v884, %v888
      %v905 = vrot.slane %v904, 4
      %v906 = vadd.f32 %v904, %v905
      %v907 = vrot.slane %v906, 2
      %v908 = vadd.f32 %v906, %v907
      %v909 = vrot.slane %v908, 1
      %v910 = vadd.f32 %v908, %v909
      %v911 = vadd.f32 %v885, %v889
      %v912 = vrot.slane %v911, 4
      %v913 = vadd.f32 %v911, %v912
      %v914 = vrot.slane %v913, 2
      %v915 = vadd.f32 %v913, %v914
      %v916 = vrot.slane %v915, 1
      %v917 = vadd.f32 %v915, %v916
      %v918 = vmul.f32 %v896, %v869
      %v919 = vmul.f32 %v903, %v869
      %v920 = vmul.f32 %v910, %v869
      %v921 = vmul.f32 %v917, %v869
      %v922 = vadd.f32 %v918, 1e-06
      %v923 = vadd.f32 %v919, 1e-06
      %v924 = vadd.f32 %v920, 1e-06
      %v925 = vadd.f32 %v921, 1e-06
      %v926 = vrsqrt.pop %v922
      %v927 = vrsqrt.pop %v923
      %v928 = vrsqrt.pop %v924
      %v929 = vrsqrt.pop %v925
      %v930 = vmul.f32 %v874, %v926
      %v931 = vmul.f32 %v875, %v927
      %v932 = vmul.f32 %v876, %v928
      %v933 = vmul.f32 %v877, %v929
      %v934 = vmul.f32 %v878, %v926
      %v935 = vmul.f32 %v879, %v927
      %v936 = vmul.f32 %v880, %v928
      %v937 = vmul.f32 %v881, %v929
      %938 = vset.pattern.permute.xlu0 1
      %939 = vperm.xlu0 %938, %v394
      %v940 = vpop.permute.xlu0 %939
      %942 = vset.pattern.permute.xlu0 1
      %943 = vperm.xlu0 %942, %v395
      %v944 = vpop.permute.xlu0 %943
      %v946 = vmul.f32 %v930, %v940
      %v947 = vmul.f32 %v931, %v940
      %v948 = vmul.f32 %v932, %v940
      %v949 = vmul.f32 %v933, %v940
      %v950 = vmul.f32 %v934, %v944
      %v951 = vmul.f32 %v935, %v944
      %v952 = vmul.f32 %v936, %v944
      %v953 = vmul.f32 %v937, %v944
      %954 = vset.pattern.permute.xlu0 2
      %955 = vperm.xlu0 %954, %v394
      %v956 = vpop.permute.xlu0 %955
      %958 = vset.pattern.permute.xlu0 2
      %959 = vperm.xlu0 %958, %v395
      %v960 = vpop.permute.xlu0 %959
      %v962 = vadd.f32 %v946, %v956
      %v963 = vadd.f32 %v947, %v956
      %v964 = vadd.f32 %v948, %v956
      %v965 = vadd.f32 %v949, %v956
      %v966 = vadd.f32 %v950, %v960
      %v967 = vadd.f32 %v951, %v960
      %v968 = vadd.f32 %v952, %v960
      %v969 = vadd.f32 %v953, %v960
      %v970 = vld [vmem:[%s5] sm:$0xff]
      %v971 = vld [vmem:[%s5 + $0x8] sm:$0xff]
      %v972 = vld [vmem:[%s5 + $0x10] sm:$0xff]
      %v973 = vld [vmem:[%s5 + $0x18] sm:$0xff]
      %974 = vset.pattern.permute.xlu0 3
      %975 = vperm.xlu0 %974, %v394
      %v976 = vpop.permute.xlu0 %975
      %978 = vset.pattern.permute.xlu0 3
      %979 = vperm.xlu0 %978, %v395
      %v980 = vpop.permute.xlu0 %979
      %983 = vset.pattern.permute.xlu0 3
      %984 = vperm.xlu0 %983, %v396
      %v985 = vpop.permute.xlu0 %984
      %988 = vset.pattern.permute.xlu0 3
      %989 = vperm.xlu0 %988, %v397
      %v990 = vpop.permute.xlu0 %989
      %vm992 = vcmask 130048
      %v994 = vsel %vm992, %v970, 0
      %v997 = vsel %vm992, %v971, 0
      %v1000 = vsel %vm992, %v972, 0
      %v1003 = vsel %vm992, %v973, 0
      %1005 = vmatprep.subr.mxu0 0.0
      %1006 = vmatpush1.msra.mxu0 0.0
      %1007 = vmatprep.subr.mxu0 0.0
      %1008 = vmatpush1.msra.mxu0 0.0
      %1009 = vmatprep.subr.mxu0 0.0
      %1010 = vmatpush1.msra.mxu0 0.0
      %1011 = vmatprep.subr.mxu0 0.0
      %1012 = vmatpush1.msra.mxu0 0.0
      %1013 = vmatprep.subr.mxu0 0.0
      %1014 = vmatpush1.msra.mxu0 0.0
      %1015 = vmatprep.subr.mxu0 0.0
      %1016 = vmatpush1.msra.mxu0 0.0
      %1017 = vmatprep.subr.mxu0 0.0
      %1018 = vmatpush1.msra.mxu0 0.0
      %1019 = vmatprep.subr.mxu0 0.0
      %1020 = vmatpush1.msra.mxu0 0.0
      %1021 = vmatprep.subr.mxu0 0.0
      %1022 = vmatpush1.msra.mxu0 0.0
      %1023 = vmatprep.subr.mxu0 0.0
      %1024 = vmatpush1.msra.mxu0 0.0
      %1025 = vmatprep.subr.mxu0 0.0
      %1026 = vmatpush1.msra.mxu0 0.0
      %1027 = vmatprep.subr.mxu0 0.0
      %1028 = vmatpush1.msra.mxu0 0.0
      %1029 = vmatprep.subr.mxu0 0.0
      %1030 = vmatpush1.msra.mxu0 0.0
      %1031 = vmatprep.subr.mxu0 0.0
      %1032 = vmatpush1.msra.mxu0 0.0
      %1033 = vmatprep.subr.mxu0 %v967
      %1034 = vmatpush1.msra.mxu0 %v966
      %1035 = vmatprep.subr.mxu0 %v963
      %1036 = vmatpush1.msra.mxu0 %v962
      %1037 = vmatprep.subr.mxu0 0.0
      %1038 = vmatpush2.msra.mxu0 0.0
      %1039 = vmatprep.subr.mxu0 0.0
      %1040 = vmatpush2.msra.mxu0 0.0
      %1041 = vmatprep.subr.mxu0 0.0
      %1042 = vmatpush2.msra.mxu0 0.0
      %1043 = vmatprep.subr.mxu0 0.0
      %1044 = vmatpush2.msra.mxu0 0.0
      %1045 = vmatprep.subr.mxu0 0.0
      %1046 = vmatpush2.msra.mxu0 0.0
      %1047 = vmatprep.subr.mxu0 0.0
      %1048 = vmatpush2.msra.mxu0 0.0
      %1049 = vmatprep.subr.mxu0 0.0
      %1050 = vmatpush2.msra.mxu0 0.0
      %1051 = vmatprep.subr.mxu0 0.0
      %1052 = vmatpush2.msra.mxu0 0.0
      %1053 = vmatprep.subr.mxu0 0.0
      %1054 = vmatpush2.msra.mxu0 0.0
      %1055 = vmatprep.subr.mxu0 0.0
      %1056 = vmatpush2.msra.mxu0 0.0
      %1057 = vmatprep.subr.mxu0 0.0
      %1058 = vmatpush2.msra.mxu0 0.0
      %1059 = vmatprep.subr.mxu0 0.0
      %1060 = vmatpush2.msra.mxu0 0.0
      %1061 = vmatprep.subr.mxu0 0.0
      %1062 = vmatpush2.msra.mxu0 0.0
      %1063 = vmatprep.subr.mxu0 0.0
      %1064 = vmatpush2.msra.mxu0 0.0
      %1065 = vmatprep.subr.mxu0 0.0
      %1066 = vmatpush2.msra.mxu0 0.0
      %1067 = vmatprep.subr.mxu0 0.0
      %1068 = vmatpush2.msra.mxu0 0.0
      %1069 = vmatprep.mubr.f32.mxu0 0.0
      %1070 = vmatmul.mubr.f32.gmra.mxu0 %v994
      %v1071 = vpop.f32.mrf.mxu0
      %v1072 = vadd.f32 %v976, %v1071
      %v1073 = vpop.f32.mrf.mxu0
      %v1074 = vadd.f32 %v976, %v1073
      %1075 = vmatprep.mubr.f32.mxu0 0.0
      %1076 = vmatmul.mubr.f32.gmra.mxu0 %v997
      %v1077 = vpop.f32.mrf.mxu0
      %v1078 = vadd.f32 %v980, %v1077
      %v1079 = vpop.f32.mrf.mxu0
      %v1080 = vadd.f32 %v980, %v1079
      %1081 = vmatprep.mubr.f32.mxu0 0.0
      %1082 = vmatmul.mubr.f32.gmra.mxu0 %v1000
      %v1083 = vpop.f32.mrf.mxu0
      %v1084 = vadd.f32 %v985, %v1083
      %v1085 = vpop.f32.mrf.mxu0
      %v1086 = vadd.f32 %v985, %v1085
      %1087 = vmatprep.mubr.f32.mxu0 0.0
      %1088 = vmatmul.mubr.f32.gmra.mxu0 %v1003
      %v1089 = vpop.f32.mrf.mxu0
      %v1090 = vadd.f32 %v990, %v1089
      %v1091 = vpop.f32.mrf.mxu0
      %v1092 = vadd.f32 %v990, %v1091
      %1093 = vdwg.mxu0
      %1094 = vmatprep.subr.mxu0 0.0
      %1095 = vmatpush1.msra.mxu0 0.0
      %1096 = vmatprep.subr.mxu0 0.0
      %1097 = vmatpush1.msra.mxu0 0.0
      %1098 = vmatprep.subr.mxu0 0.0
      %1099 = vmatpush1.msra.mxu0 0.0
      %1100 = vmatprep.subr.mxu0 0.0
      %1101 = vmatpush1.msra.mxu0 0.0
      %1102 = vmatprep.subr.mxu0 0.0
      %1103 = vmatpush1.msra.mxu0 0.0
      %1104 = vmatprep.subr.mxu0 0.0
      %1105 = vmatpush1.msra.mxu0 0.0
      %1106 = vmatprep.subr.mxu0 0.0
      %1107 = vmatpush1.msra.mxu0 0.0
      %1108 = vmatprep.subr.mxu0 0.0
      %1109 = vmatpush1.msra.mxu0 0.0
      %1110 = vmatprep.subr.mxu0 0.0
      %1111 = vmatpush1.msra.mxu0 0.0
      %1112 = vmatprep.subr.mxu0 0.0
      %1113 = vmatpush1.msra.mxu0 0.0
      %1114 = vmatprep.subr.mxu0 0.0
      %1115 = vmatpush1.msra.mxu0 0.0
      %1116 = vmatprep.subr.mxu0 0.0
      %1117 = vmatpush1.msra.mxu0 0.0
      %1118 = vmatprep.subr.mxu0 0.0
      %1119 = vmatpush1.msra.mxu0 0.0
      %1120 = vmatprep.subr.mxu0 0.0
      %1121 = vmatpush1.msra.mxu0 0.0
      %1122 = vmatprep.subr.mxu0 %v969
      %1123 = vmatpush1.msra.mxu0 %v968
      %1124 = vmatprep.subr.mxu0 %v965
      %1125 = vmatpush1.msra.mxu0 %v964
      %1126 = vmatprep.subr.mxu0 0.0
      %1127 = vmatpush2.msra.mxu0 0.0
      %1128 = vmatprep.subr.mxu0 0.0
      %1129 = vmatpush2.msra.mxu0 0.0
      %1130 = vmatprep.subr.mxu0 0.0
      %1131 = vmatpush2.msra.mxu0 0.0
      %1132 = vmatprep.subr.mxu0 0.0
      %1133 = vmatpush2.msra.mxu0 0.0
      %1134 = vmatprep.subr.mxu0 0.0
      %1135 = vmatpush2.msra.mxu0 0.0
      %1136 = vmatprep.subr.mxu0 0.0
      %1137 = vmatpush2.msra.mxu0 0.0
      %1138 = vmatprep.subr.mxu0 0.0
      %1139 = vmatpush2.msra.mxu0 0.0
      %1140 = vmatprep.subr.mxu0 0.0
      %1141 = vmatpush2.msra.mxu0 0.0
      %1142 = vmatprep.subr.mxu0 0.0
      %1143 = vmatpush2.msra.mxu0 0.0
      %1144 = vmatprep.subr.mxu0 0.0
      %1145 = vmatpush2.msra.mxu0 0.0
      %1146 = vmatprep.subr.mxu0 0.0
      %1147 = vmatpush2.msra.mxu0 0.0
      %1148 = vmatprep.subr.mxu0 0.0
      %1149 = vmatpush2.msra.mxu0 0.0
      %1150 = vmatprep.subr.mxu0 0.0
      %1151 = vmatpush2.msra.mxu0 0.0
      %1152 = vmatprep.subr.mxu0 0.0
      %1153 = vmatpush2.msra.mxu0 0.0
      %1154 = vmatprep.subr.mxu0 0.0
      %1155 = vmatpush2.msra.mxu0 0.0
      %1156 = vmatprep.subr.mxu0 0.0
      %1157 = vmatpush2.msra.mxu0 0.0
      %1158 = vmatprep.mubr.f32.mxu0 0.0
      %1159 = vmatmul.mubr.f32.gmra.mxu0 %v994
      %v1160 = vpop.f32.mrf.mxu0
      %v1161 = vadd.f32 %v976, %v1160
      %v1162 = vpop.f32.mrf.mxu0
      %v1163 = vadd.f32 %v976, %v1162
      %1164 = vmatprep.mubr.f32.mxu0 0.0
      %1165 = vmatmul.mubr.f32.gmra.mxu0 %v997
      %v1166 = vpop.f32.mrf.mxu0
      %v1167 = vadd.f32 %v980, %v1166
      %v1168 = vpop.f32.mrf.mxu0
      %v1169 = vadd.f32 %v980, %v1168
      %1170 = vmatprep.mubr.f32.mxu0 0.0
      %1171 = vmatmul.mubr.f32.gmra.mxu0 %v1000
      %v1172 = vpop.f32.mrf.mxu0
      %v1173 = vadd.f32 %v985, %v1172
      %v1174 = vpop.f32.mrf.mxu0
      %v1175 = vadd.f32 %v985, %v1174
      %1176 = vmatprep.mubr.f32.mxu0 0.0
      %1177 = vmatmul.mubr.f32.gmra.mxu0 %v1003
      %v1178 = vpop.f32.mrf.mxu0
      %v1179 = vadd.f32 %v990, %v1178
      %v1180 = vpop.f32.mrf.mxu0
      %v1181 = vadd.f32 %v990, %v1180
      %1182 = vdwg.mxu0
      %1183 = vset.pattern.permute.xlu0 19
      %1184 = vperm.xlu0 %1183, %v394
      %v1185 = vpop.permute.xlu0 %1184
      %1187 = vset.pattern.permute.xlu0 19
      %1188 = vperm.xlu0 %1187, %v395
      %v1189 = vpop.permute.xlu0 %1188
      %1191 = vset.pattern.permute.xlu0 19
      %1192 = vperm.xlu0 %1191, %v396
      %v1193 = vpop.permute.xlu0 %1192
      %1195 = vset.pattern.permute.xlu0 19
      %1196 = vperm.xlu0 %1195, %v397
      %v1197 = vpop.permute.xlu0 %1196
      %v1199 = vmul.f32 %v1185, %v1072
      %v1200 = vmul.f32 %v1185, %v1074
      %v1201 = vmul.f32 %v1185, %v1161
      %v1202 = vmul.f32 %v1185, %v1163
      %v1203 = vmul.f32 %v1189, %v1078
      %v1204 = vmul.f32 %v1189, %v1080
      %v1205 = vmul.f32 %v1189, %v1167
      %v1206 = vmul.f32 %v1189, %v1169
      %v1207 = vmul.f32 %v1193, %v1084
      %v1208 = vmul.f32 %v1193, %v1086
      %v1209 = vmul.f32 %v1193, %v1173
      %v1210 = vmul.f32 %v1193, %v1175
      %v1211 = vmul.f32 %v1197, %v1090
      %v1212 = vmul.f32 %v1197, %v1092
      %v1213 = vmul.f32 %v1197, %v1179
      %v1214 = vmul.f32 %v1197, %v1181
      %1215 = vrot.lane.b32.xlu0 %v1072, 17
      %v1216 = vpop.permute.xlu0 %1215
      %1217 = vrot.lane.b32.xlu0 %v1078, 17
      %v1218 = vpop.permute.xlu0 %1217
      %1219 = vrot.lane.b32.xlu0 %v1084, 17
      %v1220 = vpop.permute.xlu0 %1219
      %1221 = vrot.lane.b32.xlu0 %v1090, 17
      %v1222 = vpop.permute.xlu0 %1221
      %1223 = vrot.lane.b32.xlu0 %v1074, 17
      %v1224 = vpop.permute.xlu0 %1223
      %1225 = vrot.lane.b32.xlu0 %v1080, 17
      %v1226 = vpop.permute.xlu0 %1225
      %1227 = vrot.lane.b32.xlu0 %v1086, 17
      %v1228 = vpop.permute.xlu0 %1227
      %1229 = vrot.lane.b32.xlu0 %v1092, 17
      %v1230 = vpop.permute.xlu0 %1229
      %1231 = vrot.lane.b32.xlu0 %v1161, 17
      %v1232 = vpop.permute.xlu0 %1231
      %1233 = vrot.lane.b32.xlu0 %v1167, 17
      %v1234 = vpop.permute.xlu0 %1233
      %1235 = vrot.lane.b32.xlu0 %v1173, 17
      %v1236 = vpop.permute.xlu0 %1235
      %1237 = vrot.lane.b32.xlu0 %v1179, 17
      %v1238 = vpop.permute.xlu0 %1237
      %1239 = vrot.lane.b32.xlu0 %v1163, 17
      %v1240 = vpop.permute.xlu0 %1239
      %1241 = vrot.lane.b32.xlu0 %v1169, 17
      %v1242 = vpop.permute.xlu0 %1241
      %1243 = vrot.lane.b32.xlu0 %v1175, 17
      %v1244 = vpop.permute.xlu0 %1243
      %1245 = vrot.lane.b32.xlu0 %v1181, 17
      %v1246 = vpop.permute.xlu0 %1245
      %v1247 = vsel %vm414, %v1232, %v1240
      %v1248 = vsel %vm414, %v1234, %v1242
      %v1249 = vsel %vm414, %v1236, %v1244
      %v1250 = vsel %vm414, %v1238, %v1246
      %v1251 = vsel %vm414, %v1224, %v1232
      %v1252 = vsel %vm414, %v1226, %v1234
      %v1253 = vsel %vm414, %v1228, %v1236
      %v1254 = vsel %vm414, %v1230, %v1238
      %v1255 = vsel %vm414, %v1216, %v1224
      %v1256 = vsel %vm414, %v1218, %v1226
      %v1257 = vsel %vm414, %v1220, %v1228
      %v1258 = vsel %vm414, %v1222, %v1230
      %v1259 = vsel %vm414, %v1240, %v1216
      %v1260 = vsel %vm414, %v1242, %v1218
      %v1261 = vsel %vm414, %v1244, %v1220
      %v1262 = vsel %vm414, %v1246, %v1222
      %v1263 = vmul.f32 %v1259, %v422
      %v1264 = vmul.f32 %v1255, %v426
      %v1265 = vmul.f32 %v1251, %v430
      %v1266 = vmul.f32 %v1247, %v434
      %v1267 = vmul.f32 %v1260, %v422
      %v1268 = vmul.f32 %v1256, %v426
      %v1269 = vmul.f32 %v1252, %v430
      %v1270 = vmul.f32 %v1248, %v434
      %v1271 = vmul.f32 %v1261, %v422
      %v1272 = vmul.f32 %v1257, %v426
      %v1273 = vmul.f32 %v1253, %v430
      %v1274 = vmul.f32 %v1249, %v434
      %v1275 = vmul.f32 %v1262, %v422
      %v1276 = vmul.f32 %v1258, %v426
      %v1277 = vmul.f32 %v1254, %v430
      %v1278 = vmul.f32 %v1250, %v434
      %1279 = vset.pattern.permute.xlu0 15
      %1280 = vperm.xlu0 %1279, %v394
      %v1281 = vpop.permute.xlu0 %1280
      %1283 = vset.pattern.permute.xlu0 15
      %1284 = vperm.xlu0 %1283, %v395
      %v1285 = vpop.permute.xlu0 %1284
      %1287 = vset.pattern.permute.xlu0 15
      %1288 = vperm.xlu0 %1287, %v396
      %v1289 = vpop.permute.xlu0 %1288
      %1291 = vset.pattern.permute.xlu0 15
      %1292 = vperm.xlu0 %1291, %v397
      %v1293 = vpop.permute.xlu0 %1292
      %v1295 = vmul.f32 %v1281, %v1263
      %v1296 = vmul.f32 %v1281, %v1264
      %v1297 = vmul.f32 %v1281, %v1265
      %v1298 = vmul.f32 %v1281, %v1266
      %v1299 = vmul.f32 %v1285, %v1267
      %v1300 = vmul.f32 %v1285, %v1268
      %v1301 = vmul.f32 %v1285, %v1269
      %v1302 = vmul.f32 %v1285, %v1270
      %v1303 = vmul.f32 %v1289, %v1271
      %v1304 = vmul.f32 %v1289, %v1272
      %v1305 = vmul.f32 %v1289, %v1273
      %v1306 = vmul.f32 %v1289, %v1274
      %v1307 = vmul.f32 %v1293, %v1275
      %v1308 = vmul.f32 %v1293, %v1276
      %v1309 = vmul.f32 %v1293, %v1277
      %v1310 = vmul.f32 %v1293, %v1278
      %v1311 = vadd.f32 %v1199, %v1295
      %v1312 = vadd.f32 %v1200, %v1296
      %v1313 = vadd.f32 %v1201, %v1297
      %v1314 = vadd.f32 %v1202, %v1298
      %v1315 = vadd.f32 %v1203, %v1299
      %v1316 = vadd.f32 %v1204, %v1300
      %v1317 = vadd.f32 %v1205, %v1301
      %v1318 = vadd.f32 %v1206, %v1302
      %v1319 = vadd.f32 %v1207, %v1303
      %v1320 = vadd.f32 %v1208, %v1304
      %v1321 = vadd.f32 %v1209, %v1305
      %v1322 = vadd.f32 %v1210, %v1306
      %v1323 = vadd.f32 %v1211, %v1307
      %v1324 = vadd.f32 %v1212, %v1308
      %v1325 = vadd.f32 %v1213, %v1309
      %v1326 = vadd.f32 %v1214, %v1310
      %1327 = vrot.lane.b32.xlu0 %v1072, 16
      %v1328 = vpop.permute.xlu0 %1327
      %1329 = vrot.lane.b32.xlu0 %v1078, 16
      %v1330 = vpop.permute.xlu0 %1329
      %1331 = vrot.lane.b32.xlu0 %v1084, 16
      %v1332 = vpop.permute.xlu0 %1331
      %1333 = vrot.lane.b32.xlu0 %v1090, 16
      %v1334 = vpop.permute.xlu0 %1333
      %1335 = vrot.lane.b32.xlu0 %v1074, 16
      %v1336 = vpop.permute.xlu0 %1335
      %1337 = vrot.lane.b32.xlu0 %v1080, 16
      %v1338 = vpop.permute.xlu0 %1337
      %1339 = vrot.lane.b32.xlu0 %v1086, 16
      %v1340 = vpop.permute.xlu0 %1339
      %1341 = vrot.lane.b32.xlu0 %v1092, 16
      %v1342 = vpop.permute.xlu0 %1341
      %1343 = vrot.lane.b32.xlu0 %v1161, 16
      %v1344 = vpop.permute.xlu0 %1343
      %1345 = vrot.lane.b32.xlu0 %v1167, 16
      %v1346 = vpop.permute.xlu0 %1345
      %1347 = vrot.lane.b32.xlu0 %v1173, 16
      %v1348 = vpop.permute.xlu0 %1347
      %1349 = vrot.lane.b32.xlu0 %v1179, 16
      %v1350 = vpop.permute.xlu0 %1349
      %1351 = vrot.lane.b32.xlu0 %v1163, 16
      %v1352 = vpop.permute.xlu0 %1351
      %1353 = vrot.lane.b32.xlu0 %v1169, 16
      %v1354 = vpop.permute.xlu0 %1353
      %1355 = vrot.lane.b32.xlu0 %v1175, 16
      %v1356 = vpop.permute.xlu0 %1355
      %1357 = vrot.lane.b32.xlu0 %v1181, 16
      %v1358 = vpop.permute.xlu0 %1357
      %v1359 = vsel %vm447, %v1344, %v1352
      %v1360 = vsel %vm447, %v1346, %v1354
      %v1361 = vsel %vm447, %v1348, %v1356
      %v1362 = vsel %vm447, %v1350, %v1358
      %v1363 = vsel %vm447, %v1336, %v1344
      %v1364 = vsel %vm447, %v1338, %v1346
      %v1365 = vsel %vm447, %v1340, %v1348
      %v1366 = vsel %vm447, %v1342, %v1350
      %v1367 = vsel %vm447, %v1328, %v1336
      %v1368 = vsel %vm447, %v1330, %v1338
      %v1369 = vsel %vm447, %v1332, %v1340
      %v1370 = vsel %vm447, %v1334, %v1342
      %v1371 = vsel %vm447, %v1352, %v1328
      %v1372 = vsel %vm447, %v1354, %v1330
      %v1373 = vsel %vm447, %v1356, %v1332
      %v1374 = vsel %vm447, %v1358, %v1334
      %v1375 = vmul.f32 %v1371, %v455
      %v1376 = vmul.f32 %v1367, %v459
      %v1377 = vmul.f32 %v1363, %v463
      %v1378 = vmul.f32 %v1359, %v467
      %v1379 = vmul.f32 %v1372, %v455
      %v1380 = vmul.f32 %v1368, %v459
      %v1381 = vmul.f32 %v1364, %v463
      %v1382 = vmul.f32 %v1360, %v467
      %v1383 = vmul.f32 %v1373, %v455
      %v1384 = vmul.f32 %v1369, %v459
      %v1385 = vmul.f32 %v1365, %v463
      %v1386 = vmul.f32 %v1361, %v467
      %v1387 = vmul.f32 %v1374, %v455
      %v1388 = vmul.f32 %v1370, %v459
      %v1389 = vmul.f32 %v1366, %v463
      %v1390 = vmul.f32 %v1362, %v467
      %1391 = vset.pattern.permute.xlu0 16
      %1392 = vperm.xlu0 %1391, %v394
      %v1393 = vpop.permute.xlu0 %1392
      %1395 = vset.pattern.permute.xlu0 16
      %1396 = vperm.xlu0 %1395, %v395
      %v1397 = vpop.permute.xlu0 %1396
      %1399 = vset.pattern.permute.xlu0 16
      %1400 = vperm.xlu0 %1399, %v396
      %v1401 = vpop.permute.xlu0 %1400
      %1403 = vset.pattern.permute.xlu0 16
      %1404 = vperm.xlu0 %1403, %v397
      %v1405 = vpop.permute.xlu0 %1404
      %v1407 = vmul.f32 %v1393, %v1375
      %v1408 = vmul.f32 %v1393, %v1376
      %v1409 = vmul.f32 %v1393, %v1377
      %v1410 = vmul.f32 %v1393, %v1378
      %v1411 = vmul.f32 %v1397, %v1379
      %v1412 = vmul.f32 %v1397, %v1380
      %v1413 = vmul.f32 %v1397, %v1381
      %v1414 = vmul.f32 %v1397, %v1382
      %v1415 = vmul.f32 %v1401, %v1383
      %v1416 = vmul.f32 %v1401, %v1384
      %v1417 = vmul.f32 %v1401, %v1385
      %v1418 = vmul.f32 %v1401, %v1386
      %v1419 = vmul.f32 %v1405, %v1387
      %v1420 = vmul.f32 %v1405, %v1388
      %v1421 = vmul.f32 %v1405, %v1389
      %v1422 = vmul.f32 %v1405, %v1390
      %v1423 = vadd.f32 %v1311, %v1407
      %v1424 = vadd.f32 %v1312, %v1408
      %v1425 = vadd.f32 %v1313, %v1409
      %v1426 = vadd.f32 %v1314, %v1410
      %v1427 = vadd.f32 %v1315, %v1411
      %v1428 = vadd.f32 %v1316, %v1412
      %v1429 = vadd.f32 %v1317, %v1413
      %v1430 = vadd.f32 %v1318, %v1414
      %v1431 = vadd.f32 %v1319, %v1415
      %v1432 = vadd.f32 %v1320, %v1416
      %v1433 = vadd.f32 %v1321, %v1417
      %v1434 = vadd.f32 %v1322, %v1418
      %v1435 = vadd.f32 %v1323, %v1419
      %v1436 = vadd.f32 %v1324, %v1420
      %v1437 = vadd.f32 %v1325, %v1421
      %v1438 = vadd.f32 %v1326, %v1422
      %1439 = vrot.lane.b32.xlu0 %v1072, 15
      %v1440 = vpop.permute.xlu0 %1439
      %1441 = vrot.lane.b32.xlu0 %v1078, 15
      %v1442 = vpop.permute.xlu0 %1441
      %1443 = vrot.lane.b32.xlu0 %v1084, 15
      %v1444 = vpop.permute.xlu0 %1443
      %1445 = vrot.lane.b32.xlu0 %v1090, 15
      %v1446 = vpop.permute.xlu0 %1445
      %1447 = vrot.lane.b32.xlu0 %v1074, 15
      %v1448 = vpop.permute.xlu0 %1447
      %1449 = vrot.lane.b32.xlu0 %v1080, 15
      %v1450 = vpop.permute.xlu0 %1449
      %1451 = vrot.lane.b32.xlu0 %v1086, 15
      %v1452 = vpop.permute.xlu0 %1451
      %1453 = vrot.lane.b32.xlu0 %v1092, 15
      %v1454 = vpop.permute.xlu0 %1453
      %1455 = vrot.lane.b32.xlu0 %v1161, 15
      %v1456 = vpop.permute.xlu0 %1455
      %1457 = vrot.lane.b32.xlu0 %v1167, 15
      %v1458 = vpop.permute.xlu0 %1457
      %1459 = vrot.lane.b32.xlu0 %v1173, 15
      %v1460 = vpop.permute.xlu0 %1459
      %1461 = vrot.lane.b32.xlu0 %v1179, 15
      %v1462 = vpop.permute.xlu0 %1461
      %1463 = vrot.lane.b32.xlu0 %v1163, 15
      %v1464 = vpop.permute.xlu0 %1463
      %1465 = vrot.lane.b32.xlu0 %v1169, 15
      %v1466 = vpop.permute.xlu0 %1465
      %1467 = vrot.lane.b32.xlu0 %v1175, 15
      %v1468 = vpop.permute.xlu0 %1467
      %1469 = vrot.lane.b32.xlu0 %v1181, 15
      %v1470 = vpop.permute.xlu0 %1469
      %v1471 = vsel %vm480, %v1456, %v1464
      %v1472 = vsel %vm480, %v1458, %v1466
      %v1473 = vsel %vm480, %v1460, %v1468
      %v1474 = vsel %vm480, %v1462, %v1470
      %v1475 = vsel %vm480, %v1448, %v1456
      %v1476 = vsel %vm480, %v1450, %v1458
      %v1477 = vsel %vm480, %v1452, %v1460
      %v1478 = vsel %vm480, %v1454, %v1462
      %v1479 = vsel %vm480, %v1440, %v1448
      %v1480 = vsel %vm480, %v1442, %v1450
      %v1481 = vsel %vm480, %v1444, %v1452
      %v1482 = vsel %vm480, %v1446, %v1454
      %v1483 = vsel %vm480, %v1464, %v1440
      %v1484 = vsel %vm480, %v1466, %v1442
      %v1485 = vsel %vm480, %v1468, %v1444
      %v1486 = vsel %vm480, %v1470, %v1446
      %v1487 = vmul.f32 %v1483, %v488
      %v1488 = vmul.f32 %v1479, %v492
      %v1489 = vmul.f32 %v1475, %v496
      %v1490 = vmul.f32 %v1471, %v500
      %v1491 = vmul.f32 %v1484, %v488
      %v1492 = vmul.f32 %v1480, %v492
      %v1493 = vmul.f32 %v1476, %v496
      %v1494 = vmul.f32 %v1472, %v500
      %v1495 = vmul.f32 %v1485, %v488
      %v1496 = vmul.f32 %v1481, %v492
      %v1497 = vmul.f32 %v1477, %v496
      %v1498 = vmul.f32 %v1473, %v500
      %v1499 = vmul.f32 %v1486, %v488
      %v1500 = vmul.f32 %v1482, %v492
      %v1501 = vmul.f32 %v1478, %v496
      %v1502 = vmul.f32 %v1474, %v500
      %1503 = vset.pattern.permute.xlu0 17
      %1504 = vperm.xlu0 %1503, %v394
      %v1505 = vpop.permute.xlu0 %1504
      %1507 = vset.pattern.permute.xlu0 17
      %1508 = vperm.xlu0 %1507, %v395
      %v1509 = vpop.permute.xlu0 %1508
      %1511 = vset.pattern.permute.xlu0 17
      %1512 = vperm.xlu0 %1511, %v396
      %v1513 = vpop.permute.xlu0 %1512
      %1515 = vset.pattern.permute.xlu0 17
      %1516 = vperm.xlu0 %1515, %v397
      %v1517 = vpop.permute.xlu0 %1516
      %v1519 = vmul.f32 %v1505, %v1487
      %v1520 = vmul.f32 %v1505, %v1488
      %v1521 = vmul.f32 %v1505, %v1489
      %v1522 = vmul.f32 %v1505, %v1490
      %v1523 = vmul.f32 %v1509, %v1491
      %v1524 = vmul.f32 %v1509, %v1492
      %v1525 = vmul.f32 %v1509, %v1493
      %v1526 = vmul.f32 %v1509, %v1494
      %v1527 = vmul.f32 %v1513, %v1495
      %v1528 = vmul.f32 %v1513, %v1496
      %v1529 = vmul.f32 %v1513, %v1497
      %v1530 = vmul.f32 %v1513, %v1498
      %v1531 = vmul.f32 %v1517, %v1499
      %v1532 = vmul.f32 %v1517, %v1500
      %v1533 = vmul.f32 %v1517, %v1501
      %v1534 = vmul.f32 %v1517, %v1502
      %v1535 = vadd.f32 %v1423, %v1519
      %v1536 = vadd.f32 %v1424, %v1520
      %v1537 = vadd.f32 %v1425, %v1521
      %v1538 = vadd.f32 %v1426, %v1522
      %v1539 = vadd.f32 %v1427, %v1523
      %v1540 = vadd.f32 %v1428, %v1524
      %v1541 = vadd.f32 %v1429, %v1525
      %v1542 = vadd.f32 %v1430, %v1526
      %v1543 = vadd.f32 %v1431, %v1527
      %v1544 = vadd.f32 %v1432, %v1528
      %v1545 = vadd.f32 %v1433, %v1529
      %v1546 = vadd.f32 %v1434, %v1530
      %v1547 = vadd.f32 %v1435, %v1531
      %v1548 = vadd.f32 %v1436, %v1532
      %v1549 = vadd.f32 %v1437, %v1533
      %v1550 = vadd.f32 %v1438, %v1534
      %1551 = vrot.lane.b32.xlu0 %v1072, 1
      %v1552 = vpop.permute.xlu0 %1551
      %1553 = vrot.lane.b32.xlu0 %v1078, 1
      %v1554 = vpop.permute.xlu0 %1553
      %1555 = vrot.lane.b32.xlu0 %v1084, 1
      %v1556 = vpop.permute.xlu0 %1555
      %1557 = vrot.lane.b32.xlu0 %v1090, 1
      %v1558 = vpop.permute.xlu0 %1557
      %1559 = vrot.lane.b32.xlu0 %v1074, 1
      %v1560 = vpop.permute.xlu0 %1559
      %1561 = vrot.lane.b32.xlu0 %v1080, 1
      %v1562 = vpop.permute.xlu0 %1561
      %1563 = vrot.lane.b32.xlu0 %v1086, 1
      %v1564 = vpop.permute.xlu0 %1563
      %1565 = vrot.lane.b32.xlu0 %v1092, 1
      %v1566 = vpop.permute.xlu0 %1565
      %1567 = vrot.lane.b32.xlu0 %v1161, 1
      %v1568 = vpop.permute.xlu0 %1567
      %1569 = vrot.lane.b32.xlu0 %v1167, 1
      %v1570 = vpop.permute.xlu0 %1569
      %1571 = vrot.lane.b32.xlu0 %v1173, 1
      %v1572 = vpop.permute.xlu0 %1571
      %1573 = vrot.lane.b32.xlu0 %v1179, 1
      %v1574 = vpop.permute.xlu0 %1573
      %1575 = vrot.lane.b32.xlu0 %v1163, 1
      %v1576 = vpop.permute.xlu0 %1575
      %1577 = vrot.lane.b32.xlu0 %v1169, 1
      %v1578 = vpop.permute.xlu0 %1577
      %1579 = vrot.lane.b32.xlu0 %v1175, 1
      %v1580 = vpop.permute.xlu0 %1579
      %1581 = vrot.lane.b32.xlu0 %v1181, 1
      %v1582 = vpop.permute.xlu0 %1581
      %v1583 = vsel %vm513, %v1568, %v1576
      %v1584 = vsel %vm513, %v1570, %v1578
      %v1585 = vsel %vm513, %v1572, %v1580
      %v1586 = vsel %vm513, %v1574, %v1582
      %v1587 = vsel %vm513, %v1560, %v1568
      %v1588 = vsel %vm513, %v1562, %v1570
      %v1589 = vsel %vm513, %v1564, %v1572
      %v1590 = vsel %vm513, %v1566, %v1574
      %v1591 = vsel %vm513, %v1552, %v1560
      %v1592 = vsel %vm513, %v1554, %v1562
      %v1593 = vsel %vm513, %v1556, %v1564
      %v1594 = vsel %vm513, %v1558, %v1566
      %v1595 = vsel %vm513, %v1576, %v1552
      %v1596 = vsel %vm513, %v1578, %v1554
      %v1597 = vsel %vm513, %v1580, %v1556
      %v1598 = vsel %vm513, %v1582, %v1558
      %v1599 = vmul.f32 %v1595, %v521
      %v1600 = vmul.f32 %v1591, %v525
      %v1601 = vmul.f32 %v1587, %v529
      %v1602 = vmul.f32 %v1583, %v533
      %v1603 = vmul.f32 %v1596, %v521
      %v1604 = vmul.f32 %v1592, %v525
      %v1605 = vmul.f32 %v1588, %v529
      %v1606 = vmul.f32 %v1584, %v533
      %v1607 = vmul.f32 %v1597, %v521
      %v1608 = vmul.f32 %v1593, %v525
      %v1609 = vmul.f32 %v1589, %v529
      %v1610 = vmul.f32 %v1585, %v533
      %v1611 = vmul.f32 %v1598, %v521
      %v1612 = vmul.f32 %v1594, %v525
      %v1613 = vmul.f32 %v1590, %v529
      %v1614 = vmul.f32 %v1586, %v533
      %1615 = vset.pattern.permute.xlu0 18
      %1616 = vperm.xlu0 %1615, %v394
      %v1617 = vpop.permute.xlu0 %1616
      %1619 = vset.pattern.permute.xlu0 18
      %1620 = vperm.xlu0 %1619, %v395
      %v1621 = vpop.permute.xlu0 %1620
      %1623 = vset.pattern.permute.xlu0 18
      %1624 = vperm.xlu0 %1623, %v396
      %v1625 = vpop.permute.xlu0 %1624
      %1627 = vset.pattern.permute.xlu0 18
      %1628 = vperm.xlu0 %1627, %v397
      %v1629 = vpop.permute.xlu0 %1628
      %v1631 = vmul.f32 %v1617, %v1599
      %v1632 = vmul.f32 %v1617, %v1600
      %v1633 = vmul.f32 %v1617, %v1601
      %v1634 = vmul.f32 %v1617, %v1602
      %v1635 = vmul.f32 %v1621, %v1603
      %v1636 = vmul.f32 %v1621, %v1604
      %v1637 = vmul.f32 %v1621, %v1605
      %v1638 = vmul.f32 %v1621, %v1606
      %v1639 = vmul.f32 %v1625, %v1607
      %v1640 = vmul.f32 %v1625, %v1608
      %v1641 = vmul.f32 %v1625, %v1609
      %v1642 = vmul.f32 %v1625, %v1610
      %v1643 = vmul.f32 %v1629, %v1611
      %v1644 = vmul.f32 %v1629, %v1612
      %v1645 = vmul.f32 %v1629, %v1613
      %v1646 = vmul.f32 %v1629, %v1614
      %v1647 = vadd.f32 %v1535, %v1631
      %v1648 = vadd.f32 %v1536, %v1632
      %v1649 = vadd.f32 %v1537, %v1633
      %v1650 = vadd.f32 %v1538, %v1634
      %v1651 = vadd.f32 %v1539, %v1635
      %v1652 = vadd.f32 %v1540, %v1636
      %v1653 = vadd.f32 %v1541, %v1637
      %v1654 = vadd.f32 %v1542, %v1638
      %v1655 = vadd.f32 %v1543, %v1639
      %v1656 = vadd.f32 %v1544, %v1640
      %v1657 = vadd.f32 %v1545, %v1641
      %v1658 = vadd.f32 %v1546, %v1642
      %v1659 = vadd.f32 %v1547, %v1643
      %v1660 = vadd.f32 %v1548, %v1644
      %v1661 = vadd.f32 %v1549, %v1645
      %v1662 = vadd.f32 %v1550, %v1646
      %1663 = vrot.lane.b32.xlu0 %v1072, 127
      %v1664 = vpop.permute.xlu0 %1663
      %1665 = vrot.lane.b32.xlu0 %v1078, 127
      %v1666 = vpop.permute.xlu0 %1665
      %1667 = vrot.lane.b32.xlu0 %v1084, 127
      %v1668 = vpop.permute.xlu0 %1667
      %1669 = vrot.lane.b32.xlu0 %v1090, 127
      %v1670 = vpop.permute.xlu0 %1669
      %1671 = vrot.lane.b32.xlu0 %v1074, 127
      %v1672 = vpop.permute.xlu0 %1671
      %1673 = vrot.lane.b32.xlu0 %v1080, 127
      %v1674 = vpop.permute.xlu0 %1673
      %1675 = vrot.lane.b32.xlu0 %v1086, 127
      %v1676 = vpop.permute.xlu0 %1675
      %1677 = vrot.lane.b32.xlu0 %v1092, 127
      %v1678 = vpop.permute.xlu0 %1677
      %1679 = vrot.lane.b32.xlu0 %v1161, 127
      %v1680 = vpop.permute.xlu0 %1679
      %1681 = vrot.lane.b32.xlu0 %v1167, 127
      %v1682 = vpop.permute.xlu0 %1681
      %1683 = vrot.lane.b32.xlu0 %v1173, 127
      %v1684 = vpop.permute.xlu0 %1683
      %1685 = vrot.lane.b32.xlu0 %v1179, 127
      %v1686 = vpop.permute.xlu0 %1685
      %1687 = vrot.lane.b32.xlu0 %v1163, 127
      %v1688 = vpop.permute.xlu0 %1687
      %1689 = vrot.lane.b32.xlu0 %v1169, 127
      %v1690 = vpop.permute.xlu0 %1689
      %1691 = vrot.lane.b32.xlu0 %v1175, 127
      %v1692 = vpop.permute.xlu0 %1691
      %1693 = vrot.lane.b32.xlu0 %v1181, 127
      %v1694 = vpop.permute.xlu0 %1693
      %v1695 = vsel %vm546, %v1680, %v1688
      %v1696 = vsel %vm546, %v1682, %v1690
      %v1697 = vsel %vm546, %v1684, %v1692
      %v1698 = vsel %vm546, %v1686, %v1694
      %v1699 = vsel %vm546, %v1672, %v1680
      %v1700 = vsel %vm546, %v1674, %v1682
      %v1701 = vsel %vm546, %v1676, %v1684
      %v1702 = vsel %vm546, %v1678, %v1686
      %v1703 = vsel %vm546, %v1664, %v1672
      %v1704 = vsel %vm546, %v1666, %v1674
      %v1705 = vsel %vm546, %v1668, %v1676
      %v1706 = vsel %vm546, %v1670, %v1678
      %v1707 = vsel %vm546, %v1688, %v1664
      %v1708 = vsel %vm546, %v1690, %v1666
      %v1709 = vsel %vm546, %v1692, %v1668
      %v1710 = vsel %vm546, %v1694, %v1670
      %v1711 = vmul.f32 %v1703, %v554
      %v1712 = vmul.f32 %v1699, %v558
      %v1713 = vmul.f32 %v1695, %v562
      %v1714 = vmul.f32 %v1707, %v566
      %v1715 = vmul.f32 %v1704, %v554
      %v1716 = vmul.f32 %v1700, %v558
      %v1717 = vmul.f32 %v1696, %v562
      %v1718 = vmul.f32 %v1708, %v566
      %v1719 = vmul.f32 %v1705, %v554
      %v1720 = vmul.f32 %v1701, %v558
      %v1721 = vmul.f32 %v1697, %v562
      %v1722 = vmul.f32 %v1709, %v566
      %v1723 = vmul.f32 %v1706, %v554
      %v1724 = vmul.f32 %v1702, %v558
      %v1725 = vmul.f32 %v1698, %v562
      %v1726 = vmul.f32 %v1710, %v566
      %1727 = vset.pattern.permute.xlu0 20
      %1728 = vperm.xlu0 %1727, %v394
      %v1729 = vpop.permute.xlu0 %1728
      %1731 = vset.pattern.permute.xlu0 20
      %1732 = vperm.xlu0 %1731, %v395
      %v1733 = vpop.permute.xlu0 %1732
      %1735 = vset.pattern.permute.xlu0 20
      %1736 = vperm.xlu0 %1735, %v396
      %v1737 = vpop.permute.xlu0 %1736
      %1739 = vset.pattern.permute.xlu0 20
      %1740 = vperm.xlu0 %1739, %v397
      %v1741 = vpop.permute.xlu0 %1740
      %v1743 = vmul.f32 %v1729, %v1711
      %v1744 = vmul.f32 %v1729, %v1712
      %v1745 = vmul.f32 %v1729, %v1713
      %v1746 = vmul.f32 %v1729, %v1714
      %v1747 = vmul.f32 %v1733, %v1715
      %v1748 = vmul.f32 %v1733, %v1716
      %v1749 = vmul.f32 %v1733, %v1717
      %v1750 = vmul.f32 %v1733, %v1718
      %v1751 = vmul.f32 %v1737, %v1719
      %v1752 = vmul.f32 %v1737, %v1720
      %v1753 = vmul.f32 %v1737, %v1721
      %v1754 = vmul.f32 %v1737, %v1722
      %v1755 = vmul.f32 %v1741, %v1723
      %v1756 = vmul.f32 %v1741, %v1724
      %v1757 = vmul.f32 %v1741, %v1725
      %v1758 = vmul.f32 %v1741, %v1726
      %v1759 = vadd.f32 %v1647, %v1743
      %v1760 = vadd.f32 %v1648, %v1744
      %v1761 = vadd.f32 %v1649, %v1745
      %v1762 = vadd.f32 %v1650, %v1746
      %v1763 = vadd.f32 %v1651, %v1747
      %v1764 = vadd.f32 %v1652, %v1748
      %v1765 = vadd.f32 %v1653, %v1749
      %v1766 = vadd.f32 %v1654, %v1750
      %v1767 = vadd.f32 %v1655, %v1751
      %v1768 = vadd.f32 %v1656, %v1752
      %v1769 = vadd.f32 %v1657, %v1753
      %v1770 = vadd.f32 %v1658, %v1754
      %v1771 = vadd.f32 %v1659, %v1755
      %v1772 = vadd.f32 %v1660, %v1756
      %v1773 = vadd.f32 %v1661, %v1757
      %v1774 = vadd.f32 %v1662, %v1758
      %1775 = vrot.lane.b32.xlu0 %v1072, 113
      %v1776 = vpop.permute.xlu0 %1775
      %1777 = vrot.lane.b32.xlu0 %v1078, 113
      %v1778 = vpop.permute.xlu0 %1777
      %1779 = vrot.lane.b32.xlu0 %v1084, 113
      %v1780 = vpop.permute.xlu0 %1779
      %1781 = vrot.lane.b32.xlu0 %v1090, 113
      %v1782 = vpop.permute.xlu0 %1781
      %1783 = vrot.lane.b32.xlu0 %v1074, 113
      %v1784 = vpop.permute.xlu0 %1783
      %1785 = vrot.lane.b32.xlu0 %v1080, 113
      %v1786 = vpop.permute.xlu0 %1785
      %1787 = vrot.lane.b32.xlu0 %v1086, 113
      %v1788 = vpop.permute.xlu0 %1787
      %1789 = vrot.lane.b32.xlu0 %v1092, 113
      %v1790 = vpop.permute.xlu0 %1789
      %1791 = vrot.lane.b32.xlu0 %v1161, 113
      %v1792 = vpop.permute.xlu0 %1791
      %1793 = vrot.lane.b32.xlu0 %v1167, 113
      %v1794 = vpop.permute.xlu0 %1793
      %1795 = vrot.lane.b32.xlu0 %v1173, 113
      %v1796 = vpop.permute.xlu0 %1795
      %1797 = vrot.lane.b32.xlu0 %v1179, 113
      %v1798 = vpop.permute.xlu0 %1797
      %1799 = vrot.lane.b32.xlu0 %v1163, 113
      %v1800 = vpop.permute.xlu0 %1799
      %1801 = vrot.lane.b32.xlu0 %v1169, 113
      %v1802 = vpop.permute.xlu0 %1801
      %1803 = vrot.lane.b32.xlu0 %v1175, 113
      %v1804 = vpop.permute.xlu0 %1803
      %1805 = vrot.lane.b32.xlu0 %v1181, 113
      %v1806 = vpop.permute.xlu0 %1805
      %v1807 = vsel %vm579, %v1792, %v1800
      %v1808 = vsel %vm579, %v1794, %v1802
      %v1809 = vsel %vm579, %v1796, %v1804
      %v1810 = vsel %vm579, %v1798, %v1806
      %v1811 = vsel %vm579, %v1784, %v1792
      %v1812 = vsel %vm579, %v1786, %v1794
      %v1813 = vsel %vm579, %v1788, %v1796
      %v1814 = vsel %vm579, %v1790, %v1798
      %v1815 = vsel %vm579, %v1776, %v1784
      %v1816 = vsel %vm579, %v1778, %v1786
      %v1817 = vsel %vm579, %v1780, %v1788
      %v1818 = vsel %vm579, %v1782, %v1790
      %v1819 = vsel %vm579, %v1800, %v1776
      %v1820 = vsel %vm579, %v1802, %v1778
      %v1821 = vsel %vm579, %v1804, %v1780
      %v1822 = vsel %vm579, %v1806, %v1782
      %v1823 = vmul.f32 %v1815, %v587
      %v1824 = vmul.f32 %v1811, %v591
      %v1825 = vmul.f32 %v1807, %v595
      %v1826 = vmul.f32 %v1819, %v599
      %v1827 = vmul.f32 %v1816, %v587
      %v1828 = vmul.f32 %v1812, %v591
      %v1829 = vmul.f32 %v1808, %v595
      %v1830 = vmul.f32 %v1820, %v599
      %v1831 = vmul.f32 %v1817, %v587
      %v1832 = vmul.f32 %v1813, %v591
      %v1833 = vmul.f32 %v1809, %v595
      %v1834 = vmul.f32 %v1821, %v599
      %v1835 = vmul.f32 %v1818, %v587
      %v1836 = vmul.f32 %v1814, %v591
      %v1837 = vmul.f32 %v1810, %v595
      %v1838 = vmul.f32 %v1822, %v599
      %1839 = vset.pattern.permute.xlu0 21
      %1840 = vperm.xlu0 %1839, %v394
      %v1841 = vpop.permute.xlu0 %1840
      %1843 = vset.pattern.permute.xlu0 21
      %1844 = vperm.xlu0 %1843, %v395
      %v1845 = vpop.permute.xlu0 %1844
      %1847 = vset.pattern.permute.xlu0 21
      %1848 = vperm.xlu0 %1847, %v396
      %v1849 = vpop.permute.xlu0 %1848
      %1851 = vset.pattern.permute.xlu0 21
      %1852 = vperm.xlu0 %1851, %v397
      %v1853 = vpop.permute.xlu0 %1852
      %v1855 = vmul.f32 %v1841, %v1823
      %v1856 = vmul.f32 %v1841, %v1824
      %v1857 = vmul.f32 %v1841, %v1825
      %v1858 = vmul.f32 %v1841, %v1826
      %v1859 = vmul.f32 %v1845, %v1827
      %v1860 = vmul.f32 %v1845, %v1828
      %v1861 = vmul.f32 %v1845, %v1829
      %v1862 = vmul.f32 %v1845, %v1830
      %v1863 = vmul.f32 %v1849, %v1831
      %v1864 = vmul.f32 %v1849, %v1832
      %v1865 = vmul.f32 %v1849, %v1833
      %v1866 = vmul.f32 %v1849, %v1834
      %v1867 = vmul.f32 %v1853, %v1835
      %v1868 = vmul.f32 %v1853, %v1836
      %v1869 = vmul.f32 %v1853, %v1837
      %v1870 = vmul.f32 %v1853, %v1838
      %v1871 = vadd.f32 %v1759, %v1855
      %v1872 = vadd.f32 %v1760, %v1856
      %v1873 = vadd.f32 %v1761, %v1857
      %v1874 = vadd.f32 %v1762, %v1858
      %v1875 = vadd.f32 %v1763, %v1859
      %v1876 = vadd.f32 %v1764, %v1860
      %v1877 = vadd.f32 %v1765, %v1861
      %v1878 = vadd.f32 %v1766, %v1862
      %v1879 = vadd.f32 %v1767, %v1863
      %v1880 = vadd.f32 %v1768, %v1864
      %v1881 = vadd.f32 %v1769, %v1865
      %v1882 = vadd.f32 %v1770, %v1866
      %v1883 = vadd.f32 %v1771, %v1867
      %v1884 = vadd.f32 %v1772, %v1868
      %v1885 = vadd.f32 %v1773, %v1869
      %v1886 = vadd.f32 %v1774, %v1870
      %1887 = vrot.lane.b32.xlu0 %v1072, 112
      %v1888 = vpop.permute.xlu0 %1887
      %1889 = vrot.lane.b32.xlu0 %v1078, 112
      %v1890 = vpop.permute.xlu0 %1889
      %1891 = vrot.lane.b32.xlu0 %v1084, 112
      %v1892 = vpop.permute.xlu0 %1891
      %1893 = vrot.lane.b32.xlu0 %v1090, 112
      %v1894 = vpop.permute.xlu0 %1893
      %1895 = vrot.lane.b32.xlu0 %v1074, 112
      %v1896 = vpop.permute.xlu0 %1895
      %1897 = vrot.lane.b32.xlu0 %v1080, 112
      %v1898 = vpop.permute.xlu0 %1897
      %1899 = vrot.lane.b32.xlu0 %v1086, 112
      %v1900 = vpop.permute.xlu0 %1899
      %1901 = vrot.lane.b32.xlu0 %v1092, 112
      %v1902 = vpop.permute.xlu0 %1901
      %1903 = vrot.lane.b32.xlu0 %v1161, 112
      %v1904 = vpop.permute.xlu0 %1903
      %1905 = vrot.lane.b32.xlu0 %v1167, 112
      %v1906 = vpop.permute.xlu0 %1905
      %1907 = vrot.lane.b32.xlu0 %v1173, 112
      %v1908 = vpop.permute.xlu0 %1907
      %1909 = vrot.lane.b32.xlu0 %v1179, 112
      %v1910 = vpop.permute.xlu0 %1909
      %1911 = vrot.lane.b32.xlu0 %v1163, 112
      %v1912 = vpop.permute.xlu0 %1911
      %1913 = vrot.lane.b32.xlu0 %v1169, 112
      %v1914 = vpop.permute.xlu0 %1913
      %1915 = vrot.lane.b32.xlu0 %v1175, 112
      %v1916 = vpop.permute.xlu0 %1915
      %1917 = vrot.lane.b32.xlu0 %v1181, 112
      %v1918 = vpop.permute.xlu0 %1917
      %v1919 = vsel %vm612, %v1904, %v1912
      %v1920 = vsel %vm612, %v1906, %v1914
      %v1921 = vsel %vm612, %v1908, %v1916
      %v1922 = vsel %vm612, %v1910, %v1918
      %v1923 = vsel %vm612, %v1896, %v1904
      %v1924 = vsel %vm612, %v1898, %v1906
      %v1925 = vsel %vm612, %v1900, %v1908
      %v1926 = vsel %vm612, %v1902, %v1910
      %v1927 = vsel %vm612, %v1888, %v1896
      %v1928 = vsel %vm612, %v1890, %v1898
      %v1929 = vsel %vm612, %v1892, %v1900
      %v1930 = vsel %vm612, %v1894, %v1902
      %v1931 = vsel %vm612, %v1912, %v1888
      %v1932 = vsel %vm612, %v1914, %v1890
      %v1933 = vsel %vm612, %v1916, %v1892
      %v1934 = vsel %vm612, %v1918, %v1894
      %v1935 = vmul.f32 %v1927, %v620
      %v1936 = vmul.f32 %v1923, %v624
      %v1937 = vmul.f32 %v1919, %v628
      %v1938 = vmul.f32 %v1931, %v632
      %v1939 = vmul.f32 %v1928, %v620
      %v1940 = vmul.f32 %v1924, %v624
      %v1941 = vmul.f32 %v1920, %v628
      %v1942 = vmul.f32 %v1932, %v632
      %v1943 = vmul.f32 %v1929, %v620
      %v1944 = vmul.f32 %v1925, %v624
      %v1945 = vmul.f32 %v1921, %v628
      %v1946 = vmul.f32 %v1933, %v632
      %v1947 = vmul.f32 %v1930, %v620
      %v1948 = vmul.f32 %v1926, %v624
      %v1949 = vmul.f32 %v1922, %v628
      %v1950 = vmul.f32 %v1934, %v632
      %1951 = vset.pattern.permute.xlu0 22
      %1952 = vperm.xlu0 %1951, %v394
      %v1953 = vpop.permute.xlu0 %1952
      %1955 = vset.pattern.permute.xlu0 22
      %1956 = vperm.xlu0 %1955, %v395
      %v1957 = vpop.permute.xlu0 %1956
      %1959 = vset.pattern.permute.xlu0 22
      %1960 = vperm.xlu0 %1959, %v396
      %v1961 = vpop.permute.xlu0 %1960
      %1963 = vset.pattern.permute.xlu0 22
      %1964 = vperm.xlu0 %1963, %v397
      %v1965 = vpop.permute.xlu0 %1964
      %v1967 = vmul.f32 %v1953, %v1935
      %v1968 = vmul.f32 %v1953, %v1936
      %v1969 = vmul.f32 %v1953, %v1937
      %v1970 = vmul.f32 %v1953, %v1938
      %v1971 = vmul.f32 %v1957, %v1939
      %v1972 = vmul.f32 %v1957, %v1940
      %v1973 = vmul.f32 %v1957, %v1941
      %v1974 = vmul.f32 %v1957, %v1942
      %v1975 = vmul.f32 %v1961, %v1943
      %v1976 = vmul.f32 %v1961, %v1944
      %v1977 = vmul.f32 %v1961, %v1945
      %v1978 = vmul.f32 %v1961, %v1946
      %v1979 = vmul.f32 %v1965, %v1947
      %v1980 = vmul.f32 %v1965, %v1948
      %v1981 = vmul.f32 %v1965, %v1949
      %v1982 = vmul.f32 %v1965, %v1950
      %v1983 = vadd.f32 %v1871, %v1967
      %v1984 = vadd.f32 %v1872, %v1968
      %v1985 = vadd.f32 %v1873, %v1969
      %v1986 = vadd.f32 %v1874, %v1970
      %v1987 = vadd.f32 %v1875, %v1971
      %v1988 = vadd.f32 %v1876, %v1972
      %v1989 = vadd.f32 %v1877, %v1973
      %v1990 = vadd.f32 %v1878, %v1974
      %v1991 = vadd.f32 %v1879, %v1975
      %v1992 = vadd.f32 %v1880, %v1976
      %v1993 = vadd.f32 %v1881, %v1977
      %v1994 = vadd.f32 %v1882, %v1978
      %v1995 = vadd.f32 %v1883, %v1979
      %v1996 = vadd.f32 %v1884, %v1980
      %v1997 = vadd.f32 %v1885, %v1981
      %v1998 = vadd.f32 %v1886, %v1982
      %1999 = vrot.lane.b32.xlu0 %v1072, 111
      %v2000 = vpop.permute.xlu0 %1999
      %2001 = vrot.lane.b32.xlu0 %v1078, 111
      %v2002 = vpop.permute.xlu0 %2001
      %2003 = vrot.lane.b32.xlu0 %v1084, 111
      %v2004 = vpop.permute.xlu0 %2003
      %2005 = vrot.lane.b32.xlu0 %v1090, 111
      %v2006 = vpop.permute.xlu0 %2005
      %2007 = vrot.lane.b32.xlu0 %v1074, 111
      %v2008 = vpop.permute.xlu0 %2007
      %2009 = vrot.lane.b32.xlu0 %v1080, 111
      %v2010 = vpop.permute.xlu0 %2009
      %2011 = vrot.lane.b32.xlu0 %v1086, 111
      %v2012 = vpop.permute.xlu0 %2011
      %2013 = vrot.lane.b32.xlu0 %v1092, 111
      %v2014 = vpop.permute.xlu0 %2013
      %2015 = vrot.lane.b32.xlu0 %v1161, 111
      %v2016 = vpop.permute.xlu0 %2015
      %2017 = vrot.lane.b32.xlu0 %v1167, 111
      %v2018 = vpop.permute.xlu0 %2017
      %2019 = vrot.lane.b32.xlu0 %v1173, 111
      %v2020 = vpop.permute.xlu0 %2019
      %2021 = vrot.lane.b32.xlu0 %v1179, 111
      %v2022 = vpop.permute.xlu0 %2021
      %2023 = vrot.lane.b32.xlu0 %v1163, 111
      %v2024 = vpop.permute.xlu0 %2023
      %2025 = vrot.lane.b32.xlu0 %v1169, 111
      %v2026 = vpop.permute.xlu0 %2025
      %2027 = vrot.lane.b32.xlu0 %v1175, 111
      %v2028 = vpop.permute.xlu0 %2027
      %2029 = vrot.lane.b32.xlu0 %v1181, 111
      %v2030 = vpop.permute.xlu0 %2029
      %v2031 = vsel %vm645, %v2016, %v2024
      %v2032 = vsel %vm645, %v2018, %v2026
      %v2033 = vsel %vm645, %v2020, %v2028
      %v2034 = vsel %vm645, %v2022, %v2030
      %v2035 = vsel %vm645, %v2008, %v2016
      %v2036 = vsel %vm645, %v2010, %v2018
      %v2037 = vsel %vm645, %v2012, %v2020
      %v2038 = vsel %vm645, %v2014, %v2022
      %v2039 = vsel %vm645, %v2000, %v2008
      %v2040 = vsel %vm645, %v2002, %v2010
      %v2041 = vsel %vm645, %v2004, %v2012
      %v2042 = vsel %vm645, %v2006, %v2014
      %v2043 = vsel %vm645, %v2024, %v2000
      %v2044 = vsel %vm645, %v2026, %v2002
      %v2045 = vsel %vm645, %v2028, %v2004
      %v2046 = vsel %vm645, %v2030, %v2006
      %v2047 = vmul.f32 %v2039, %v653
      %v2048 = vmul.f32 %v2035, %v657
      %v2049 = vmul.f32 %v2031, %v661
      %v2050 = vmul.f32 %v2043, %v665
      %v2051 = vmul.f32 %v2040, %v653
      %v2052 = vmul.f32 %v2036, %v657
      %v2053 = vmul.f32 %v2032, %v661
      %v2054 = vmul.f32 %v2044, %v665
      %v2055 = vmul.f32 %v2041, %v653
      %v2056 = vmul.f32 %v2037, %v657
      %v2057 = vmul.f32 %v2033, %v661
      %v2058 = vmul.f32 %v2045, %v665
      %v2059 = vmul.f32 %v2042, %v653
      %v2060 = vmul.f32 %v2038, %v657
      %v2061 = vmul.f32 %v2034, %v661
      %v2062 = vmul.f32 %v2046, %v665
      %2063 = vset.pattern.permute.xlu0 23
      %2064 = vperm.xlu0 %2063, %v394
      %v2065 = vpop.permute.xlu0 %2064
      %2067 = vset.pattern.permute.xlu0 23
      %2068 = vperm.xlu0 %2067, %v395
      %v2069 = vpop.permute.xlu0 %2068
      %2071 = vset.pattern.permute.xlu0 23
      %2072 = vperm.xlu0 %2071, %v396
      %v2073 = vpop.permute.xlu0 %2072
      %2075 = vset.pattern.permute.xlu0 23
      %2076 = vperm.xlu0 %2075, %v397
      %v2077 = vpop.permute.xlu0 %2076
      %v2079 = vmul.f32 %v2065, %v2047
      %v2080 = vmul.f32 %v2065, %v2048
      %v2081 = vmul.f32 %v2065, %v2049
      %v2082 = vmul.f32 %v2065, %v2050
      %v2083 = vmul.f32 %v2069, %v2051
      %v2084 = vmul.f32 %v2069, %v2052
      %v2085 = vmul.f32 %v2069, %v2053
      %v2086 = vmul.f32 %v2069, %v2054
      %v2087 = vmul.f32 %v2073, %v2055
      %v2088 = vmul.f32 %v2073, %v2056
      %v2089 = vmul.f32 %v2073, %v2057
      %v2090 = vmul.f32 %v2073, %v2058
      %v2091 = vmul.f32 %v2077, %v2059
      %v2092 = vmul.f32 %v2077, %v2060
      %v2093 = vmul.f32 %v2077, %v2061
      %v2094 = vmul.f32 %v2077, %v2062
      %v2095 = vadd.f32 %v1983, %v2079
      %v2096 = vadd.f32 %v1984, %v2080
      %v2097 = vadd.f32 %v1985, %v2081
      %v2098 = vadd.f32 %v1986, %v2082
      %v2099 = vadd.f32 %v1987, %v2083
      %v2100 = vadd.f32 %v1988, %v2084
      %v2101 = vadd.f32 %v1989, %v2085
      %v2102 = vadd.f32 %v1990, %v2086
      %v2103 = vadd.f32 %v1991, %v2087
      %v2104 = vadd.f32 %v1992, %v2088
      %v2105 = vadd.f32 %v1993, %v2089
      %v2106 = vadd.f32 %v1994, %v2090
      %v2107 = vadd.f32 %v1995, %v2091
      %v2108 = vadd.f32 %v1996, %v2092
      %v2109 = vadd.f32 %v1997, %v2093
      %v2110 = vadd.f32 %v1998, %v2094
      %2111 = vset.pattern.permute.xlu0 4
      %2112 = vperm.xlu0 %2111, %v394
      %v2113 = vpop.permute.xlu0 %2112
      %2115 = vset.pattern.permute.xlu0 4
      %2116 = vperm.xlu0 %2115, %v395
      %v2117 = vpop.permute.xlu0 %2116
      %2119 = vset.pattern.permute.xlu0 4
      %2120 = vperm.xlu0 %2119, %v396
      %v2121 = vpop.permute.xlu0 %2120
      %2123 = vset.pattern.permute.xlu0 4
      %2124 = vperm.xlu0 %2123, %v397
      %v2125 = vpop.permute.xlu0 %2124
      %v2127 = vadd.f32 %v2095, %v2113
      %v2128 = vadd.f32 %v2096, %v2113
      %v2129 = vadd.f32 %v2097, %v2113
      %v2130 = vadd.f32 %v2098, %v2113
      %v2131 = vadd.f32 %v2099, %v2117
      %v2132 = vadd.f32 %v2100, %v2117
      %v2133 = vadd.f32 %v2101, %v2117
      %v2134 = vadd.f32 %v2102, %v2117
      %v2135 = vadd.f32 %v2103, %v2121
      %v2136 = vadd.f32 %v2104, %v2121
      %v2137 = vadd.f32 %v2105, %v2121
      %v2138 = vadd.f32 %v2106, %v2121
      %v2139 = vadd.f32 %v2107, %v2125
      %v2140 = vadd.f32 %v2108, %v2125
      %v2141 = vadd.f32 %v2109, %v2125
      %v2142 = vadd.f32 %v2110, %v2125
      %v2143 = vmul.f32 %v2127, %v2135
      %v2144 = vmul.f32 %v2128, %v2136
      %v2145 = vmul.f32 %v2129, %v2137
      %v2146 = vmul.f32 %v2130, %v2138
      %v2147 = vmul.f32 %v2131, %v2139
      %v2148 = vmul.f32 %v2132, %v2140
      %v2149 = vmul.f32 %v2133, %v2141
      %v2150 = vmul.f32 %v2134, %v2142
      %v2151 = vld [vmem:[%s2] sm:$0xff]
      %v2153 = vcombine.high %v2151, %v2151
      %v2155 = vunpack.c.l.s4 1983009808
      %v2156 = vunpack.c.0.s8 %v2155
      %v2157 = vlaneseq
      %v2158 = vshrl.u32 %v2157, 7
      %v2159 = vsub.s32 %v2156, %v2158
      %v2160 = vrot.slane %v2151, %v2159
      %v2162 = vunpack.c.l.s4 1983009808
      %v2163 = vunpack.c.0.s8 %v2162
      %v2164 = vlaneseq
      %v2165 = vshrl.u32 %v2164, 7
      %v2166 = vsub.s32 %v2163, %v2165
      %v2167 = vrot.slane %v2153, %v2166
      %v2168 = vcombine.high %v2160, %v2160
      %v2169 = vcombine.high %v2167, %v2167
      %2174 = vmatprep.subr.mxu0 0.0
      %2175 = vmatpush1.xpose.msra.mxu0 0.0
      %2176 = vmatprep.subr.mxu0 0.0
      %2177 = vmatpush1.xpose.msra.mxu0 0.0
      %2178 = vmatprep.subr.mxu0 0.0
      %2179 = vmatpush1.xpose.msra.mxu0 0.0
      %2180 = vmatprep.subr.mxu0 0.0
      %2181 = vmatpush1.xpose.msra.mxu0 0.0
      %2182 = vmatprep.subr.mxu0 0.0
      %2183 = vmatpush1.xpose.msra.mxu0 0.0
      %2184 = vmatprep.subr.mxu0 0.0
      %2185 = vmatpush1.xpose.msra.mxu0 0.0
      %2186 = vmatprep.subr.mxu0 0.0
      %2187 = vmatpush1.xpose.msra.mxu0 0.0
      %2188 = vmatprep.subr.mxu0 0.0
      %2189 = vmatpush1.xpose.msra.mxu0 0.0
      %2190 = vmatprep.subr.mxu0 0.0
      %2191 = vmatpush1.xpose.msra.mxu0 0.0
      %2192 = vmatprep.subr.mxu0 0.0
      %2193 = vmatpush1.xpose.msra.mxu0 0.0
      %2194 = vmatprep.subr.mxu0 0.0
      %2195 = vmatpush1.xpose.msra.mxu0 0.0
      %2196 = vmatprep.subr.mxu0 0.0
      %2197 = vmatpush1.xpose.msra.mxu0 0.0
      %2198 = vmatprep.subr.mxu0 0.0
      %2199 = vmatpush1.xpose.msra.mxu0 0.0
      %2200 = vmatprep.subr.mxu0 0.0
      %2201 = vmatpush1.xpose.msra.mxu0 0.0
      %2202 = vmatprep.subr.mxu0 0.0
      %2203 = vmatpush1.xpose.msra.mxu0 0.0
      %2204 = vmatprep.subr.mxu0 %v2168
      %2205 = vmatpush1.xpose.msra.mxu0 %v2160
      %2206 = vmatprep.subr.mxu0 0.0
      %2207 = vmatpush2.xpose.msra.mxu0 0.0
      %2208 = vmatprep.subr.mxu0 0.0
      %2209 = vmatpush2.xpose.msra.mxu0 0.0
      %2210 = vmatprep.subr.mxu0 0.0
      %2211 = vmatpush2.xpose.msra.mxu0 0.0
      %2212 = vmatprep.subr.mxu0 0.0
      %2213 = vmatpush2.xpose.msra.mxu0 0.0
      %2214 = vmatprep.subr.mxu0 0.0
      %2215 = vmatpush2.xpose.msra.mxu0 0.0
      %2216 = vmatprep.subr.mxu0 0.0
      %2217 = vmatpush2.xpose.msra.mxu0 0.0
      %2218 = vmatprep.subr.mxu0 0.0
      %2219 = vmatpush2.xpose.msra.mxu0 0.0
      %2220 = vmatprep.subr.mxu0 0.0
      %2221 = vmatpush2.xpose.msra.mxu0 0.0
      %2222 = vmatprep.subr.mxu0 0.0
      %2223 = vmatpush2.xpose.msra.mxu0 0.0
      %2224 = vmatprep.subr.mxu0 0.0
      %2225 = vmatpush2.xpose.msra.mxu0 0.0
      %2226 = vmatprep.subr.mxu0 0.0
      %2227 = vmatpush2.xpose.msra.mxu0 0.0
      %2228 = vmatprep.subr.mxu0 0.0
      %2229 = vmatpush2.xpose.msra.mxu0 0.0
      %2230 = vmatprep.subr.mxu0 0.0
      %2231 = vmatpush2.xpose.msra.mxu0 0.0
      %2232 = vmatprep.subr.mxu0 0.0
      %2233 = vmatpush2.xpose.msra.mxu0 0.0
      %2234 = vmatprep.subr.mxu0 0.0
      %2235 = vmatpush2.xpose.msra.mxu0 0.0
      %2236 = vmatprep.subr.mxu0 0.0
      %2237 = vmatpush2.xpose.msra.mxu0 0.0
      %2238 = vmatprep.mubr.f32.mxu0 %v2144
      %2239 = vmatmul.mubr.f32.gmra.mxu0 %v2143
      %v2240 = vpop.f32.mrf.mxu0
      %v2241 = vadd.f32 0.0, %v2240
      %v2242 = vpop.f32.mrf.mxu0
      %2243 = vmatprep.mubr.f32.mxu0 %v2148
      %2244 = vmatmul.mubr.f32.gmra.mxu0 %v2147
      %v2245 = vpop.f32.mrf.mxu0
      %v2246 = vadd.f32 0.0, %v2245
      %v2247 = vpop.f32.mrf.mxu0
      %2248 = vdwg.mxu0
      %2249 = vmatprep.subr.mxu0 0.0
      %2250 = vmatpush1.xpose.msra.mxu0 0.0
      %2251 = vmatprep.subr.mxu0 0.0
      %2252 = vmatpush1.xpose.msra.mxu0 0.0
      %2253 = vmatprep.subr.mxu0 0.0
      %2254 = vmatpush1.xpose.msra.mxu0 0.0
      %2255 = vmatprep.subr.mxu0 0.0
      %2256 = vmatpush1.xpose.msra.mxu0 0.0
      %2257 = vmatprep.subr.mxu0 0.0
      %2258 = vmatpush1.xpose.msra.mxu0 0.0
      %2259 = vmatprep.subr.mxu0 0.0
      %2260 = vmatpush1.xpose.msra.mxu0 0.0
      %2261 = vmatprep.subr.mxu0 0.0
      %2262 = vmatpush1.xpose.msra.mxu0 0.0
      %2263 = vmatprep.subr.mxu0 0.0
      %2264 = vmatpush1.xpose.msra.mxu0 0.0
      %2265 = vmatprep.subr.mxu0 0.0
      %2266 = vmatpush1.xpose.msra.mxu0 0.0
      %2267 = vmatprep.subr.mxu0 0.0
      %2268 = vmatpush1.xpose.msra.mxu0 0.0
      %2269 = vmatprep.subr.mxu0 0.0
      %2270 = vmatpush1.xpose.msra.mxu0 0.0
      %2271 = vmatprep.subr.mxu0 0.0
      %2272 = vmatpush1.xpose.msra.mxu0 0.0
      %2273 = vmatprep.subr.mxu0 0.0
      %2274 = vmatpush1.xpose.msra.mxu0 0.0
      %2275 = vmatprep.subr.mxu0 0.0
      %2276 = vmatpush1.xpose.msra.mxu0 0.0
      %2277 = vmatprep.subr.mxu0 0.0
      %2278 = vmatpush1.xpose.msra.mxu0 0.0
      %2279 = vmatprep.subr.mxu0 %v2169
      %2280 = vmatpush1.xpose.msra.mxu0 %v2167
      %2281 = vmatprep.subr.mxu0 0.0
      %2282 = vmatpush2.xpose.msra.mxu0 0.0
      %2283 = vmatprep.subr.mxu0 0.0
      %2284 = vmatpush2.xpose.msra.mxu0 0.0
      %2285 = vmatprep.subr.mxu0 0.0
      %2286 = vmatpush2.xpose.msra.mxu0 0.0
      %2287 = vmatprep.subr.mxu0 0.0
      %2288 = vmatpush2.xpose.msra.mxu0 0.0
      %2289 = vmatprep.subr.mxu0 0.0
      %2290 = vmatpush2.xpose.msra.mxu0 0.0
      %2291 = vmatprep.subr.mxu0 0.0
      %2292 = vmatpush2.xpose.msra.mxu0 0.0
      %2293 = vmatprep.subr.mxu0 0.0
      %2294 = vmatpush2.xpose.msra.mxu0 0.0
      %2295 = vmatprep.subr.mxu0 0.0
      %2296 = vmatpush2.xpose.msra.mxu0 0.0
      %2297 = vmatprep.subr.mxu0 0.0
      %2298 = vmatpush2.xpose.msra.mxu0 0.0
      %2299 = vmatprep.subr.mxu0 0.0
      %2300 = vmatpush2.xpose.msra.mxu0 0.0
      %2301 = vmatprep.subr.mxu0 0.0
      %2302 = vmatpush2.xpose.msra.mxu0 0.0
      %2303 = vmatprep.subr.mxu0 0.0
      %2304 = vmatpush2.xpose.msra.mxu0 0.0
      %2305 = vmatprep.subr.mxu0 0.0
      %2306 = vmatpush2.xpose.msra.mxu0 0.0
      %2307 = vmatprep.subr.mxu0 0.0
      %2308 = vmatpush2.xpose.msra.mxu0 0.0
      %2309 = vmatprep.subr.mxu0 0.0
      %2310 = vmatpush2.xpose.msra.mxu0 0.0
      %2311 = vmatprep.subr.mxu0 0.0
      %2312 = vmatpush2.xpose.msra.mxu0 0.0
      %2313 = vmatprep.mubr.f32.mxu0 %v2146
      %2314 = vmatmul.mubr.f32.gmra.mxu0 %v2145
      %v2315 = vpop.f32.mrf.mxu0
      %v2316 = vadd.f32 %v2241, %v2315
      %v2317 = vpop.f32.mrf.mxu0
      %2318 = vmatprep.mubr.f32.mxu0 %v2150
      %2319 = vmatmul.mubr.f32.gmra.mxu0 %v2149
      %v2320 = vpop.f32.mrf.mxu0
      %v2321 = vadd.f32 %v2246, %v2320
      %v2322 = vpop.f32.mrf.mxu0
      %2323 = vdwg.mxu0
      %v2324 = vmul.f32 %v2316, 0.00390625
      %v2325 = vmul.f32 %v2321, 0.00390625
      %v2326 = vld [vmem:[%s7] sm:$0xff]
      %v2327 = vld [vmem:[%s7 + $0x8] sm:$0xff]
      %2328 = vset.pattern.permute.xlu0 6
      %2329 = vperm.xlu0 %2328, %v394
      %v2330 = vpop.permute.xlu0 %2329
      %2332 = vset.pattern.permute.xlu0 6
      %2333 = vperm.xlu0 %2332, %v395
      %v2334 = vpop.permute.xlu0 %2333
      %v2337 = vsel %vm992, %v2326, 0
      %v2340 = vsel %vm992, %v2327, 0
      %2342 = vmatprep.subr.mxu0 0.0
      %2343 = vmatpush1.msra.mxu0 0.0
      %2344 = vmatprep.subr.mxu0 0.0
      %2345 = vmatpush1.msra.mxu0 0.0
      %2346 = vmatprep.subr.mxu0 0.0
      %2347 = vmatpush1.msra.mxu0 0.0
      %2348 = vmatprep.subr.mxu0 0.0
      %2349 = vmatpush1.msra.mxu0 0.0
      %2350 = vmatprep.subr.mxu0 0.0
      %2351 = vmatpush1.msra.mxu0 0.0
      %2352 = vmatprep.subr.mxu0 0.0
      %2353 = vmatpush1.msra.mxu0 0.0
      %2354 = vmatprep.subr.mxu0 0.0
      %2355 = vmatpush1.msra.mxu0 0.0
      %2356 = vmatprep.subr.mxu0 0.0
      %2357 = vmatpush1.msra.mxu0 0.0
      %2358 = vmatprep.subr.mxu0 0.0
      %2359 = vmatpush1.msra.mxu0 0.0
      %2360 = vmatprep.subr.mxu0 0.0
      %2361 = vmatpush1.msra.mxu0 0.0
      %2362 = vmatprep.subr.mxu0 0.0
      %2363 = vmatpush1.msra.mxu0 0.0
      %2364 = vmatprep.subr.mxu0 0.0
      %2365 = vmatpush1.msra.mxu0 0.0
      %2366 = vmatprep.subr.mxu0 0.0
      %2367 = vmatpush1.msra.mxu0 0.0
      %2368 = vmatprep.subr.mxu0 0.0
      %2369 = vmatpush1.msra.mxu0 0.0
      %2370 = vmatprep.subr.mxu0 0.0
      %2371 = vmatpush1.msra.mxu0 %v2325
      %2372 = vmatprep.subr.mxu0 0.0
      %2373 = vmatpush1.msra.mxu0 %v2324
      %2374 = vmatprep.subr.mxu0 0.0
      %2375 = vmatpush2.msra.mxu0 0.0
      %2376 = vmatprep.subr.mxu0 0.0
      %2377 = vmatpush2.msra.mxu0 0.0
      %2378 = vmatprep.subr.mxu0 0.0
      %2379 = vmatpush2.msra.mxu0 0.0
      %2380 = vmatprep.subr.mxu0 0.0
      %2381 = vmatpush2.msra.mxu0 0.0
      %2382 = vmatprep.subr.mxu0 0.0
      %2383 = vmatpush2.msra.mxu0 0.0
      %2384 = vmatprep.subr.mxu0 0.0
      %2385 = vmatpush2.msra.mxu0 0.0
      %2386 = vmatprep.subr.mxu0 0.0
      %2387 = vmatpush2.msra.mxu0 0.0
      %2388 = vmatprep.subr.mxu0 0.0
      %2389 = vmatpush2.msra.mxu0 0.0
      %2390 = vmatprep.subr.mxu0 0.0
      %2391 = vmatpush2.msra.mxu0 0.0
      %2392 = vmatprep.subr.mxu0 0.0
      %2393 = vmatpush2.msra.mxu0 0.0
      %2394 = vmatprep.subr.mxu0 0.0
      %2395 = vmatpush2.msra.mxu0 0.0
      %2396 = vmatprep.subr.mxu0 0.0
      %2397 = vmatpush2.msra.mxu0 0.0
      %2398 = vmatprep.subr.mxu0 0.0
      %2399 = vmatpush2.msra.mxu0 0.0
      %2400 = vmatprep.subr.mxu0 0.0
      %2401 = vmatpush2.msra.mxu0 0.0
      %2402 = vmatprep.subr.mxu0 0.0
      %2403 = vmatpush2.msra.mxu0 0.0
      %2404 = vmatprep.subr.mxu0 0.0
      %2405 = vmatpush2.msra.mxu0 0.0
      %2406 = vmatprep.mubr.f32.mxu0 0.0
      %2407 = vmatmul.mubr.f32.gmra.mxu0 %v2337
      %v2408 = vpop.f32.mrf.mxu0
      %v2409 = vadd.f32 %v2330, %v2408
      %v2410 = vpop.f32.mrf.mxu0
      %2411 = vmatprep.mubr.f32.mxu0 0.0
      %2412 = vmatmul.mubr.f32.gmra.mxu0 %v2340
      %v2413 = vpop.f32.mrf.mxu0
      %v2414 = vadd.f32 %v2334, %v2413
      %v2415 = vpop.f32.mrf.mxu0
      %2416 = vdwg.mxu0
      %vm2417 = vcmask 15360
      %v2419 = vsel %vm2417, %v2409, 0
      %v2422 = vsel %vm2417, %v2414, 0
      %vm2424 = vcmask 1041408
      %v2425 = vsel %vm2424, %v2160, 0
      %v2427 = vsel %vm2424, %v2168, 0
      %v2429 = vsel %vm2424, %v2167, 0
      %v2431 = vsel %vm2424, %v2169, 0
      %2433 = vmatprep.subr.mxu0 0.0
      %2434 = vmatpush1.msra.mxu0 0.0
      %2435 = vmatprep.subr.mxu0 0.0
      %2436 = vmatpush1.msra.mxu0 0.0
      %2437 = vmatprep.subr.mxu0 0.0
      %2438 = vmatpush1.msra.mxu0 0.0
      %2439 = vmatprep.subr.mxu0 0.0
      %2440 = vmatpush1.msra.mxu0 0.0
      %2441 = vmatprep.subr.mxu0 0.0
      %2442 = vmatpush1.msra.mxu0 0.0
      %2443 = vmatprep.subr.mxu0 0.0
      %2444 = vmatpush1.msra.mxu0 0.0
      %2445 = vmatprep.subr.mxu0 0.0
      %2446 = vmatpush1.msra.mxu0 0.0
      %2447 = vmatprep.subr.mxu0 0.0
      %2448 = vmatpush1.msra.mxu0 0.0
      %2449 = vmatprep.subr.mxu0 0.0
      %2450 = vmatpush1.msra.mxu0 0.0
      %2451 = vmatprep.subr.mxu0 0.0
      %2452 = vmatpush1.msra.mxu0 0.0
      %2453 = vmatprep.subr.mxu0 0.0
      %2454 = vmatpush1.msra.mxu0 0.0
      %2455 = vmatprep.subr.mxu0 0.0
      %2456 = vmatpush1.msra.mxu0 0.0
      %2457 = vmatprep.subr.mxu0 0.0
      %2458 = vmatpush1.msra.mxu0 0.0
      %2459 = vmatprep.subr.mxu0 0.0
      %2460 = vmatpush1.msra.mxu0 0.0
      %2461 = vmatprep.subr.mxu0 0.0
      %2462 = vmatpush1.msra.mxu0 0.0
      %2463 = vmatprep.subr.mxu0 %v2427
      %2464 = vmatpush1.msra.mxu0 %v2425
      %2465 = vmatprep.subr.mxu0 0.0
      %2466 = vmatpush2.msra.mxu0 0.0
      %2467 = vmatprep.subr.mxu0 0.0
      %2468 = vmatpush2.msra.mxu0 0.0
      %2469 = vmatprep.subr.mxu0 0.0
      %2470 = vmatpush2.msra.mxu0 0.0
      %2471 = vmatprep.subr.mxu0 0.0
      %2472 = vmatpush2.msra.mxu0 0.0
      %2473 = vmatprep.subr.mxu0 0.0
      %2474 = vmatpush2.msra.mxu0 0.0
      %2475 = vmatprep.subr.mxu0 0.0
      %2476 = vmatpush2.msra.mxu0 0.0
      %2477 = vmatprep.subr.mxu0 0.0
      %2478 = vmatpush2.msra.mxu0 0.0
      %2479 = vmatprep.subr.mxu0 0.0
      %2480 = vmatpush2.msra.mxu0 0.0
      %2481 = vmatprep.subr.mxu0 0.0
      %2482 = vmatpush2.msra.mxu0 0.0
      %2483 = vmatprep.subr.mxu0 0.0
      %2484 = vmatpush2.msra.mxu0 0.0
      %2485 = vmatprep.subr.mxu0 0.0
      %2486 = vmatpush2.msra.mxu0 0.0
      %2487 = vmatprep.subr.mxu0 0.0
      %2488 = vmatpush2.msra.mxu0 0.0
      %2489 = vmatprep.subr.mxu0 0.0
      %2490 = vmatpush2.msra.mxu0 0.0
      %2491 = vmatprep.subr.mxu0 0.0
      %2492 = vmatpush2.msra.mxu0 0.0
      %2493 = vmatprep.subr.mxu0 0.0
      %2494 = vmatpush2.msra.mxu0 0.0
      %2495 = vmatprep.subr.mxu0 0.0
      %2496 = vmatpush2.msra.mxu0 0.0
      %2497 = vmatprep.mubr.f32.mxu0 0.0
      %2498 = vmatmul.mubr.f32.gmra.mxu0 %v2419
      %v2499 = vpop.f32.mrf.mxu0
      %v2500 = vadd.f32 0.0, %v2499
      %v2501 = vpop.f32.mrf.mxu0
      %v2502 = vadd.f32 0.0, %v2501
      %2503 = vmatprep.mubr.f32.mxu0 0.0
      %2504 = vmatmul.mubr.f32.gmra.mxu0 %v2422
      %v2505 = vpop.f32.mrf.mxu0
      %v2506 = vadd.f32 0.0, %v2505
      %v2507 = vpop.f32.mrf.mxu0
      %v2508 = vadd.f32 0.0, %v2507
      %2509 = vdwg.mxu0
      %2510 = vmatprep.subr.mxu0 0.0
      %2511 = vmatpush1.msra.mxu0 0.0
      %2512 = vmatprep.subr.mxu0 0.0
      %2513 = vmatpush1.msra.mxu0 0.0
      %2514 = vmatprep.subr.mxu0 0.0
      %2515 = vmatpush1.msra.mxu0 0.0
      %2516 = vmatprep.subr.mxu0 0.0
      %2517 = vmatpush1.msra.mxu0 0.0
      %2518 = vmatprep.subr.mxu0 0.0
      %2519 = vmatpush1.msra.mxu0 0.0
      %2520 = vmatprep.subr.mxu0 0.0
      %2521 = vmatpush1.msra.mxu0 0.0
      %2522 = vmatprep.subr.mxu0 0.0
      %2523 = vmatpush1.msra.mxu0 0.0
      %2524 = vmatprep.subr.mxu0 0.0
      %2525 = vmatpush1.msra.mxu0 0.0
      %2526 = vmatprep.subr.mxu0 0.0
      %2527 = vmatpush1.msra.mxu0 0.0
      %2528 = vmatprep.subr.mxu0 0.0
      %2529 = vmatpush1.msra.mxu0 0.0
      %2530 = vmatprep.subr.mxu0 0.0
      %2531 = vmatpush1.msra.mxu0 0.0
      %2532 = vmatprep.subr.mxu0 0.0
      %2533 = vmatpush1.msra.mxu0 0.0
      %2534 = vmatprep.subr.mxu0 0.0
      %2535 = vmatpush1.msra.mxu0 0.0
      %2536 = vmatprep.subr.mxu0 0.0
      %2537 = vmatpush1.msra.mxu0 0.0
      %2538 = vmatprep.subr.mxu0 0.0
      %2539 = vmatpush1.msra.mxu0 0.0
      %2540 = vmatprep.subr.mxu0 %v2431
      %2541 = vmatpush1.msra.mxu0 %v2429
      %2542 = vmatprep.subr.mxu0 0.0
      %2543 = vmatpush2.msra.mxu0 0.0
      %2544 = vmatprep.subr.mxu0 0.0
      %2545 = vmatpush2.msra.mxu0 0.0
      %2546 = vmatprep.subr.mxu0 0.0
      %2547 = vmatpush2.msra.mxu0 0.0
      %2548 = vmatprep.subr.mxu0 0.0
      %2549 = vmatpush2.msra.mxu0 0.0
      %2550 = vmatprep.subr.mxu0 0.0
      %2551 = vmatpush2.msra.mxu0 0.0
      %2552 = vmatprep.subr.mxu0 0.0
      %2553 = vmatpush2.msra.mxu0 0.0
      %2554 = vmatprep.subr.mxu0 0.0
      %2555 = vmatpush2.msra.mxu0 0.0
      %2556 = vmatprep.subr.mxu0 0.0
      %2557 = vmatpush2.msra.mxu0 0.0
      %2558 = vmatprep.subr.mxu0 0.0
      %2559 = vmatpush2.msra.mxu0 0.0
      %2560 = vmatprep.subr.mxu0 0.0
      %2561 = vmatpush2.msra.mxu0 0.0
      %2562 = vmatprep.subr.mxu0 0.0
      %2563 = vmatpush2.msra.mxu0 0.0
      %2564 = vmatprep.subr.mxu0 0.0
      %2565 = vmatpush2.msra.mxu0 0.0
      %2566 = vmatprep.subr.mxu0 0.0
      %2567 = vmatpush2.msra.mxu0 0.0
      %2568 = vmatprep.subr.mxu0 0.0
      %2569 = vmatpush2.msra.mxu0 0.0
      %2570 = vmatprep.subr.mxu0 0.0
      %2571 = vmatpush2.msra.mxu0 0.0
      %2572 = vmatprep.subr.mxu0 0.0
      %2573 = vmatpush2.msra.mxu0 0.0
      %2574 = vmatprep.mubr.f32.mxu0 0.0
      %2575 = vmatmul.mubr.f32.gmra.mxu0 %v2419
      %v2576 = vpop.f32.mrf.mxu0
      %v2577 = vadd.f32 0.0, %v2576
      %v2578 = vpop.f32.mrf.mxu0
      %v2579 = vadd.f32 0.0, %v2578
      %2580 = vmatprep.mubr.f32.mxu0 0.0
      %2581 = vmatmul.mubr.f32.gmra.mxu0 %v2422
      %v2582 = vpop.f32.mrf.mxu0
      %v2583 = vadd.f32 0.0, %v2582
      %v2584 = vpop.f32.mrf.mxu0
      %v2585 = vadd.f32 0.0, %v2584
      %2586 = vdwg.mxu0
      %v2587 = vmul.f32 %v2143, %v2500
      %v2588 = vmul.f32 %v2144, %v2502
      %v2589 = vmul.f32 %v2145, %v2577
      %v2590 = vmul.f32 %v2146, %v2579
      %v2591 = vmul.f32 %v2147, %v2506
      %v2592 = vmul.f32 %v2148, %v2508
      %v2593 = vmul.f32 %v2149, %v2583
      %v2594 = vmul.f32 %v2150, %v2585
      %v2595 = vld [vmem:[%s6] sm:$0xff]
      %v2596 = vld [vmem:[%s6 + $0x8] sm:$0xff]
      %2597 = vset.pattern.permute.xlu0 5
      %2598 = vperm.xlu0 %2597, %v394
      %v2599 = vpop.permute.xlu0 %2598
      %2601 = vset.pattern.permute.xlu0 5
      %2602 = vperm.xlu0 %2601, %v395
      %v2603 = vpop.permute.xlu0 %2602
      %v2606 = vsel %vm992, %v2595, 0
      %v2609 = vsel %vm992, %v2596, 0
      %2611 = vmatprep.subr.mxu0 0.0
      %2612 = vmatpush1.msra.mxu0 0.0
      %2613 = vmatprep.subr.mxu0 0.0
      %2614 = vmatpush1.msra.mxu0 0.0
      %2615 = vmatprep.subr.mxu0 0.0
      %2616 = vmatpush1.msra.mxu0 0.0
      %2617 = vmatprep.subr.mxu0 0.0
      %2618 = vmatpush1.msra.mxu0 0.0
      %2619 = vmatprep.subr.mxu0 0.0
      %2620 = vmatpush1.msra.mxu0 0.0
      %2621 = vmatprep.subr.mxu0 0.0
      %2622 = vmatpush1.msra.mxu0 0.0
      %2623 = vmatprep.subr.mxu0 0.0
      %2624 = vmatpush1.msra.mxu0 0.0
      %2625 = vmatprep.subr.mxu0 0.0
      %2626 = vmatpush1.msra.mxu0 0.0
      %2627 = vmatprep.subr.mxu0 0.0
      %2628 = vmatpush1.msra.mxu0 0.0
      %2629 = vmatprep.subr.mxu0 0.0
      %2630 = vmatpush1.msra.mxu0 0.0
      %2631 = vmatprep.subr.mxu0 0.0
      %2632 = vmatpush1.msra.mxu0 0.0
      %2633 = vmatprep.subr.mxu0 0.0
      %2634 = vmatpush1.msra.mxu0 0.0
      %2635 = vmatprep.subr.mxu0 0.0
      %2636 = vmatpush1.msra.mxu0 0.0
      %2637 = vmatprep.subr.mxu0 0.0
      %2638 = vmatpush1.msra.mxu0 0.0
      %2639 = vmatprep.subr.mxu0 %v2592
      %2640 = vmatpush1.msra.mxu0 %v2591
      %2641 = vmatprep.subr.mxu0 %v2588
      %2642 = vmatpush1.msra.mxu0 %v2587
      %2643 = vmatprep.subr.mxu0 0.0
      %2644 = vmatpush2.msra.mxu0 0.0
      %2645 = vmatprep.subr.mxu0 0.0
      %2646 = vmatpush2.msra.mxu0 0.0
      %2647 = vmatprep.subr.mxu0 0.0
      %2648 = vmatpush2.msra.mxu0 0.0
      %2649 = vmatprep.subr.mxu0 0.0
      %2650 = vmatpush2.msra.mxu0 0.0
      %2651 = vmatprep.subr.mxu0 0.0
      %2652 = vmatpush2.msra.mxu0 0.0
      %2653 = vmatprep.subr.mxu0 0.0
      %2654 = vmatpush2.msra.mxu0 0.0
      %2655 = vmatprep.subr.mxu0 0.0
      %2656 = vmatpush2.msra.mxu0 0.0
      %2657 = vmatprep.subr.mxu0 0.0
      %2658 = vmatpush2.msra.mxu0 0.0
      %2659 = vmatprep.subr.mxu0 0.0
      %2660 = vmatpush2.msra.mxu0 0.0
      %2661 = vmatprep.subr.mxu0 0.0
      %2662 = vmatpush2.msra.mxu0 0.0
      %2663 = vmatprep.subr.mxu0 0.0
      %2664 = vmatpush2.msra.mxu0 0.0
      %2665 = vmatprep.subr.mxu0 0.0
      %2666 = vmatpush2.msra.mxu0 0.0
      %2667 = vmatprep.subr.mxu0 0.0
      %2668 = vmatpush2.msra.mxu0 0.0
      %2669 = vmatprep.subr.mxu0 0.0
      %2670 = vmatpush2.msra.mxu0 0.0
      %2671 = vmatprep.subr.mxu0 0.0
      %2672 = vmatpush2.msra.mxu0 0.0
      %2673 = vmatprep.subr.mxu0 0.0
      %2674 = vmatpush2.msra.mxu0 0.0
      %2675 = vmatprep.mubr.f32.mxu0 0.0
      %2676 = vmatmul.mubr.f32.gmra.mxu0 %v2606
      %v2677 = vpop.f32.mrf.mxu0
      %v2678 = vadd.f32 %v2599, %v2677
      %v2679 = vpop.f32.mrf.mxu0
      %v2680 = vadd.f32 %v2599, %v2679
      %2681 = vmatprep.mubr.f32.mxu0 0.0
      %2682 = vmatmul.mubr.f32.gmra.mxu0 %v2609
      %v2683 = vpop.f32.mrf.mxu0
      %v2684 = vadd.f32 %v2603, %v2683
      %v2685 = vpop.f32.mrf.mxu0
      %v2686 = vadd.f32 %v2603, %v2685
      %2687 = vdwg.mxu0
      %2688 = vmatprep.subr.mxu0 0.0
      %2689 = vmatpush1.msra.mxu0 0.0
      %2690 = vmatprep.subr.mxu0 0.0
      %2691 = vmatpush1.msra.mxu0 0.0
      %2692 = vmatprep.subr.mxu0 0.0
      %2693 = vmatpush1.msra.mxu0 0.0
      %2694 = vmatprep.subr.mxu0 0.0
      %2695 = vmatpush1.msra.mxu0 0.0
      %2696 = vmatprep.subr.mxu0 0.0
      %2697 = vmatpush1.msra.mxu0 0.0
      %2698 = vmatprep.subr.mxu0 0.0
      %2699 = vmatpush1.msra.mxu0 0.0
      %2700 = vmatprep.subr.mxu0 0.0
      %2701 = vmatpush1.msra.mxu0 0.0
      %2702 = vmatprep.subr.mxu0 0.0
      %2703 = vmatpush1.msra.mxu0 0.0
      %2704 = vmatprep.subr.mxu0 0.0
      %2705 = vmatpush1.msra.mxu0 0.0
      %2706 = vmatprep.subr.mxu0 0.0
      %2707 = vmatpush1.msra.mxu0 0.0
      %2708 = vmatprep.subr.mxu0 0.0
      %2709 = vmatpush1.msra.mxu0 0.0
      %2710 = vmatprep.subr.mxu0 0.0
      %2711 = vmatpush1.msra.mxu0 0.0
      %2712 = vmatprep.subr.mxu0 0.0
      %2713 = vmatpush1.msra.mxu0 0.0
      %2714 = vmatprep.subr.mxu0 0.0
      %2715 = vmatpush1.msra.mxu0 0.0
      %2716 = vmatprep.subr.mxu0 %v2594
      %2717 = vmatpush1.msra.mxu0 %v2593
      %2718 = vmatprep.subr.mxu0 %v2590
      %2719 = vmatpush1.msra.mxu0 %v2589
      %2720 = vmatprep.subr.mxu0 0.0
      %2721 = vmatpush2.msra.mxu0 0.0
      %2722 = vmatprep.subr.mxu0 0.0
      %2723 = vmatpush2.msra.mxu0 0.0
      %2724 = vmatprep.subr.mxu0 0.0
      %2725 = vmatpush2.msra.mxu0 0.0
      %2726 = vmatprep.subr.mxu0 0.0
      %2727 = vmatpush2.msra.mxu0 0.0
      %2728 = vmatprep.subr.mxu0 0.0
      %2729 = vmatpush2.msra.mxu0 0.0
      %2730 = vmatprep.subr.mxu0 0.0
      %2731 = vmatpush2.msra.mxu0 0.0
      %2732 = vmatprep.subr.mxu0 0.0
      %2733 = vmatpush2.msra.mxu0 0.0
      %2734 = vmatprep.subr.mxu0 0.0
      %2735 = vmatpush2.msra.mxu0 0.0
      %2736 = vmatprep.subr.mxu0 0.0
      %2737 = vmatpush2.msra.mxu0 0.0
      %2738 = vmatprep.subr.mxu0 0.0
      %2739 = vmatpush2.msra.mxu0 0.0
      %2740 = vmatprep.subr.mxu0 0.0
      %2741 = vmatpush2.msra.mxu0 0.0
      %2742 = vmatprep.subr.mxu0 0.0
      %2743 = vmatpush2.msra.mxu0 0.0
      %2744 = vmatprep.subr.mxu0 0.0
      %2745 = vmatpush2.msra.mxu0 0.0
      %2746 = vmatprep.subr.mxu0 0.0
      %2747 = vmatpush2.msra.mxu0 0.0
      %2748 = vmatprep.subr.mxu0 0.0
      %2749 = vmatpush2.msra.mxu0 0.0
      %2750 = vmatprep.subr.mxu0 0.0
      %2751 = vmatpush2.msra.mxu0 0.0
      %2752 = vmatprep.mubr.f32.mxu0 0.0
      %2753 = vmatmul.mubr.f32.gmra.mxu0 %v2606
      %v2754 = vpop.f32.mrf.mxu0
      %v2755 = vadd.f32 %v2599, %v2754
      %v2756 = vpop.f32.mrf.mxu0
      %v2757 = vadd.f32 %v2599, %v2756
      %2758 = vmatprep.mubr.f32.mxu0 0.0
      %2759 = vmatmul.mubr.f32.gmra.mxu0 %v2609
      %v2760 = vpop.f32.mrf.mxu0
      %v2761 = vadd.f32 %v2603, %v2760
      %v2762 = vpop.f32.mrf.mxu0
      %v2763 = vadd.f32 %v2603, %v2762
      %2764 = vdwg.mxu0
      %2765 = vset.pattern.permute.xlu0 11
      %2766 = vperm.xlu0 %2765, %v394
      %v2767 = vpop.permute.xlu0 %2766
      %2769 = vset.pattern.permute.xlu0 11
      %2770 = vperm.xlu0 %2769, %v395
      %v2771 = vpop.permute.xlu0 %2770
      %v2773 = vmul.f32 %v2678, %v2767
      %v2774 = vmul.f32 %v2680, %v2767
      %v2775 = vmul.f32 %v2755, %v2767
      %v2776 = vmul.f32 %v2757, %v2767
      %v2777 = vmul.f32 %v2684, %v2771
      %v2778 = vmul.f32 %v2686, %v2771
      %v2779 = vmul.f32 %v2761, %v2771
      %v2780 = vmul.f32 %v2763, %v2771
      %v2781 = vadd.f32 %v754, %v2773
      %v2782 = vadd.f32 %v756, %v2774
      %v2783 = vadd.f32 %v831, %v2775
      %v2784 = vadd.f32 %v833, %v2776
      %v2785 = vadd.f32 %v760, %v2777
      %v2786 = vadd.f32 %v762, %v2778
      %v2787 = vadd.f32 %v837, %v2779
      %v2788 = vadd.f32 %v839, %v2780
      %v2789 = vadd.f32 %v2781, %v2785
      %v2790 = vrot.slane %v2789, 4
      %v2791 = vadd.f32 %v2789, %v2790
      %v2792 = vrot.slane %v2791, 2
      %v2793 = vadd.f32 %v2791, %v2792
      %v2794 = vrot.slane %v2793, 1
      %v2795 = vadd.f32 %v2793, %v2794
      %v2796 = vadd.f32 %v2782, %v2786
      %v2797 = vrot.slane %v2796, 4
      %v2798 = vadd.f32 %v2796, %v2797
      %v2799 = vrot.slane %v2798, 2
      %v2800 = vadd.f32 %v2798, %v2799
      %v2801 = vrot.slane %v2800, 1
      %v2802 = vadd.f32 %v2800, %v2801
      %v2803 = vadd.f32 %v2783, %v2787
      %v2804 = vrot.slane %v2803, 4
      %v2805 = vadd.f32 %v2803, %v2804
      %v2806 = vrot.slane %v2805, 2
      %v2807 = vadd.f32 %v2805, %v2806
      %v2808 = vrot.slane %v2807, 1
      %v2809 = vadd.f32 %v2807, %v2808
      %v2810 = vadd.f32 %v2784, %v2788
      %v2811 = vrot.slane %v2810, 4
      %v2812 = vadd.f32 %v2810, %v2811
      %v2813 = vrot.slane %v2812, 2
      %v2814 = vadd.f32 %v2812, %v2813
      %v2815 = vrot.slane %v2814, 1
      %v2816 = vadd.f32 %v2814, %v2815
      %v2817 = vmul.f32 %v2795, %v869
      %v2818 = vmul.f32 %v2802, %v869
      %v2819 = vmul.f32 %v2809, %v869
      %v2820 = vmul.f32 %v2816, %v869
      %v2821 = vsub.f32 %v2781, %v2817
      %v2822 = vsub.f32 %v2782, %v2818
      %v2823 = vsub.f32 %v2783, %v2819
      %v2824 = vsub.f32 %v2784, %v2820
      %v2825 = vsub.f32 %v2785, %v2817
      %v2826 = vsub.f32 %v2786, %v2818
      %v2827 = vsub.f32 %v2787, %v2819
      %v2828 = vsub.f32 %v2788, %v2820
      %v2829 = vmul.f32 %v2821, %v2821
      %v2830 = vmul.f32 %v2822, %v2822
      %v2831 = vmul.f32 %v2823, %v2823
      %v2832 = vmul.f32 %v2824, %v2824
      %v2833 = vmul.f32 %v2825, %v2825
      %v2834 = vmul.f32 %v2826, %v2826
      %v2835 = vmul.f32 %v2827, %v2827
      %v2836 = vmul.f32 %v2828, %v2828
      %v2837 = vadd.f32 %v2829, %v2833
      %v2838 = vrot.slane %v2837, 4
      %v2839 = vadd.f32 %v2837, %v2838
      %v2840 = vrot.slane %v2839, 2
      %v2841 = vadd.f32 %v2839, %v2840
      %v2842 = vrot.slane %v2841, 1
      %v2843 = vadd.f32 %v2841, %v2842
      %v2844 = vadd.f32 %v2830, %v2834
      %v2845 = vrot.slane %v2844, 4
      %v2846 = vadd.f32 %v2844, %v2845
      %v2847 = vrot.slane %v2846, 2
      %v2848 = vadd.f32 %v2846, %v2847
      %v2849 = vrot.slane %v2848, 1
      %v2850 = vadd.f32 %v2848, %v2849
      %v2851 = vadd.f32 %v2831, %v2835
      %v2852 = vrot.slane %v2851, 4
      %v2853 = vadd.f32 %v2851, %v2852
      %v2854 = vrot.slane %v2853, 2
      %v2855 = vadd.f32 %v2853, %v2854
      %v2856 = vrot.slane %v2855, 1
      %v2857 = vadd.f32 %v2855, %v2856
      %v2858 = vadd.f32 %v2832, %v2836
      %v2859 = vrot.slane %v2858, 4
      %v2860 = vadd.f32 %v2858, %v2859
      %v2861 = vrot.slane %v2860, 2
      %v2862 = vadd.f32 %v2860, %v2861
      %v2863 = vrot.slane %v2862, 1
      %v2864 = vadd.f32 %v2862, %v2863
      %v2865 = vmul.f32 %v2843, %v869
      %v2866 = vmul.f32 %v2850, %v869
      %v2867 = vmul.f32 %v2857, %v869
      %v2868 = vmul.f32 %v2864, %v869
      %v2869 = vadd.f32 %v2865, 1e-06
      %v2870 = vadd.f32 %v2866, 1e-06
      %v2871 = vadd.f32 %v2867, 1e-06
      %v2872 = vadd.f32 %v2868, 1e-06
      %v2873 = vrsqrt.pop %v2869
      %v2874 = vrsqrt.pop %v2870
      %v2875 = vrsqrt.pop %v2871
      %v2876 = vrsqrt.pop %v2872
      %v2877 = vmul.f32 %v2821, %v2873
      %v2878 = vmul.f32 %v2822, %v2874
      %v2879 = vmul.f32 %v2823, %v2875
      %v2880 = vmul.f32 %v2824, %v2876
      %v2881 = vmul.f32 %v2825, %v2873
      %v2882 = vmul.f32 %v2826, %v2874
      %v2883 = vmul.f32 %v2827, %v2875
      %v2884 = vmul.f32 %v2828, %v2876
      %2885 = vset.pattern.permute.xlu0 7
      %2886 = vperm.xlu0 %2885, %v394
      %v2887 = vpop.permute.xlu0 %2886
      %2889 = vset.pattern.permute.xlu0 7
      %2890 = vperm.xlu0 %2889, %v395
      %v2891 = vpop.permute.xlu0 %2890
      %v2893 = vmul.f32 %v2877, %v2887
      %v2894 = vmul.f32 %v2878, %v2887
      %v2895 = vmul.f32 %v2879, %v2887
      %v2896 = vmul.f32 %v2880, %v2887
      %v2897 = vmul.f32 %v2881, %v2891
      %v2898 = vmul.f32 %v2882, %v2891
      %v2899 = vmul.f32 %v2883, %v2891
      %v2900 = vmul.f32 %v2884, %v2891
      %2901 = vset.pattern.permute.xlu0 8
      %2902 = vperm.xlu0 %2901, %v394
      %v2903 = vpop.permute.xlu0 %2902
      %2905 = vset.pattern.permute.xlu0 8
      %2906 = vperm.xlu0 %2905, %v395
      %v2907 = vpop.permute.xlu0 %2906
      %v2909 = vadd.f32 %v2893, %v2903
      %v2910 = vadd.f32 %v2894, %v2903
      %v2911 = vadd.f32 %v2895, %v2903
      %v2912 = vadd.f32 %v2896, %v2903
      %v2913 = vadd.f32 %v2897, %v2907
      %v2914 = vadd.f32 %v2898, %v2907
      %v2915 = vadd.f32 %v2899, %v2907
      %v2916 = vadd.f32 %v2900, %v2907
      %v2917 = vld [vmem:[%s8] sm:$0xff]
      %v2918 = vld [vmem:[%s8 + $0x8] sm:$0xff]
      %v2919 = vld [vmem:[%s8 + $0x10] sm:$0xff]
      %v2920 = vld [vmem:[%s8 + $0x18] sm:$0xff]
      %2921 = vset.pattern.permute.xlu0 9
      %2922 = vperm.xlu0 %2921, %v394
      %v2923 = vpop.permute.xlu0 %2922
      %2925 = vset.pattern.permute.xlu0 9
      %2926 = vperm.xlu0 %2925, %v395
      %v2927 = vpop.permute.xlu0 %2926
      %2929 = vset.pattern.permute.xlu0 9
      %2930 = vperm.xlu0 %2929, %v396
      %v2931 = vpop.permute.xlu0 %2930
      %2933 = vset.pattern.permute.xlu0 9
      %2934 = vperm.xlu0 %2933, %v397
      %v2935 = vpop.permute.xlu0 %2934
      %v2938 = vsel %vm992, %v2917, 0
      %v2941 = vsel %vm992, %v2918, 0
      %v2944 = vsel %vm992, %v2919, 0
      %v2947 = vsel %vm992, %v2920, 0
      %2949 = vmatprep.subr.mxu0 0.0
      %2950 = vmatpush1.msra.mxu0 0.0
      %2951 = vmatprep.subr.mxu0 0.0
      %2952 = vmatpush1.msra.mxu0 0.0
      %2953 = vmatprep.subr.mxu0 0.0
      %2954 = vmatpush1.msra.mxu0 0.0
      %2955 = vmatprep.subr.mxu0 0.0
      %2956 = vmatpush1.msra.mxu0 0.0
      %2957 = vmatprep.subr.mxu0 0.0
      %2958 = vmatpush1.msra.mxu0 0.0
      %2959 = vmatprep.subr.mxu0 0.0
      %2960 = vmatpush1.msra.mxu0 0.0
      %2961 = vmatprep.subr.mxu0 0.0
      %2962 = vmatpush1.msra.mxu0 0.0
      %2963 = vmatprep.subr.mxu0 0.0
      %2964 = vmatpush1.msra.mxu0 0.0
      %2965 = vmatprep.subr.mxu0 0.0
      %2966 = vmatpush1.msra.mxu0 0.0
      %2967 = vmatprep.subr.mxu0 0.0
      %2968 = vmatpush1.msra.mxu0 0.0
      %2969 = vmatprep.subr.mxu0 0.0
      %2970 = vmatpush1.msra.mxu0 0.0
      %2971 = vmatprep.subr.mxu0 0.0
      %2972 = vmatpush1.msra.mxu0 0.0
      %2973 = vmatprep.subr.mxu0 0.0
      %2974 = vmatpush1.msra.mxu0 0.0
      %2975 = vmatprep.subr.mxu0 0.0
      %2976 = vmatpush1.msra.mxu0 0.0
      %2977 = vmatprep.subr.mxu0 %v2914
      %2978 = vmatpush1.msra.mxu0 %v2913
      %2979 = vmatprep.subr.mxu0 %v2910
      %2980 = vmatpush1.msra.mxu0 %v2909
      %2981 = vmatprep.subr.mxu0 0.0
      %2982 = vmatpush2.msra.mxu0 0.0
      %2983 = vmatprep.subr.mxu0 0.0
      %2984 = vmatpush2.msra.mxu0 0.0
      %2985 = vmatprep.subr.mxu0 0.0
      %2986 = vmatpush2.msra.mxu0 0.0
      %2987 = vmatprep.subr.mxu0 0.0
      %2988 = vmatpush2.msra.mxu0 0.0
      %2989 = vmatprep.subr.mxu0 0.0
      %2990 = vmatpush2.msra.mxu0 0.0
      %2991 = vmatprep.subr.mxu0 0.0
      %2992 = vmatpush2.msra.mxu0 0.0
      %2993 = vmatprep.subr.mxu0 0.0
      %2994 = vmatpush2.msra.mxu0 0.0
      %2995 = vmatprep.subr.mxu0 0.0
      %2996 = vmatpush2.msra.mxu0 0.0
      %2997 = vmatprep.subr.mxu0 0.0
      %2998 = vmatpush2.msra.mxu0 0.0
      %2999 = vmatprep.subr.mxu0 0.0
      %3000 = vmatpush2.msra.mxu0 0.0
      %3001 = vmatprep.subr.mxu0 0.0
      %3002 = vmatpush2.msra.mxu0 0.0
      %3003 = vmatprep.subr.mxu0 0.0
      %3004 = vmatpush2.msra.mxu0 0.0
      %3005 = vmatprep.subr.mxu0 0.0
      %3006 = vmatpush2.msra.mxu0 0.0
      %3007 = vmatprep.subr.mxu0 0.0
      %3008 = vmatpush2.msra.mxu0 0.0
      %3009 = vmatprep.subr.mxu0 0.0
      %3010 = vmatpush2.msra.mxu0 0.0
      %3011 = vmatprep.subr.mxu0 0.0
      %3012 = vmatpush2.msra.mxu0 0.0
      %3013 = vmatprep.mubr.f32.mxu0 0.0
      %3014 = vmatmul.mubr.f32.gmra.mxu0 %v2938
      %v3015 = vpop.f32.mrf.mxu0
      %v3016 = vadd.f32 %v2923, %v3015
      %v3017 = vpop.f32.mrf.mxu0
      %v3018 = vadd.f32 %v2923, %v3017
      %3019 = vmatprep.mubr.f32.mxu0 0.0
      %3020 = vmatmul.mubr.f32.gmra.mxu0 %v2941
      %v3021 = vpop.f32.mrf.mxu0
      %v3022 = vadd.f32 %v2927, %v3021
      %v3023 = vpop.f32.mrf.mxu0
      %v3024 = vadd.f32 %v2927, %v3023
      %3025 = vmatprep.mubr.f32.mxu0 0.0
      %3026 = vmatmul.mubr.f32.gmra.mxu0 %v2944
      %v3027 = vpop.f32.mrf.mxu0
      %v3028 = vadd.f32 %v2931, %v3027
      %v3029 = vpop.f32.mrf.mxu0
      %v3030 = vadd.f32 %v2931, %v3029
      %3031 = vmatprep.mubr.f32.mxu0 0.0
      %3032 = vmatmul.mubr.f32.gmra.mxu0 %v2947
      %v3033 = vpop.f32.mrf.mxu0
      %v3034 = vadd.f32 %v2935, %v3033
      %v3035 = vpop.f32.mrf.mxu0
      %v3036 = vadd.f32 %v2935, %v3035
      %3037 = vdwg.mxu0
      %3038 = vmatprep.subr.mxu0 0.0
      %3039 = vmatpush1.msra.mxu0 0.0
      %3040 = vmatprep.subr.mxu0 0.0
      %3041 = vmatpush1.msra.mxu0 0.0
      %3042 = vmatprep.subr.mxu0 0.0
      %3043 = vmatpush1.msra.mxu0 0.0
      %3044 = vmatprep.subr.mxu0 0.0
      %3045 = vmatpush1.msra.mxu0 0.0
      %3046 = vmatprep.subr.mxu0 0.0
      %3047 = vmatpush1.msra.mxu0 0.0
      %3048 = vmatprep.subr.mxu0 0.0
      %3049 = vmatpush1.msra.mxu0 0.0
      %3050 = vmatprep.subr.mxu0 0.0
      %3051 = vmatpush1.msra.mxu0 0.0
      %3052 = vmatprep.subr.mxu0 0.0
      %3053 = vmatpush1.msra.mxu0 0.0
      %3054 = vmatprep.subr.mxu0 0.0
      %3055 = vmatpush1.msra.mxu0 0.0
      %3056 = vmatprep.subr.mxu0 0.0
      %3057 = vmatpush1.msra.mxu0 0.0
      %3058 = vmatprep.subr.mxu0 0.0
      %3059 = vmatpush1.msra.mxu0 0.0
      %3060 = vmatprep.subr.mxu0 0.0
      %3061 = vmatpush1.msra.mxu0 0.0
      %3062 = vmatprep.subr.mxu0 0.0
      %3063 = vmatpush1.msra.mxu0 0.0
      %3064 = vmatprep.subr.mxu0 0.0
      %3065 = vmatpush1.msra.mxu0 0.0
      %3066 = vmatprep.subr.mxu0 %v2916
      %3067 = vmatpush1.msra.mxu0 %v2915
      %3068 = vmatprep.subr.mxu0 %v2912
      %3069 = vmatpush1.msra.mxu0 %v2911
      %3070 = vmatprep.subr.mxu0 0.0
      %3071 = vmatpush2.msra.mxu0 0.0
      %3072 = vmatprep.subr.mxu0 0.0
      %3073 = vmatpush2.msra.mxu0 0.0
      %3074 = vmatprep.subr.mxu0 0.0
      %3075 = vmatpush2.msra.mxu0 0.0
      %3076 = vmatprep.subr.mxu0 0.0
      %3077 = vmatpush2.msra.mxu0 0.0
      %3078 = vmatprep.subr.mxu0 0.0
      %3079 = vmatpush2.msra.mxu0 0.0
      %3080 = vmatprep.subr.mxu0 0.0
      %3081 = vmatpush2.msra.mxu0 0.0
      %3082 = vmatprep.subr.mxu0 0.0
      %3083 = vmatpush2.msra.mxu0 0.0
      %3084 = vmatprep.subr.mxu0 0.0
      %3085 = vmatpush2.msra.mxu0 0.0
      %3086 = vmatprep.subr.mxu0 0.0
      %3087 = vmatpush2.msra.mxu0 0.0
      %3088 = vmatprep.subr.mxu0 0.0
      %3089 = vmatpush2.msra.mxu0 0.0
      %3090 = vmatprep.subr.mxu0 0.0
      %3091 = vmatpush2.msra.mxu0 0.0
      %3092 = vmatprep.subr.mxu0 0.0
      %3093 = vmatpush2.msra.mxu0 0.0
      %3094 = vmatprep.subr.mxu0 0.0
      %3095 = vmatpush2.msra.mxu0 0.0
      %3096 = vmatprep.subr.mxu0 0.0
      %3097 = vmatpush2.msra.mxu0 0.0
      %3098 = vmatprep.subr.mxu0 0.0
      %3099 = vmatpush2.msra.mxu0 0.0
      %3100 = vmatprep.subr.mxu0 0.0
      %3101 = vmatpush2.msra.mxu0 0.0
      %3102 = vmatprep.mubr.f32.mxu0 0.0
      %3103 = vmatmul.mubr.f32.gmra.mxu0 %v2938
      %v3104 = vpop.f32.mrf.mxu0
      %v3105 = vadd.f32 %v2923, %v3104
      %v3106 = vpop.f32.mrf.mxu0
      %v3107 = vadd.f32 %v2923, %v3106
      %3108 = vmatprep.mubr.f32.mxu0 0.0
      %3109 = vmatmul.mubr.f32.gmra.mxu0 %v2941
      %v3110 = vpop.f32.mrf.mxu0
      %v3111 = vadd.f32 %v2927, %v3110
      %v3112 = vpop.f32.mrf.mxu0
      %v3113 = vadd.f32 %v2927, %v3112
      %3114 = vmatprep.mubr.f32.mxu0 0.0
      %3115 = vmatmul.mubr.f32.gmra.mxu0 %v2944
      %v3116 = vpop.f32.mrf.mxu0
      %v3117 = vadd.f32 %v2931, %v3116
      %v3118 = vpop.f32.mrf.mxu0
      %v3119 = vadd.f32 %v2931, %v3118
      %3120 = vmatprep.mubr.f32.mxu0 0.0
      %3121 = vmatmul.mubr.f32.gmra.mxu0 %v2947
      %v3122 = vpop.f32.mrf.mxu0
      %v3123 = vadd.f32 %v2935, %v3122
      %v3124 = vpop.f32.mrf.mxu0
      %v3125 = vadd.f32 %v2935, %v3124
      %3126 = vdwg.mxu0
      %v3127 = vmul.f32 %v3016, %v3028
      %v3128 = vmul.f32 %v3018, %v3030
      %v3129 = vmul.f32 %v3105, %v3117
      %v3130 = vmul.f32 %v3107, %v3119
      %v3131 = vmul.f32 %v3022, %v3034
      %v3132 = vmul.f32 %v3024, %v3036
      %v3133 = vmul.f32 %v3111, %v3123
      %v3134 = vmul.f32 %v3113, %v3125
      %v3135 = vmul.f32 %v3127, %v3127
      %v3136 = vmul.f32 %v3128, %v3128
      %v3137 = vmul.f32 %v3129, %v3129
      %v3138 = vmul.f32 %v3130, %v3130
      %v3139 = vmul.f32 %v3131, %v3131
      %v3140 = vmul.f32 %v3132, %v3132
      %v3141 = vmul.f32 %v3133, %v3133
      %v3142 = vmul.f32 %v3134, %v3134
      %v3143 = vadd.f32 %v3135, %v3139
      %v3144 = vrot.slane %v3143, 4
      %v3145 = vadd.f32 %v3143, %v3144
      %v3146 = vrot.slane %v3145, 2
      %v3147 = vadd.f32 %v3145, %v3146
      %v3148 = vrot.slane %v3147, 1
      %v3149 = vadd.f32 %v3147, %v3148
      %v3150 = vadd.f32 %v3136, %v3140
      %v3151 = vrot.slane %v3150, 4
      %v3152 = vadd.f32 %v3150, %v3151
      %v3153 = vrot.slane %v3152, 2
      %v3154 = vadd.f32 %v3152, %v3153
      %v3155 = vrot.slane %v3154, 1
      %v3156 = vadd.f32 %v3154, %v3155
      %v3157 = vadd.f32 %v3137, %v3141
      %v3158 = vrot.slane %v3157, 4
      %v3159 = vadd.f32 %v3157, %v3158
      %v3160 = vrot.slane %v3159, 2
      %v3161 = vadd.f32 %v3159, %v3160
      %v3162 = vrot.slane %v3161, 1
      %v3163 = vadd.f32 %v3161, %v3162
      %v3164 = vadd.f32 %v3138, %v3142
      %v3165 = vrot.slane %v3164, 4
      %v3166 = vadd.f32 %v3164, %v3165
      %v3167 = vrot.slane %v3166, 2
      %v3168 = vadd.f32 %v3166, %v3167
      %v3169 = vrot.slane %v3168, 1
      %v3170 = vadd.f32 %v3168, %v3169
      %v3171 = vadd.f32 %v3149, 1e-12
      %v3172 = vadd.f32 %v3156, 1e-12
      %v3173 = vadd.f32 %v3163, 1e-12
      %v3174 = vadd.f32 %v3170, 1e-12
      %v3175 = vrsqrt.pop %v3171
      %v3176 = vrsqrt.pop %v3172
      %v3177 = vrsqrt.pop %v3173
      %v3178 = vrsqrt.pop %v3174
      %3179 = vset.pattern.permute.xlu0 14
      %3180 = vperm.xlu0 %3179, %v394
      %v3181 = vpop.permute.xlu0 %3180
      %3183 = vset.pattern.permute.xlu0 14
      %3184 = vperm.xlu0 %3183, %v395
      %v3185 = vpop.permute.xlu0 %3184
      %v3187 = vmul.f32 %v3181, %v3127
      %v3188 = vmul.f32 %v3181, %v3128
      %v3189 = vmul.f32 %v3181, %v3129
      %v3190 = vmul.f32 %v3181, %v3130
      %v3191 = vmul.f32 %v3185, %v3131
      %v3192 = vmul.f32 %v3185, %v3132
      %v3193 = vmul.f32 %v3185, %v3133
      %v3194 = vmul.f32 %v3185, %v3134
      %v3195 = vadd.f32 %v3187, %v3191
      %v3196 = vrot.slane %v3195, 4
      %v3197 = vadd.f32 %v3195, %v3196
      %v3198 = vrot.slane %v3197, 2
      %v3199 = vadd.f32 %v3197, %v3198
      %v3200 = vrot.slane %v3199, 1
      %v3201 = vadd.f32 %v3199, %v3200
      %v3202 = vadd.f32 %v3188, %v3192
      %v3203 = vrot.slane %v3202, 4
      %v3204 = vadd.f32 %v3202, %v3203
      %v3205 = vrot.slane %v3204, 2
      %v3206 = vadd.f32 %v3204, %v3205
      %v3207 = vrot.slane %v3206, 1
      %v3208 = vadd.f32 %v3206, %v3207
      %v3209 = vadd.f32 %v3189, %v3193
      %v3210 = vrot.slane %v3209, 4
      %v3211 = vadd.f32 %v3209, %v3210
      %v3212 = vrot.slane %v3211, 2
      %v3213 = vadd.f32 %v3211, %v3212
      %v3214 = vrot.slane %v3213, 1
      %v3215 = vadd.f32 %v3213, %v3214
      %v3216 = vadd.f32 %v3190, %v3194
      %v3217 = vrot.slane %v3216, 4
      %v3218 = vadd.f32 %v3216, %v3217
      %v3219 = vrot.slane %v3218, 2
      %v3220 = vadd.f32 %v3218, %v3219
      %v3221 = vrot.slane %v3220, 1
      %v3222 = vadd.f32 %v3220, %v3221
      %v3223 = vmul.f32 %v3201, %v3175
      %v3224 = vmul.f32 %v3208, %v3176
      %v3225 = vmul.f32 %v3215, %v3177
      %v3226 = vmul.f32 %v3222, %v3178
      %v3227 = vmul.f32 %v3127, %v3223
      %v3228 = vmul.f32 %v3128, %v3224
      %v3229 = vmul.f32 %v3129, %v3225
      %v3230 = vmul.f32 %v3130, %v3226
      %v3231 = vmul.f32 %v3131, %v3223
      %v3232 = vmul.f32 %v3132, %v3224
      %v3233 = vmul.f32 %v3133, %v3225
      %v3234 = vmul.f32 %v3134, %v3226
      %v3235 = vld [vmem:[%s9] sm:$0xff]
      %v3236 = vld [vmem:[%s9 + $0x8] sm:$0xff]
      %3237 = vset.pattern.permute.xlu0 10
      %3238 = vperm.xlu0 %3237, %v394
      %v3239 = vpop.permute.xlu0 %3238
      %3241 = vset.pattern.permute.xlu0 10
      %3242 = vperm.xlu0 %3241, %v395
      %v3243 = vpop.permute.xlu0 %3242
      %v3246 = vsel %vm992, %v3235, 0
      %v3249 = vsel %vm992, %v3236, 0
      %3251 = vmatprep.subr.mxu0 0.0
      %3252 = vmatpush1.msra.mxu0 0.0
      %3253 = vmatprep.subr.mxu0 0.0
      %3254 = vmatpush1.msra.mxu0 0.0
      %3255 = vmatprep.subr.mxu0 0.0
      %3256 = vmatpush1.msra.mxu0 0.0
      %3257 = vmatprep.subr.mxu0 0.0
      %3258 = vmatpush1.msra.mxu0 0.0
      %3259 = vmatprep.subr.mxu0 0.0
      %3260 = vmatpush1.msra.mxu0 0.0
      %3261 = vmatprep.subr.mxu0 0.0
      %3262 = vmatpush1.msra.mxu0 0.0
      %3263 = vmatprep.subr.mxu0 0.0
      %3264 = vmatpush1.msra.mxu0 0.0
      %3265 = vmatprep.subr.mxu0 0.0
      %3266 = vmatpush1.msra.mxu0 0.0
      %3267 = vmatprep.subr.mxu0 0.0
      %3268 = vmatpush1.msra.mxu0 0.0
      %3269 = vmatprep.subr.mxu0 0.0
      %3270 = vmatpush1.msra.mxu0 0.0
      %3271 = vmatprep.subr.mxu0 0.0
      %3272 = vmatpush1.msra.mxu0 0.0
      %3273 = vmatprep.subr.mxu0 0.0
      %3274 = vmatpush1.msra.mxu0 0.0
      %3275 = vmatprep.subr.mxu0 0.0
      %3276 = vmatpush1.msra.mxu0 0.0
      %3277 = vmatprep.subr.mxu0 0.0
      %3278 = vmatpush1.msra.mxu0 0.0
      %3279 = vmatprep.subr.mxu0 %v3232
      %3280 = vmatpush1.msra.mxu0 %v3231
      %3281 = vmatprep.subr.mxu0 %v3228
      %3282 = vmatpush1.msra.mxu0 %v3227
      %3283 = vmatprep.subr.mxu0 0.0
      %3284 = vmatpush2.msra.mxu0 0.0
      %3285 = vmatprep.subr.mxu0 0.0
      %3286 = vmatpush2.msra.mxu0 0.0
      %3287 = vmatprep.subr.mxu0 0.0
      %3288 = vmatpush2.msra.mxu0 0.0
      %3289 = vmatprep.subr.mxu0 0.0
      %3290 = vmatpush2.msra.mxu0 0.0
      %3291 = vmatprep.subr.mxu0 0.0
      %3292 = vmatpush2.msra.mxu0 0.0
      %3293 = vmatprep.subr.mxu0 0.0
      %3294 = vmatpush2.msra.mxu0 0.0
      %3295 = vmatprep.subr.mxu0 0.0
      %3296 = vmatpush2.msra.mxu0 0.0
      %3297 = vmatprep.subr.mxu0 0.0
      %3298 = vmatpush2.msra.mxu0 0.0
      %3299 = vmatprep.subr.mxu0 0.0
      %3300 = vmatpush2.msra.mxu0 0.0
      %3301 = vmatprep.subr.mxu0 0.0
      %3302 = vmatpush2.msra.mxu0 0.0
      %3303 = vmatprep.subr.mxu0 0.0
      %3304 = vmatpush2.msra.mxu0 0.0
      %3305 = vmatprep.subr.mxu0 0.0
      %3306 = vmatpush2.msra.mxu0 0.0
      %3307 = vmatprep.subr.mxu0 0.0
      %3308 = vmatpush2.msra.mxu0 0.0
      %3309 = vmatprep.subr.mxu0 0.0
      %3310 = vmatpush2.msra.mxu0 0.0
      %3311 = vmatprep.subr.mxu0 0.0
      %3312 = vmatpush2.msra.mxu0 0.0
      %3313 = vmatprep.subr.mxu0 0.0
      %3314 = vmatpush2.msra.mxu0 0.0
      %3315 = vmatprep.mubr.f32.mxu0 0.0
      %3316 = vmatmul.mubr.f32.gmra.mxu0 %v3246
      %v3317 = vpop.f32.mrf.mxu0
      %v3318 = vadd.f32 %v3239, %v3317
      %v3319 = vpop.f32.mrf.mxu0
      %v3320 = vadd.f32 %v3239, %v3319
      %3321 = vmatprep.mubr.f32.mxu0 0.0
      %3322 = vmatmul.mubr.f32.gmra.mxu0 %v3249
      %v3323 = vpop.f32.mrf.mxu0
      %v3324 = vadd.f32 %v3243, %v3323
      %v3325 = vpop.f32.mrf.mxu0
      %v3326 = vadd.f32 %v3243, %v3325
      %3327 = vdwg.mxu0
      %3328 = vmatprep.subr.mxu0 0.0
      %3329 = vmatpush1.msra.mxu0 0.0
      %3330 = vmatprep.subr.mxu0 0.0
      %3331 = vmatpush1.msra.mxu0 0.0
      %3332 = vmatprep.subr.mxu0 0.0
      %3333 = vmatpush1.msra.mxu0 0.0
      %3334 = vmatprep.subr.mxu0 0.0
      %3335 = vmatpush1.msra.mxu0 0.0
      %3336 = vmatprep.subr.mxu0 0.0
      %3337 = vmatpush1.msra.mxu0 0.0
      %3338 = vmatprep.subr.mxu0 0.0
      %3339 = vmatpush1.msra.mxu0 0.0
      %3340 = vmatprep.subr.mxu0 0.0
      %3341 = vmatpush1.msra.mxu0 0.0
      %3342 = vmatprep.subr.mxu0 0.0
      %3343 = vmatpush1.msra.mxu0 0.0
      %3344 = vmatprep.subr.mxu0 0.0
      %3345 = vmatpush1.msra.mxu0 0.0
      %3346 = vmatprep.subr.mxu0 0.0
      %3347 = vmatpush1.msra.mxu0 0.0
      %3348 = vmatprep.subr.mxu0 0.0
      %3349 = vmatpush1.msra.mxu0 0.0
      %3350 = vmatprep.subr.mxu0 0.0
      %3351 = vmatpush1.msra.mxu0 0.0
      %3352 = vmatprep.subr.mxu0 0.0
      %3353 = vmatpush1.msra.mxu0 0.0
      %3354 = vmatprep.subr.mxu0 0.0
      %3355 = vmatpush1.msra.mxu0 0.0
      %3356 = vmatprep.subr.mxu0 %v3234
      %3357 = vmatpush1.msra.mxu0 %v3233
      %3358 = vmatprep.subr.mxu0 %v3230
      %3359 = vmatpush1.msra.mxu0 %v3229
      %3360 = vmatprep.subr.mxu0 0.0
      %3361 = vmatpush2.msra.mxu0 0.0
      %3362 = vmatprep.subr.mxu0 0.0
      %3363 = vmatpush2.msra.mxu0 0.0
      %3364 = vmatprep.subr.mxu0 0.0
      %3365 = vmatpush2.msra.mxu0 0.0
      %3366 = vmatprep.subr.mxu0 0.0
      %3367 = vmatpush2.msra.mxu0 0.0
      %3368 = vmatprep.subr.mxu0 0.0
      %3369 = vmatpush2.msra.mxu0 0.0
      %3370 = vmatprep.subr.mxu0 0.0
      %3371 = vmatpush2.msra.mxu0 0.0
      %3372 = vmatprep.subr.mxu0 0.0
      %3373 = vmatpush2.msra.mxu0 0.0
      %3374 = vmatprep.subr.mxu0 0.0
      %3375 = vmatpush2.msra.mxu0 0.0
      %3376 = vmatprep.subr.mxu0 0.0
      %3377 = vmatpush2.msra.mxu0 0.0
      %3378 = vmatprep.subr.mxu0 0.0
      %3379 = vmatpush2.msra.mxu0 0.0
      %3380 = vmatprep.subr.mxu0 0.0
      %3381 = vmatpush2.msra.mxu0 0.0
      %3382 = vmatprep.subr.mxu0 0.0
      %3383 = vmatpush2.msra.mxu0 0.0
      %3384 = vmatprep.subr.mxu0 0.0
      %3385 = vmatpush2.msra.mxu0 0.0
      %3386 = vmatprep.subr.mxu0 0.0
      %3387 = vmatpush2.msra.mxu0 0.0
      %3388 = vmatprep.subr.mxu0 0.0
      %3389 = vmatpush2.msra.mxu0 0.0
      %3390 = vmatprep.subr.mxu0 0.0
      %3391 = vmatpush2.msra.mxu0 0.0
      %3392 = vmatprep.mubr.f32.mxu0 0.0
      %3393 = vmatmul.mubr.f32.gmra.mxu0 %v3246
      %v3394 = vpop.f32.mrf.mxu0
      %v3395 = vadd.f32 %v3239, %v3394
      %v3396 = vpop.f32.mrf.mxu0
      %v3397 = vadd.f32 %v3239, %v3396
      %3398 = vmatprep.mubr.f32.mxu0 0.0
      %3399 = vmatmul.mubr.f32.gmra.mxu0 %v3249
      %v3400 = vpop.f32.mrf.mxu0
      %v3401 = vadd.f32 %v3243, %v3400
      %v3402 = vpop.f32.mrf.mxu0
      %v3403 = vadd.f32 %v3243, %v3402
      %3404 = vdwg.mxu0
      %3405 = vset.pattern.permute.xlu0 12
      %3406 = vperm.xlu0 %3405, %v394
      %v3407 = vpop.permute.xlu0 %3406
      %3409 = vset.pattern.permute.xlu0 12
      %3410 = vperm.xlu0 %3409, %v395
      %v3411 = vpop.permute.xlu0 %3410
      %v3413 = vmul.f32 %v3318, %v3407
      %v3414 = vmul.f32 %v3320, %v3407
      %v3415 = vmul.f32 %v3395, %v3407
      %v3416 = vmul.f32 %v3397, %v3407
      %v3417 = vmul.f32 %v3324, %v3411
      %v3418 = vmul.f32 %v3326, %v3411
      %v3419 = vmul.f32 %v3401, %v3411
      %v3420 = vmul.f32 %v3403, %v3411
      %v3421 = vadd.f32 %v2781, %v3413
      %v3422 = vadd.f32 %v2782, %v3414
      %v3423 = vadd.f32 %v2783, %v3415
      %v3424 = vadd.f32 %v2784, %v3416
      %v3425 = vadd.f32 %v2785, %v3417
      %v3426 = vadd.f32 %v2786, %v3418
      %v3427 = vadd.f32 %v2787, %v3419
      %v3428 = vadd.f32 %v2788, %v3420
      %v3429 = vld [vmem:[%s10] sm:$0xff]
      %v3430 = vld [vmem:[%s10 + $0x8] sm:$0xff]
      %3431 = vrot.lane.b32.xlu0 %v3421, 17
      %v3432 = vpop.permute.xlu0 %3431
      %3433 = vrot.lane.b32.xlu0 %v3425, 17
      %v3434 = vpop.permute.xlu0 %3433
      %3435 = vrot.lane.b32.xlu0 %v3422, 17
      %v3436 = vpop.permute.xlu0 %3435
      %3437 = vrot.lane.b32.xlu0 %v3426, 17
      %v3438 = vpop.permute.xlu0 %3437
      %3439 = vrot.lane.b32.xlu0 %v3423, 17
      %v3440 = vpop.permute.xlu0 %3439
      %3441 = vrot.lane.b32.xlu0 %v3427, 17
      %v3442 = vpop.permute.xlu0 %3441
      %3443 = vrot.lane.b32.xlu0 %v3424, 17
      %v3444 = vpop.permute.xlu0 %3443
      %3445 = vrot.lane.b32.xlu0 %v3428, 17
      %v3446 = vpop.permute.xlu0 %3445
      %v3447 = vsel %vm414, %v3440, %v3444
      %v3448 = vsel %vm414, %v3442, %v3446
      %v3449 = vsel %vm414, %v3436, %v3440
      %v3450 = vsel %vm414, %v3438, %v3442
      %v3451 = vsel %vm414, %v3432, %v3436
      %v3452 = vsel %vm414, %v3434, %v3438
      %v3453 = vsel %vm414, %v3444, %v3432
      %v3454 = vsel %vm414, %v3446, %v3434
      %v3455 = vmul.f32 %v3453, %v422
      %v3456 = vmul.f32 %v3451, %v426
      %v3457 = vmul.f32 %v3449, %v430
      %v3458 = vmul.f32 %v3447, %v434
      %v3459 = vmul.f32 %v3454, %v422
      %v3460 = vmul.f32 %v3452, %v426
      %v3461 = vmul.f32 %v3450, %v430
      %v3462 = vmul.f32 %v3448, %v434
      %3463 = vrot.lane.b32.xlu0 %v3421, 16
      %v3464 = vpop.permute.xlu0 %3463
      %3465 = vrot.lane.b32.xlu0 %v3425, 16
      %v3466 = vpop.permute.xlu0 %3465
      %3467 = vrot.lane.b32.xlu0 %v3422, 16
      %v3468 = vpop.permute.xlu0 %3467
      %3469 = vrot.lane.b32.xlu0 %v3426, 16
      %v3470 = vpop.permute.xlu0 %3469
      %3471 = vrot.lane.b32.xlu0 %v3423, 16
      %v3472 = vpop.permute.xlu0 %3471
      %3473 = vrot.lane.b32.xlu0 %v3427, 16
      %v3474 = vpop.permute.xlu0 %3473
      %3475 = vrot.lane.b32.xlu0 %v3424, 16
      %v3476 = vpop.permute.xlu0 %3475
      %3477 = vrot.lane.b32.xlu0 %v3428, 16
      %v3478 = vpop.permute.xlu0 %3477
      %v3479 = vsel %vm447, %v3472, %v3476
      %v3480 = vsel %vm447, %v3474, %v3478
      %v3481 = vsel %vm447, %v3468, %v3472
      %v3482 = vsel %vm447, %v3470, %v3474
      %v3483 = vsel %vm447, %v3464, %v3468
      %v3484 = vsel %vm447, %v3466, %v3470
      %v3485 = vsel %vm447, %v3476, %v3464
      %v3486 = vsel %vm447, %v3478, %v3466
      %v3487 = vmul.f32 %v3485, %v455
      %v3488 = vmul.f32 %v3483, %v459
      %v3489 = vmul.f32 %v3481, %v463
      %v3490 = vmul.f32 %v3479, %v467
      %v3491 = vmul.f32 %v3486, %v455
      %v3492 = vmul.f32 %v3484, %v459
      %v3493 = vmul.f32 %v3482, %v463
      %v3494 = vmul.f32 %v3480, %v467
      %3495 = vrot.lane.b32.xlu0 %v3421, 15
      %v3496 = vpop.permute.xlu0 %3495
      %3497 = vrot.lane.b32.xlu0 %v3425, 15
      %v3498 = vpop.permute.xlu0 %3497
      %3499 = vrot.lane.b32.xlu0 %v3422, 15
      %v3500 = vpop.permute.xlu0 %3499
      %3501 = vrot.lane.b32.xlu0 %v3426, 15
      %v3502 = vpop.permute.xlu0 %3501
      %3503 = vrot.lane.b32.xlu0 %v3423, 15
      %v3504 = vpop.permute.xlu0 %3503
      %3505 = vrot.lane.b32.xlu0 %v3427, 15
      %v3506 = vpop.permute.xlu0 %3505
      %3507 = vrot.lane.b32.xlu0 %v3424, 15
      %v3508 = vpop.permute.xlu0 %3507
      %3509 = vrot.lane.b32.xlu0 %v3428, 15
      %v3510 = vpop.permute.xlu0 %3509
      %v3511 = vsel %vm480, %v3504, %v3508
      %v3512 = vsel %vm480, %v3506, %v3510
      %v3513 = vsel %vm480, %v3500, %v3504
      %v3514 = vsel %vm480, %v3502, %v3506
      %v3515 = vsel %vm480, %v3496, %v3500
      %v3516 = vsel %vm480, %v3498, %v3502
      %v3517 = vsel %vm480, %v3508, %v3496
      %v3518 = vsel %vm480, %v3510, %v3498
      %v3519 = vmul.f32 %v3517, %v488
      %v3520 = vmul.f32 %v3515, %v492
      %v3521 = vmul.f32 %v3513, %v496
      %v3522 = vmul.f32 %v3511, %v500
      %v3523 = vmul.f32 %v3518, %v488
      %v3524 = vmul.f32 %v3516, %v492
      %v3525 = vmul.f32 %v3514, %v496
      %v3526 = vmul.f32 %v3512, %v500
      %3527 = vrot.lane.b32.xlu0 %v3421, 1
      %v3528 = vpop.permute.xlu0 %3527
      %3529 = vrot.lane.b32.xlu0 %v3425, 1
      %v3530 = vpop.permute.xlu0 %3529
      %3531 = vrot.lane.b32.xlu0 %v3422, 1
      %v3532 = vpop.permute.xlu0 %3531
      %3533 = vrot.lane.b32.xlu0 %v3426, 1
      %v3534 = vpop.permute.xlu0 %3533
      %3535 = vrot.lane.b32.xlu0 %v3423, 1
      %v3536 = vpop.permute.xlu0 %3535
      %3537 = vrot.lane.b32.xlu0 %v3427, 1
      %v3538 = vpop.permute.xlu0 %3537
      %3539 = vrot.lane.b32.xlu0 %v3424, 1
      %v3540 = vpop.permute.xlu0 %3539
      %3541 = vrot.lane.b32.xlu0 %v3428, 1
      %v3542 = vpop.permute.xlu0 %3541
      %v3543 = vsel %vm513, %v3536, %v3540
      %v3544 = vsel %vm513, %v3538, %v3542
      %v3545 = vsel %vm513, %v3532, %v3536
      %v3546 = vsel %vm513, %v3534, %v3538
      %v3547 = vsel %vm513, %v3528, %v3532
      %v3548 = vsel %vm513, %v3530, %v3534
      %v3549 = vsel %vm513, %v3540, %v3528
      %v3550 = vsel %vm513, %v3542, %v3530
      %v3551 = vmul.f32 %v3549, %v521
      %v3552 = vmul.f32 %v3547, %v525
      %v3553 = vmul.f32 %v3545, %v529
      %v3554 = vmul.f32 %v3543, %v533
      %v3555 = vmul.f32 %v3550, %v521
      %v3556 = vmul.f32 %v3548, %v525
      %v3557 = vmul.f32 %v3546, %v529
      %v3558 = vmul.f32 %v3544, %v533
      %3559 = vrot.lane.b32.xlu0 %v3421, 127
      %v3560 = vpop.permute.xlu0 %3559
      %3561 = vrot.lane.b32.xlu0 %v3425, 127
      %v3562 = vpop.permute.xlu0 %3561
      %3563 = vrot.lane.b32.xlu0 %v3422, 127
      %v3564 = vpop.permute.xlu0 %3563
      %3565 = vrot.lane.b32.xlu0 %v3426, 127
      %v3566 = vpop.permute.xlu0 %3565
      %3567 = vrot.lane.b32.xlu0 %v3423, 127
      %v3568 = vpop.permute.xlu0 %3567
      %3569 = vrot.lane.b32.xlu0 %v3427, 127
      %v3570 = vpop.permute.xlu0 %3569
      %3571 = vrot.lane.b32.xlu0 %v3424, 127
      %v3572 = vpop.permute.xlu0 %3571
      %3573 = vrot.lane.b32.xlu0 %v3428, 127
      %v3574 = vpop.permute.xlu0 %3573
      %v3575 = vsel %vm546, %v3568, %v3572
      %v3576 = vsel %vm546, %v3570, %v3574
      %v3577 = vsel %vm546, %v3564, %v3568
      %v3578 = vsel %vm546, %v3566, %v3570
      %v3579 = vsel %vm546, %v3560, %v3564
      %v3580 = vsel %vm546, %v3562, %v3566
      %v3581 = vsel %vm546, %v3572, %v3560
      %v3582 = vsel %vm546, %v3574, %v3562
      %v3583 = vmul.f32 %v3579, %v554
      %v3584 = vmul.f32 %v3577, %v558
      %v3585 = vmul.f32 %v3575, %v562
      %v3586 = vmul.f32 %v3581, %v566
      %v3587 = vmul.f32 %v3580, %v554
      %v3588 = vmul.f32 %v3578, %v558
      %v3589 = vmul.f32 %v3576, %v562
      %v3590 = vmul.f32 %v3582, %v566
      %3591 = vrot.lane.b32.xlu0 %v3421, 113
      %v3592 = vpop.permute.xlu0 %3591
      %3593 = vrot.lane.b32.xlu0 %v3425, 113
      %v3594 = vpop.permute.xlu0 %3593
      %3595 = vrot.lane.b32.xlu0 %v3422, 113
      %v3596 = vpop.permute.xlu0 %3595
      %3597 = vrot.lane.b32.xlu0 %v3426, 113
      %v3598 = vpop.permute.xlu0 %3597
      %3599 = vrot.lane.b32.xlu0 %v3423, 113
      %v3600 = vpop.permute.xlu0 %3599
      %3601 = vrot.lane.b32.xlu0 %v3427, 113
      %v3602 = vpop.permute.xlu0 %3601
      %3603 = vrot.lane.b32.xlu0 %v3424, 113
      %v3604 = vpop.permute.xlu0 %3603
      %3605 = vrot.lane.b32.xlu0 %v3428, 113
      %v3606 = vpop.permute.xlu0 %3605
      %v3607 = vsel %vm579, %v3600, %v3604
      %v3608 = vsel %vm579, %v3602, %v3606
      %v3609 = vsel %vm579, %v3596, %v3600
      %v3610 = vsel %vm579, %v3598, %v3602
      %v3611 = vsel %vm579, %v3592, %v3596
      %v3612 = vsel %vm579, %v3594, %v3598
      %v3613 = vsel %vm579, %v3604, %v3592
      %v3614 = vsel %vm579, %v3606, %v3594
      %v3615 = vmul.f32 %v3611, %v587
      %v3616 = vmul.f32 %v3609, %v591
      %v3617 = vmul.f32 %v3607, %v595
      %v3618 = vmul.f32 %v3613, %v599
      %v3619 = vmul.f32 %v3612, %v587
      %v3620 = vmul.f32 %v3610, %v591
      %v3621 = vmul.f32 %v3608, %v595
      %v3622 = vmul.f32 %v3614, %v599
      %3623 = vrot.lane.b32.xlu0 %v3421, 112
      %v3624 = vpop.permute.xlu0 %3623
      %3625 = vrot.lane.b32.xlu0 %v3425, 112
      %v3626 = vpop.permute.xlu0 %3625
      %3627 = vrot.lane.b32.xlu0 %v3422, 112
      %v3628 = vpop.permute.xlu0 %3627
      %3629 = vrot.lane.b32.xlu0 %v3426, 112
      %v3630 = vpop.permute.xlu0 %3629
      %3631 = vrot.lane.b32.xlu0 %v3423, 112
      %v3632 = vpop.permute.xlu0 %3631
      %3633 = vrot.lane.b32.xlu0 %v3427, 112
      %v3634 = vpop.permute.xlu0 %3633
      %3635 = vrot.lane.b32.xlu0 %v3424, 112
      %v3636 = vpop.permute.xlu0 %3635
      %3637 = vrot.lane.b32.xlu0 %v3428, 112
      %v3638 = vpop.permute.xlu0 %3637
      %v3639 = vsel %vm612, %v3632, %v3636
      %v3640 = vsel %vm612, %v3634, %v3638
      %v3641 = vsel %vm612, %v3628, %v3632
      %v3642 = vsel %vm612, %v3630, %v3634
      %v3643 = vsel %vm612, %v3624, %v3628
      %v3644 = vsel %vm612, %v3626, %v3630
      %v3645 = vsel %vm612, %v3636, %v3624
      %v3646 = vsel %vm612, %v3638, %v3626
      %v3647 = vmul.f32 %v3643, %v620
      %v3648 = vmul.f32 %v3641, %v624
      %v3649 = vmul.f32 %v3639, %v628
      %v3650 = vmul.f32 %v3645, %v632
      %v3651 = vmul.f32 %v3644, %v620
      %v3652 = vmul.f32 %v3642, %v624
      %v3653 = vmul.f32 %v3640, %v628
      %v3654 = vmul.f32 %v3646, %v632
      %3655 = vrot.lane.b32.xlu0 %v3421, 111
      %v3656 = vpop.permute.xlu0 %3655
      %3657 = vrot.lane.b32.xlu0 %v3425, 111
      %v3658 = vpop.permute.xlu0 %3657
      %3659 = vrot.lane.b32.xlu0 %v3422, 111
      %v3660 = vpop.permute.xlu0 %3659
      %3661 = vrot.lane.b32.xlu0 %v3426, 111
      %v3662 = vpop.permute.xlu0 %3661
      %3663 = vrot.lane.b32.xlu0 %v3423, 111
      %v3664 = vpop.permute.xlu0 %3663
      %3665 = vrot.lane.b32.xlu0 %v3427, 111
      %v3666 = vpop.permute.xlu0 %3665
      %3667 = vrot.lane.b32.xlu0 %v3424, 111
      %v3668 = vpop.permute.xlu0 %3667
      %3669 = vrot.lane.b32.xlu0 %v3428, 111
      %v3670 = vpop.permute.xlu0 %3669
      %v3671 = vsel %vm645, %v3664, %v3668
      %v3672 = vsel %vm645, %v3666, %v3670
      %v3673 = vsel %vm645, %v3660, %v3664
      %v3674 = vsel %vm645, %v3662, %v3666
      %v3675 = vsel %vm645, %v3656, %v3660
      %v3676 = vsel %vm645, %v3658, %v3662
      %v3677 = vsel %vm645, %v3668, %v3656
      %v3678 = vsel %vm645, %v3670, %v3658
      %v3679 = vmul.f32 %v3675, %v653
      %v3680 = vmul.f32 %v3673, %v657
      %v3681 = vmul.f32 %v3671, %v661
      %v3682 = vmul.f32 %v3677, %v665
      %v3683 = vmul.f32 %v3676, %v653
      %v3684 = vmul.f32 %v3674, %v657
      %v3685 = vmul.f32 %v3672, %v661
      %v3686 = vmul.f32 %v3678, %v665
      %3687 = vset.pattern.permute.xlu0 13
      %3688 = vperm.xlu0 %3687, %v394
      %v3689 = vpop.permute.xlu0 %3688
      %v3692 = vsel %vm992, %v3430, 0
      %3694 = vmatprep.subr.mxu0 %v3652
      %3695 = vmatpush1.msra.mxu0 %v3651
      %3696 = vmatprep.subr.mxu0 %v3648
      %3697 = vmatpush1.msra.mxu0 %v3647
      %3698 = vmatprep.subr.mxu0 %v3620
      %3699 = vmatpush1.msra.mxu0 %v3619
      %3700 = vmatprep.subr.mxu0 %v3616
      %3701 = vmatpush1.msra.mxu0 %v3615
      %3702 = vmatprep.subr.mxu0 %v3588
      %3703 = vmatpush1.msra.mxu0 %v3587
      %3704 = vmatprep.subr.mxu0 %v3584
      %3705 = vmatpush1.msra.mxu0 %v3583
      %3706 = vmatprep.subr.mxu0 %v3426
      %3707 = vmatpush1.msra.mxu0 %v3425
      %3708 = vmatprep.subr.mxu0 %v3422
      %3709 = vmatpush1.msra.mxu0 %v3421
      %3710 = vmatprep.subr.mxu0 %v3556
      %3711 = vmatpush1.msra.mxu0 %v3555
      %3712 = vmatprep.subr.mxu0 %v3552
      %3713 = vmatpush1.msra.mxu0 %v3551
      %3714 = vmatprep.subr.mxu0 %v3524
      %3715 = vmatpush1.msra.mxu0 %v3523
      %3716 = vmatprep.subr.mxu0 %v3520
      %3717 = vmatpush1.msra.mxu0 %v3519
      %3718 = vmatprep.subr.mxu0 %v3492
      %3719 = vmatpush1.msra.mxu0 %v3491
      %3720 = vmatprep.subr.mxu0 %v3488
      %3721 = vmatpush1.msra.mxu0 %v3487
      %3722 = vmatprep.subr.mxu0 %v3460
      %3723 = vmatpush1.msra.mxu0 %v3459
      %3724 = vmatprep.subr.mxu0 %v3456
      %3725 = vmatpush1.msra.mxu0 %v3455
      %3726 = vmatprep.subr.mxu0 0.0
      %3727 = vmatpush2.msra.mxu0 0.0
      %3728 = vmatprep.subr.mxu0 0.0
      %3729 = vmatpush2.msra.mxu0 0.0
      %3730 = vmatprep.subr.mxu0 0.0
      %3731 = vmatpush2.msra.mxu0 0.0
      %3732 = vmatprep.subr.mxu0 0.0
      %3733 = vmatpush2.msra.mxu0 0.0
      %3734 = vmatprep.subr.mxu0 0.0
      %3735 = vmatpush2.msra.mxu0 0.0
      %3736 = vmatprep.subr.mxu0 0.0
      %3737 = vmatpush2.msra.mxu0 0.0
      %3738 = vmatprep.subr.mxu0 0.0
      %3739 = vmatpush2.msra.mxu0 0.0
      %3740 = vmatprep.subr.mxu0 0.0
      %3741 = vmatpush2.msra.mxu0 0.0
      %3742 = vmatprep.subr.mxu0 0.0
      %3743 = vmatpush2.msra.mxu0 0.0
      %3744 = vmatprep.subr.mxu0 0.0
      %3745 = vmatpush2.msra.mxu0 0.0
      %3746 = vmatprep.subr.mxu0 0.0
      %3747 = vmatpush2.msra.mxu0 0.0
      %3748 = vmatprep.subr.mxu0 0.0
      %3749 = vmatpush2.msra.mxu0 0.0
      %3750 = vmatprep.subr.mxu0 0.0
      %3751 = vmatpush2.msra.mxu0 0.0
      %3752 = vmatprep.subr.mxu0 0.0
      %3753 = vmatpush2.msra.mxu0 0.0
      %3754 = vmatprep.subr.mxu0 %v3684
      %3755 = vmatpush2.msra.mxu0 %v3683
      %3756 = vmatprep.subr.mxu0 %v3680
      %3757 = vmatpush2.msra.mxu0 %v3679
      %3758 = vmatprep.mubr.f32.mxu0 %v3692
      %3759 = vmatmul.mubr.f32.gmra.mxu0 %v3429
      %v3760 = vpop.f32.mrf.mxu0
      %v3761 = vadd.f32 %v3689, %v3760
      %v3762 = vpop.f32.mrf.mxu0
      %v3763 = vadd.f32 %v3689, %v3762
      %3764 = vdwg.mxu0
      %3765 = vmatprep.subr.mxu0 %v3654
      %3766 = vmatpush1.msra.mxu0 %v3653
      %3767 = vmatprep.subr.mxu0 %v3650
      %3768 = vmatpush1.msra.mxu0 %v3649
      %3769 = vmatprep.subr.mxu0 %v3622
      %3770 = vmatpush1.msra.mxu0 %v3621
      %3771 = vmatprep.subr.mxu0 %v3618
      %3772 = vmatpush1.msra.mxu0 %v3617
      %3773 = vmatprep.subr.mxu0 %v3590
      %3774 = vmatpush1.msra.mxu0 %v3589
      %3775 = vmatprep.subr.mxu0 %v3586
      %3776 = vmatpush1.msra.mxu0 %v3585
      %3777 = vmatprep.subr.mxu0 %v3428
      %3778 = vmatpush1.msra.mxu0 %v3427
      %3779 = vmatprep.subr.mxu0 %v3424
      %3780 = vmatpush1.msra.mxu0 %v3423
      %3781 = vmatprep.subr.mxu0 %v3558
      %3782 = vmatpush1.msra.mxu0 %v3557
      %3783 = vmatprep.subr.mxu0 %v3554
      %3784 = vmatpush1.msra.mxu0 %v3553
      %3785 = vmatprep.subr.mxu0 %v3526
      %3786 = vmatpush1.msra.mxu0 %v3525
      %3787 = vmatprep.subr.mxu0 %v3522
      %3788 = vmatpush1.msra.mxu0 %v3521
      %3789 = vmatprep.subr.mxu0 %v3494
      %3790 = vmatpush1.msra.mxu0 %v3493
      %3791 = vmatprep.subr.mxu0 %v3490
      %3792 = vmatpush1.msra.mxu0 %v3489
      %3793 = vmatprep.subr.mxu0 %v3462
      %3794 = vmatpush1.msra.mxu0 %v3461
      %3795 = vmatprep.subr.mxu0 %v3458
      %3796 = vmatpush1.msra.mxu0 %v3457
      %3797 = vmatprep.subr.mxu0 0.0
      %3798 = vmatpush2.msra.mxu0 0.0
      %3799 = vmatprep.subr.mxu0 0.0
      %3800 = vmatpush2.msra.mxu0 0.0
      %3801 = vmatprep.subr.mxu0 0.0
      %3802 = vmatpush2.msra.mxu0 0.0
      %3803 = vmatprep.subr.mxu0 0.0
      %3804 = vmatpush2.msra.mxu0 0.0
      %3805 = vmatprep.subr.mxu0 0.0
      %3806 = vmatpush2.msra.mxu0 0.0
      %3807 = vmatprep.subr.mxu0 0.0
      %3808 = vmatpush2.msra.mxu0 0.0
      %3809 = vmatprep.subr.mxu0 0.0
      %3810 = vmatpush2.msra.mxu0 0.0
      %3811 = vmatprep.subr.mxu0 0.0
      %3812 = vmatpush2.msra.mxu0 0.0
      %3813 = vmatprep.subr.mxu0 0.0
      %3814 = vmatpush2.msra.mxu0 0.0
      %3815 = vmatprep.subr.mxu0 0.0
      %3816 = vmatpush2.msra.mxu0 0.0
      %3817 = vmatprep.subr.mxu0 0.0
      %3818 = vmatpush2.msra.mxu0 0.0
      %3819 = vmatprep.subr.mxu0 0.0
      %3820 = vmatpush2.msra.mxu0 0.0
      %3821 = vmatprep.subr.mxu0 0.0
      %3822 = vmatpush2.msra.mxu0 0.0
      %3823 = vmatprep.subr.mxu0 0.0
      %3824 = vmatpush2.msra.mxu0 0.0
      %3825 = vmatprep.subr.mxu0 %v3686
      %3826 = vmatpush2.msra.mxu0 %v3685
      %3827 = vmatprep.subr.mxu0 %v3682
      %3828 = vmatpush2.msra.mxu0 %v3681
      %3829 = vmatprep.mubr.f32.mxu0 %v3692
      %3830 = vmatmul.mubr.f32.gmra.mxu0 %v3429
      %v3831 = vpop.f32.mrf.mxu0
      %v3832 = vadd.f32 %v3689, %v3831
      %v3833 = vpop.f32.mrf.mxu0
      %v3834 = vadd.f32 %v3689, %v3833
      %3835 = vdwg.mxu0
      %v3836 = vadd.f32 %v3761, %v398
      %v3837 = vadd.f32 %v3763, %v399
      %v3838 = vadd.f32 %v3832, %v400
      %v3839 = vadd.f32 %v3834, %v401
      %3840 = vst [vmem:[%s388] sm:$0xff] %v3836
      %3841 = vst [vmem:[%s388 + $0x8] sm:$0xff] %v3837
      %3842 = vst [vmem:[%s388 + $0x10] sm:$0xff] %v3838
      %3843 = vst [vmem:[%s388 + $0x18] sm:$0xff] %v3839
      %s3844 = smul.u32 4, %s22
      %p3845 = scmp.lt.s32.totalorder %s3844, 7
      %s3846 = scalar_select %p3845, %s3844, 7
      %s3847 = smul.addr %s3846, 8
      %s3848 = scalar_lea.vmem %s11, %s3847
      // Predicated region
      $region65: #{_lambda_.1} parent=63 // pred_check
        %p3849 = pneg %p276
      $region66: #{_lambda_.1} parent=63 // pred_check_branch
        %3851 = sbr.rel (%p3849) target = $region68
      $region67: #{_lambda_.1} parent=63 // pred_region
        %s3852 = smul.u32 4, %s22
      $region68: #{_lambda_.1} parent=63 // pred_fallthru
        _
    $region64: #{_lambda_.1} parent=5 // pred_fallthru
      _
    %p3853 = scmp.le.s32.totalorder 2, %s17
    // Predicated region
    $region69: #{_lambda_.1} parent=5 // pred_check
      %p3854 = pneg %p3853
    $region70: #{_lambda_.1} parent=5 // pred_check_branch
      %3856 = sbr.rel (%p3854) target = $region72
    $region71: #{_lambda_.1} parent=5 // pred_region
      %s3857 = ssub.s32 %s17, 2
      // Predicated region
      $region73: #{_lambda_.1} parent=71 // pred_check
        %p3858 = pneg %p282
      $region74: #{_lambda_.1} parent=71 // pred_check_branch
        %3860 = sbr.rel (%p3858) target = $region76
      $region75: #{_lambda_.1} parent=71 // pred_region
        %s3861 = smul.u32 4, %s23
        %p3862 = scmp.lt.s32.totalorder %s3861, 7
        %s3863 = scalar_select %p3862, %s3861, 7
        %s3864 = smul.addr %s3863, 8
        %s3865 = scalar_lea.vmem %s11, %s3864
      $region76: #{_lambda_.1} parent=71 // pred_fallthru
        _
    $region72: #{_lambda_.1} parent=5 // pred_fallthru
      _
  $region6: #{_lambda_.1} parent=0 // loop_footer
    %s21 = sadd.s32 1, %s17
  $region7: #{_lambda_.1} parent=0 // loop_footer_branch
    %16 = sbr.rel target = $region3
  $region8: #{_lambda_.1} parent=0 // loop_exit
    _

</llo_original>
